<compile_context>
chip_gen: v7x
topology: tpu7x:2x2x1
jax: 0.10.0
libtpu: 0.0.40
codegen_flags: <defaults>
</compile_context>

<pallas_src>
import math
import functools
import numpy as np

import jax
import jax.numpy as jnp
from jax import lax
from jax.experimental import pallas as pl
from jax.experimental.pallas import tpu as pltpu

LN_EPS = 1e-5       # torch nn.LayerNorm default
NEG_INF = -1e30     # additive attention mask for cross-batch entries


# ----------------------------------------------------------------------------- #
# In-kernel helpers                                                              #
# ----------------------------------------------------------------------------- #
def _ln(x, g, b):
    mu = jnp.mean(x, axis=-1, keepdims=True)
    var = jnp.mean(jnp.square(x - mu), axis=-1, keepdims=True)
    return (x - mu) * lax.rsqrt(var + LN_EPS) * g + b


def _gelu(x):
    # tanh-approx GELU: transcendental lands on the EUP slot instead of a long VALU
    # polynomial chain.  Max abs deviation from torch's exact erf-GELU ~3e-3.
    c = math.sqrt(2.0 / math.pi)
    return 0.5 * x * (1.0 + jnp.tanh(c * (x + 0.044715 * x * x * x)))


def _mm(a, b, cdt):
    # MXU matmul in the compute dtype (f32 or bf16) with f32 accumulation.
    return jnp.dot(a.astype(cdt), b.astype(cdt), preferred_element_type=jnp.float32)


def _block(x, bias, g1, b1, wqkv, wproj, bproj, g2, b2, w1, bm1, w2, bm2,
           *, num_heads, head_dim, cdt):
    """Pre-norm transformer block on a dense (B*S, D) token slab.

    `bias` is a (B*S, B*S) additive mask (0 within a batch element, -1e30 across), so
    attention is block-diagonal over the batch while every matmul stays a full-slab 2-D
    MXU contraction (no per-batch grid, no half-empty vregs).
    """
    dim = num_heads * head_dim
    scale = head_dim ** -0.5

    # ---- multi-head self-attention ----
    xn = _ln(x, g1, b1)
    qkv = _mm(xn, wqkv, cdt)                                          # (R, 3D), f32 acc
    heads = []
    for h in range(num_heads):
        q = qkv[:, h * head_dim:(h + 1) * head_dim] * scale           # scale folded into q
        k = qkv[:, dim + h * head_dim: dim + (h + 1) * head_dim]
        v = qkv[:, 2 * dim + h * head_dim: 2 * dim + (h + 1) * head_dim]
        s = lax.dot_general(q.astype(cdt), k.astype(cdt),
                            (((1,), (1,)), ((), ())),
                            preferred_element_type=jnp.float32)       # (R, R)
        s = s + bias                                                  # mask cross-batch
        s = s - jnp.max(s, axis=-1, keepdims=True)
        e = jnp.exp(s)
        p = e * pl.reciprocal(jnp.sum(e, axis=-1, keepdims=True), approx=True)
        heads.append(_mm(p, v, cdt))
    attn = jnp.concatenate(heads, axis=-1)                            # (R, D)
    x = x + _mm(attn, wproj, cdt) + bproj

    # ---- MLP ----
    xn2 = _ln(x, g2, b2)
    h1 = _gelu(_mm(xn2, w1, cdt) + bm1)
    return x + _mm(h1, w2, cdt) + bm2


# ----------------------------------------------------------------------------- #
# Fused stack kernels                                                            #
# ----------------------------------------------------------------------------- #
def _encoder_stack_kernel(x_ref, bias_ref, pos_e_ref, wpe_ref, bpe_ref,
                          g1_ref, b1_ref, wqkv_ref, wproj_ref, bproj_ref,
                          g2_ref, b2_ref, w1_ref, bm1_ref, w2_ref, bm2_ref,
                          gn_ref, bn_ref, we2d_ref, pos_d_ref,
                          o_ref, acc_ref, *, num_heads, head_dim, cdt):
    layer = pl.program_id(0)

    @pl.when(layer == 0)
    def _prologue():
        # fused patch_embed (nn.Linear) + encoder pos-embed add (visible tokens only;
        # patch_embed is per-token, so gathering before it is equivalent).
        acc_ref[...] = _mm(x_ref[...], wpe_ref[...], cdt) + bpe_ref[...] + pos_e_ref[...]

    acc_ref[...] = _block(acc_ref[...], bias_ref[...],
                          g1_ref[0], b1_ref[0], wqkv_ref[0], wproj_ref[0], bproj_ref[0],
                          g2_ref[0], b2_ref[0], w1_ref[0], bm1_ref[0], w2_ref[0], bm2_ref[0],
                          num_heads=num_heads, head_dim=head_dim, cdt=cdt)

    @pl.when(layer == pl.num_programs(0) - 1)
    def _epilogue():
        # fused final LayerNorm + encoder_to_decoder (bias=False) + decoder pos-embed add
        xn = _ln(acc_ref[...], gn_ref[...], bn_ref[...])
        o_ref[...] = (_mm(xn, we2d_ref[...], cdt) + pos_d_ref[...]).astype(o_ref.dtype)


def _decoder_stack_kernel(x_ref, bias_ref,
                          g1_ref, b1_ref, wqkv_ref, wproj_ref, bproj_ref,
                          g2_ref, b2_ref, w1_ref, bm1_ref, w2_ref, bm2_ref,
                          gn_ref, bn_ref, whead_ref, bhead_ref,
                          o_ref, acc_ref, *, num_heads, head_dim, cdt):
    layer = pl.program_id(0)

    @pl.when(layer == 0)
    def _prologue():
        acc_ref[...] = x_ref[...]

    acc_ref[...] = _block(acc_ref[...], bias_ref[...],
                          g1_ref[0], b1_ref[0], wqkv_ref[0], wproj_ref[0], bproj_ref[0],
                          g2_ref[0], b2_ref[0], w1_ref[0], bm1_ref[0], w2_ref[0], bm2_ref[0],
                          num_heads=num_heads, head_dim=head_dim, cdt=cdt)

    @pl.when(layer == pl.num_programs(0) - 1)
    def _epilogue():
        # fused final LayerNorm + decoder head (return_token_num = 0 -> all tokens)
        xn = _ln(acc_ref[...], gn_ref[...], bn_ref[...])
        o_ref[...] = (_mm(xn, whead_ref[...], cdt) + bhead_ref[...]).astype(o_ref.dtype)


# ----------------------------------------------------------------------------- #
# pallas_call wrappers                                                           #
# ----------------------------------------------------------------------------- #
_STACKED_KEYS = ('g1', 'b1', 'wqkv', 'wproj', 'bproj', 'g2', 'b2', 'w1', 'bm1', 'w2', 'bm2')
_MATMUL_KEYS = ('wqkv', 'wproj', 'w1', 'w2')


def _const_spec(shape):
    # Whole array, same block every grid step -> stays resident in VMEM (loaded once).
    nd = len(shape)
    return pl.BlockSpec(tuple(shape), lambda l, _nd=nd: (0,) * _nd)


def _layer_spec(shape):
    # One layer's weight slab per grid step -> auto double-buffered by the pipeline.
    nd = len(shape)
    return pl.BlockSpec((1,) + tuple(shape[1:]),
                        lambda l, _nd=nd: (l,) + (0,) * (_nd - 1))


def encoder_stack(x_vis, attn_bias, pos_enc_vis, pos_dec_vis, enc_p, *,
                  num_heads, compute_dtype):
    Rv, De = x_vis.shape
    Dd = enc_p['we2d'].shape[-1]
    L = enc_p['wqkv'].shape[0]
    cdt = compute_dtype
    kernel = functools.partial(_encoder_stack_kernel, num_heads=num_heads,
                               head_dim=De // num_heads, cdt=cdt)

    operands = [x_vis, attn_bias, pos_enc_vis, enc_p['wpe'].astype(cdt), enc_p['bpe']]
    specs = [_const_spec(a.shape) for a in operands]
    for name in _STACKED_KEYS:
        a = enc_p[name].astype(cdt) if name in _MATMUL_KEYS else enc_p[name]
        operands.append(a)
        specs.append(_layer_spec(a.shape))
    tail = [enc_p['gn'], enc_p['bn'], enc_p['we2d'].astype(cdt), pos_dec_vis]
    operands += tail
    specs += [_const_spec(a.shape) for a in tail]

    return pl.pallas_call(
        kernel,
        grid=(L,),
        in_specs=specs,
        out_specs=_const_spec((Rv, Dd)),
        out_shape=jax.ShapeDtypeStruct((Rv, Dd), jnp.float32),
        scratch_shapes=[pltpu.VMEM((Rv, De), jnp.float32)],   # activation resident across layers
        compiler_params=pltpu.CompilerParams(
            # the layer axis carries the activation through VMEM scratch -> sequential.
            # (For production D on v7x: cast params to bf16 and/or raise vmem_limit_bytes.)
            dimension_semantics=("arbitrary",)),
    )(*operands)


def decoder_stack(x_full, attn_bias, dec_p, *, num_heads, compute_dtype):
    R, Dd = x_full.shape
    C = dec_p['whead'].shape[-1]
    L = dec_p['wqkv'].shape[0]
    cdt = compute_dtype
    kernel = functools.partial(_decoder_stack_kernel, num_heads=num_heads,
                               head_dim=Dd // num_heads, cdt=cdt)

    operands = [x_full, attn_bias]
    specs = [_const_spec(a.shape) for a in operands]
    for name in _STACKED_KEYS:
        a = dec_p[name].astype(cdt) if name in _MATMUL_KEYS else dec_p[name]
        operands.append(a)
        specs.append(_layer_spec(a.shape))
    tail = [dec_p['gn'], dec_p['bn'], dec_p['whead'].astype(cdt), dec_p['bhead']]
    operands += tail
    specs += [_const_spec(a.shape) for a in tail]

    return pl.pallas_call(
        kernel,
        grid=(L,),
        in_specs=specs,
        out_specs=_const_spec((R, C)),
        out_shape=jax.ShapeDtypeStruct((R, C), jnp.float32),
        scratch_shapes=[pltpu.VMEM((R, Dd), jnp.float32)],
        compiler_params=pltpu.CompilerParams(dimension_semantics=("arbitrary",)),
    )(*operands)


# ----------------------------------------------------------------------------- #
# Parameters / host-side helpers                                                 #
# ----------------------------------------------------------------------------- #
def get_sinusoid_encoding_table(n_position, d_hid):
    pos = np.arange(n_position, dtype=np.float64)[:, None]
    hid = np.arange(d_hid)[None, :]
    angle = pos / np.power(10000, 2 * (hid // 2) / d_hid)
    table = np.zeros((n_position, d_hid), dtype=np.float64)
    table[:, 0::2] = np.sin(angle[:, 0::2])
    table[:, 1::2] = np.cos(angle[:, 1::2])
    return jnp.asarray(table[None], dtype=jnp.float32)  # (1, n_position, d_hid)


def xavier_uniform(key, din, dout):
    lim = math.sqrt(6.0 / (din + dout))
    return jax.random.uniform(key, (din, dout), jnp.float32, -lim, lim)


def init_stacked_blocks(key, depth, dim, hidden):
    keys = jax.random.split(key, depth)
    per = [dict(wqkv=xavier_uniform(k1, dim, 3 * dim),
                wproj=xavier_uniform(k2, dim, dim),
                w1=xavier_uniform(k3, dim, hidden),
                w2=xavier_uniform(k4, hidden, dim))
           for (k1, k2, k3, k4) in (jax.random.split(k, 4) for k in keys)]

    def stack(name):
        return jnp.stack([p[name] for p in per], axis=0)

    L = depth
    return dict(
        g1=jnp.ones((L, 1, dim), jnp.float32), b1=jnp.zeros((L, 1, dim), jnp.float32),
        wqkv=stack('wqkv'),
        wproj=stack('wproj'), bproj=jnp.zeros((L, 1, dim), jnp.float32),
        g2=jnp.ones((L, 1, dim), jnp.float32), b2=jnp.zeros((L, 1, dim), jnp.float32),
        w1=stack('w1'), bm1=jnp.zeros((L, 1, hidden), jnp.float32),
        w2=stack('w2'), bm2=jnp.zeros((L, 1, dim), jnp.float32),
    )


def init_model_params(key, cfg):
    keys = jax.random.split(key, 6)
    De, Dd, N, C = cfg['enc_dim'], cfg['dec_dim'], cfg['N'], cfg['dec_num_classes']
    He, Hd = int(De * cfg['mlp_ratio']), int(Dd * cfg['mlp_ratio'])

    enc = init_stacked_blocks(keys[0], cfg['enc_depth'], De, He)
    enc.update(wpe=xavier_uniform(keys[1], De, De), bpe=jnp.zeros((1, De), jnp.float32),
               gn=jnp.ones((1, De), jnp.float32), bn=jnp.zeros((1, De), jnp.float32),
               we2d=xavier_uniform(keys[2], De, Dd))                     # bias=False
    dec = init_stacked_blocks(keys[3], cfg['dec_depth'], Dd, Hd)
    dec.update(gn=jnp.ones((1, Dd), jnp.float32), bn=jnp.zeros((1, Dd), jnp.float32),
               whead=xavier_uniform(keys[4], Dd, C), bhead=jnp.zeros((1, C), jnp.float32))
    mask_token = 0.02 * jax.random.truncated_normal(keys[5], -1.0, 1.0, (1, 1, Dd), jnp.float32)
    return dict(enc=enc, dec=dec, mask_token=mask_token,
                pos_embed_enc=get_sinusoid_encoding_table(N, De),
                pos_embed_dec=get_sinusoid_encoding_table(N, Dd))


def _token_unshuffle_indices(mask_1d, n_vis):
    """src[i] = where original token i lives in the decoder output (vis tokens first)."""
    src = np.zeros((len(mask_1d),), np.int32)
    mask_n, truth_n = 0, 0
    for i, flag in enumerate(mask_1d):
        if flag:
            src[i] = n_vis + mask_n
            mask_n += 1
        else:
            src[i] = truth_n
            truth_n += 1
    return src


def _block_diag_bias(batch, seq):
    """(B*seq, B*seq) additive mask: 0 within a batch element, -1e30 across."""
    ids = np.repeat(np.arange(batch), seq)
    return jnp.asarray(np.where(ids[:, None] == ids[None, :], 0.0, NEG_INF).astype(np.float32))


# ----------------------------------------------------------------------------- #
# Full forward pass (two fused pallas_calls + trivial host-side glue)            #
# ----------------------------------------------------------------------------- #
def pretrain_vit_forward(params, x, mask, cfg, compute_dtype=jnp.float32):
    B, N, De = x.shape
    Dd, C = cfg['dec_dim'], cfg['dec_num_classes']
    mask_1d = np.asarray(mask)[0, 0]            # mask is batch-constant (as torch requires)
    vis_idx = np.where(~mask_1d)[0]
    msk_idx = np.where(mask_1d)[0]
    Nv, Nm = len(vis_idx), len(msk_idx)

    # --- encoder: patch_embed + pos + blocks + LN + enc2dec + dec-pos, ONE pallas_call ---
    x_vis_in = x[:, vis_idx, :].reshape(B * Nv, De)
    pos_enc_vis = jnp.broadcast_to(params['pos_embed_enc'][:, vis_idx, :],
                                   (B, Nv, De)).reshape(B * Nv, De)
    pos_dec_vis = jnp.broadcast_to(params['pos_embed_dec'][:, vis_idx, :],
                                   (B, Nv, Dd)).reshape(B * Nv, Dd)
    enc_out = encoder_stack(x_vis_in, _block_diag_bias(B, Nv), pos_enc_vis, pos_dec_vis,
                            params['enc'], num_heads=cfg['enc_heads'],
                            compute_dtype=compute_dtype)                 # (B*Nv, Dd), +pos_vis

    # --- assemble decoder input: [x_vis + pos_vis, mask_token + pos_mask] ---
    masked_part = jnp.broadcast_to(params['mask_token'] + params['pos_embed_dec'][:, msk_idx, :],
                                   (B, Nm, Dd))
    x_full = jnp.concatenate([enc_out.reshape(B, Nv, Dd), masked_part], axis=1).reshape(B * N, Dd)

    # --- decoder: blocks + LN + head, ONE pallas_call ---
    out = decoder_stack(x_full, _block_diag_bias(B, N), params['dec'],
                        num_heads=cfg['dec_heads'], compute_dtype=compute_dtype)
    out = out.reshape(B, N, C)

    # --- un-shuffle tokens back to their original positions (mask[0][0] loop) ---
    src = _token_unshuffle_indices(mask_1d, Nv)
    return out[:, src, :]


# ----------------------------------------------------------------------------- #
# Pure-JAX reference (sanity check against the fused kernels)                    #
# ----------------------------------------------------------------------------- #
def _ref_ln(v, g, b):
    mu = v.mean(-1, keepdims=True)
    var = ((v - mu) ** 2).mean(-1, keepdims=True)
    return (v - mu) / jnp.sqrt(var + LN_EPS) * g.reshape(-1) + b.reshape(-1)


def _ref_block(x, p, i, num_heads):
    B, S, D = x.shape
    hd = D // num_heads
    xn = _ref_ln(x, p['g1'][i], p['b1'][i])
    qkv = xn @ p['wqkv'][i]
    q, k, v = qkv[..., :D], qkv[..., D:2 * D], qkv[..., 2 * D:]
    q = q.reshape(B, S, num_heads, hd).transpose(0, 2, 1, 3)
    k = k.reshape(B, S, num_heads, hd).transpose(0, 2, 1, 3)
    v = v.reshape(B, S, num_heads, hd).transpose(0, 2, 1, 3)
    att = jax.nn.softmax((q @ k.transpose(0, 1, 3, 2)) * hd ** -0.5, axis=-1)
    o = (att @ v).transpose(0, 2, 1, 3).reshape(B, S, D)
    x = x + (o @ p['wproj'][i] + p['bproj'][i].reshape(-1))
    xn2 = _ref_ln(x, p['g2'][i], p['b2'][i])
    h = jax.nn.gelu(xn2 @ p['w1'][i] + p['bm1'][i].reshape(-1), approximate=False)
    return x + (h @ p['w2'][i] + p['bm2'][i].reshape(-1))


def reference_forward(params, x, mask, cfg):
    B, N, De = x.shape
    Dd = cfg['dec_dim']
    enc, dec = params['enc'], params['dec']
    mask_1d = np.asarray(mask)[0, 0]
    vis_idx = np.where(~mask_1d)[0]
    msk_idx = np.where(mask_1d)[0]
    Nv = len(vis_idx)
    h = x @ enc['wpe'] + enc['bpe'].reshape(-1) + params['pos_embed_enc']
    xv = h[:, vis_idx, :]
    for i in range(cfg['enc_depth']):
        xv = _ref_block(xv, enc, i, cfg['enc_heads'])
    xv = _ref_ln(xv, enc['gn'], enc['bn']) @ enc['we2d']
    pos = jnp.broadcast_to(params['pos_embed_dec'], (B, N, Dd))
    xf = jnp.concatenate([xv + pos[:, vis_idx], params['mask_token'] + pos[:, msk_idx]], axis=1)
    for i in range(cfg['dec_depth']):
        xf = _ref_block(xf, dec, i, cfg['dec_heads'])
    out = _ref_ln(xf, dec['gn'], dec['bn']) @ dec['whead'] + dec['bhead'].reshape(-1)
    src = _token_unshuffle_indices(mask_1d, Nv)
    return out[:, src, :]


# ----------------------------------------------------------------------------- #
if __name__ == "__main__":
    # Small but structurally-faithful config (defaults would be D=512, depth 12/8).
    cfg = dict(N=4,                 # train_type_num (number of modality tokens)
               enc_dim=128, enc_depth=2, enc_heads=4,
               dec_dim=128, dec_depth=2, dec_heads=4,
               dec_num_classes=128, mlp_ratio=4.0)

    key = jax.random.PRNGKey(0)
    kx, kp = jax.random.split(key)
    B = 2
    x = jax.random.normal(kx, (B, cfg['N'], cfg['enc_dim']), jnp.float32)
    # Same boolean mask for every batch element (required by the original torch code).
    mask = np.broadcast_to(np.array([False, True, False, True]), (B, 1, cfg['N']))

    params = init_model_params(kp, cfg)

    # f32 compute path: strict check against the pure-JAX reference.
    out = jax.block_until_ready(pretrain_vit_forward(params, x, mask, cfg))
    assert out.shape == (B, cfg['N'], cfg['dec_num_classes'])
    ref = reference_forward(params, x, mask, cfg)
    np.testing.assert_allclose(np.asarray(out), np.asarray(ref), rtol=5e-2, atol=5e-2)

    # bf16 compute path (bf16 matmul inputs / weights, f32 accumulation) — sanity check.
    out_bf16 = jax.block_until_ready(
        pretrain_vit_forward(params, x, mask, cfg, compute_dtype=jnp.bfloat16))
    assert np.all(np.isfinite(np.asarray(out_bf16)))
    assert float(np.max(np.abs(np.asarray(out_bf16) - np.asarray(ref)))) < 1.0

    print("KERNEL_OK")
</pallas_src>

<mosaic_0001>
module attributes {stable_mosaic.version = 11 : i64} {
  func.func @_encoder_stack_kernel(%arg0: i32, %arg1: memref<4x128xf32, #tpu.memory_space<vmem>>, %arg2: memref<4x4xf32, #tpu.memory_space<vmem>>, %arg3: memref<4x128xf32, #tpu.memory_space<vmem>>, %arg4: memref<128x128xf32, #tpu.memory_space<vmem>>, %arg5: memref<1x128xf32, #tpu.memory_space<vmem>>, %arg6: memref<1x1x128xf32, #tpu.memory_space<vmem>>, %arg7: memref<1x1x128xf32, #tpu.memory_space<vmem>>, %arg8: memref<1x128x384xf32, #tpu.memory_space<vmem>>, %arg9: memref<1x128x128xf32, #tpu.memory_space<vmem>>, %arg10: memref<1x1x128xf32, #tpu.memory_space<vmem>>, %arg11: memref<1x1x128xf32, #tpu.memory_space<vmem>>, %arg12: memref<1x1x128xf32, #tpu.memory_space<vmem>>, %arg13: memref<1x128x512xf32, #tpu.memory_space<vmem>>, %arg14: memref<1x1x512xf32, #tpu.memory_space<vmem>>, %arg15: memref<1x512x128xf32, #tpu.memory_space<vmem>>, %arg16: memref<1x1x128xf32, #tpu.memory_space<vmem>>, %arg17: memref<1x128xf32, #tpu.memory_space<vmem>>, %arg18: memref<1x128xf32, #tpu.memory_space<vmem>>, %arg19: memref<128x128xf32, #tpu.memory_space<vmem>>, %arg20: memref<4x128xf32, #tpu.memory_space<vmem>>, %arg21: memref<4x128xf32, #tpu.memory_space<vmem>>, %arg22: memref<4x128xf32, #tpu.memory_space<vmem>>) attributes {dimension_semantics = [#tpu.dimension_semantics<arbitrary>], iteration_bounds = array<i64: 2>, scalar_prefetch = 0 : i64, scratch_operands = 1 : i64, tpu.core_type = #tpu.core_type<tc>, window_params = [{pipeline_mode = #tpu.pipeline_mode<synchronous>, transform_indices = @transform_0, window_bounds = array<i64: 4, 128>}, {pipeline_mode = #tpu.pipeline_mode<synchronous>, transform_indices = @transform_1, window_bounds = array<i64: 4, 4>}, {pipeline_mode = #tpu.pipeline_mode<synchronous>, transform_indices = @transform_2, window_bounds = array<i64: 4, 128>}, {pipeline_mode = #tpu.pipeline_mode<synchronous>, transform_indices = @transform_3, window_bounds = array<i64: 128, 128>}, {pipeline_mode = #tpu.pipeline_mode<synchronous>, transform_indices = @transform_4, window_bounds = array<i64: 1, 128>}, {transform_indices = @transform_5, window_bounds = array<i64: 1, 1, 128>}, {transform_indices = @transform_6, window_bounds = array<i64: 1, 1, 128>}, {transform_indices = @transform_7, window_bounds = array<i64: 1, 128, 384>}, {transform_indices = @transform_8, window_bounds = array<i64: 1, 128, 128>}, {transform_indices = @transform_9, window_bounds = array<i64: 1, 1, 128>}, {transform_indices = @transform_10, window_bounds = array<i64: 1, 1, 128>}, {transform_indices = @transform_11, window_bounds = array<i64: 1, 1, 128>}, {transform_indices = @transform_12, window_bounds = array<i64: 1, 128, 512>}, {transform_indices = @transform_13, window_bounds = array<i64: 1, 1, 512>}, {transform_indices = @transform_14, window_bounds = array<i64: 1, 512, 128>}, {transform_indices = @transform_15, window_bounds = array<i64: 1, 1, 128>}, {pipeline_mode = #tpu.pipeline_mode<synchronous>, transform_indices = @transform_16, window_bounds = array<i64: 1, 128>}, {pipeline_mode = #tpu.pipeline_mode<synchronous>, transform_indices = @transform_17, window_bounds = array<i64: 1, 128>}, {pipeline_mode = #tpu.pipeline_mode<synchronous>, transform_indices = @transform_18, window_bounds = array<i64: 128, 128>}, {pipeline_mode = #tpu.pipeline_mode<synchronous>, transform_indices = @transform_19, window_bounds = array<i64: 4, 128>}, {pipeline_mode = #tpu.pipeline_mode<synchronous>, transform_indices = @transform_20, window_bounds = array<i64: 4, 128>}]} {
    %c0_i32 = arith.constant 0 : i32
    %0 = arith.cmpi eq, %arg0, %c0_i32 : i32
    %1 = arith.extui %0 : i1 to i32
    %c0_i32_0 = arith.constant 0 : i32
    %2 = arith.cmpi ne, %1, %c0_i32_0 : i32
    scf.if %2 {
      %c0_77 = arith.constant 0 : index
      %c0_78 = arith.constant 0 : index
      %173 = vector.load %arg1[%c0_77, %c0_78] : memref<4x128xf32, #tpu.memory_space<vmem>>, vector<4x128xf32>
      %c0_79 = arith.constant 0 : index
      %c0_80 = arith.constant 0 : index
      %174 = vector.load %arg4[%c0_79, %c0_80] : memref<128x128xf32, #tpu.memory_space<vmem>>, vector<128x128xf32>
      %cst_81 = arith.constant dense<0.000000e+00> : vector<4x128xf32>
      %175 = tpu.matmul %173, %174, %cst_81 {dimension_numbers = #tpu.dot_dimension_numbers<[1], [0], [0], [1], [0, 0, 1, 1], [], []>} : vector<4x128xf32>, vector<128x128xf32>, vector<4x128xf32> -> vector<4x128xf32>
      %c0_82 = arith.constant 0 : index
      %c0_83 = arith.constant 0 : index
      %176 = vector.load %arg5[%c0_82, %c0_83] : memref<1x128xf32, #tpu.memory_space<vmem>>, vector<1x128xf32>
      %177 = vector.broadcast %176 : vector<1x128xf32> to vector<4x128xf32>
      %178 = arith.addf %175, %177 : vector<4x128xf32>
      %c0_84 = arith.constant 0 : index
      %c0_85 = arith.constant 0 : index
      %179 = vector.load %arg3[%c0_84, %c0_85] : memref<4x128xf32, #tpu.memory_space<vmem>>, vector<4x128xf32>
      %180 = arith.addf %178, %179 : vector<4x128xf32>
      %c0_86 = arith.constant 0 : index
      %c0_87 = arith.constant 0 : index
      %181 = vector.load %arg22[%c0_86, %c0_87] : memref<4x128xf32, #tpu.memory_space<vmem>>, vector<4x128xf32>
      tpu.vector_store %arg22[%c0_86, %c0_87], %180 {strides = array<i32>} : memref<4x128xf32, #tpu.memory_space<vmem>>, vector<4x128xf32>,
    } else {
    }
    %c0 = arith.constant 0 : index
    %c0_1 = arith.constant 0 : index
    %3 = vector.load %arg22[%c0, %c0_1] : memref<4x128xf32, #tpu.memory_space<vmem>>, vector<4x128xf32>
    %c0_2 = arith.constant 0 : index
    %c0_3 = arith.constant 0 : index
    %4 = vector.load %arg2[%c0_2, %c0_3] : memref<4x4xf32, #tpu.memory_space<vmem>>, vector<4x4xf32>
    %c0_4 = arith.constant 0 : index
    %c0_5 = arith.constant 0 : index
    %c0_6 = arith.constant 0 : index
    %5 = vector.load %arg6[%c0_4, %c0_5, %c0_6] : memref<1x1x128xf32, #tpu.memory_space<vmem>>, vector<1x1x128xf32>
    %6 = vector.shape_cast %5 : vector<1x1x128xf32> to vector<1x128xf32>
    %c0_7 = arith.constant 0 : index
    %c0_8 = arith.constant 0 : index
    %c0_9 = arith.constant 0 : index
    %7 = vector.load %arg7[%c0_7, %c0_8, %c0_9] : memref<1x1x128xf32, #tpu.memory_space<vmem>>, vector<1x1x128xf32>
    %8 = vector.shape_cast %7 : vector<1x1x128xf32> to vector<1x128xf32>
    %c0_10 = arith.constant 0 : index
    %c0_11 = arith.constant 0 : index
    %c0_12 = arith.constant 0 : index
    %9 = vector.load %arg8[%c0_10, %c0_11, %c0_12] : memref<1x128x384xf32, #tpu.memory_space<vmem>>, vector<1x128x384xf32>
    %10 = vector.shape_cast %9 : vector<1x128x384xf32> to vector<128x384xf32>
    %c0_13 = arith.constant 0 : index
    %c0_14 = arith.constant 0 : index
    %c0_15 = arith.constant 0 : index
    %11 = vector.load %arg9[%c0_13, %c0_14, %c0_15] : memref<1x128x128xf32, #tpu.memory_space<vmem>>, vector<1x128x128xf32>
    %12 = vector.shape_cast %11 : vector<1x128x128xf32> to vector<128x128xf32>
    %c0_16 = arith.constant 0 : index
    %c0_17 = arith.constant 0 : index
    %c0_18 = arith.constant 0 : index
    %13 = vector.load %arg10[%c0_16, %c0_17, %c0_18] : memref<1x1x128xf32, #tpu.memory_space<vmem>>, vector<1x1x128xf32>
    %14 = vector.shape_cast %13 : vector<1x1x128xf32> to vector<1x128xf32>
    %c0_19 = arith.constant 0 : index
    %c0_20 = arith.constant 0 : index
    %c0_21 = arith.constant 0 : index
    %15 = vector.load %arg11[%c0_19, %c0_20, %c0_21] : memref<1x1x128xf32, #tpu.memory_space<vmem>>, vector<1x1x128xf32>
    %16 = vector.shape_cast %15 : vector<1x1x128xf32> to vector<1x128xf32>
    %c0_22 = arith.constant 0 : index
    %c0_23 = arith.constant 0 : index
    %c0_24 = arith.constant 0 : index
    %17 = vector.load %arg12[%c0_22, %c0_23, %c0_24] : memref<1x1x128xf32, #tpu.memory_space<vmem>>, vector<1x1x128xf32>
    %18 = vector.shape_cast %17 : vector<1x1x128xf32> to vector<1x128xf32>
    %c0_25 = arith.constant 0 : index
    %c0_26 = arith.constant 0 : index
    %c0_27 = arith.constant 0 : index
    %19 = vector.load %arg13[%c0_25, %c0_26, %c0_27] : memref<1x128x512xf32, #tpu.memory_space<vmem>>, vector<1x128x512xf32>
    %20 = vector.shape_cast %19 : vector<1x128x512xf32> to vector<128x512xf32>
    %c0_28 = arith.constant 0 : index
    %c0_29 = arith.constant 0 : index
    %c0_30 = arith.constant 0 : index
    %21 = vector.load %arg14[%c0_28, %c0_29, %c0_30] : memref<1x1x512xf32, #tpu.memory_space<vmem>>, vector<1x1x512xf32>
    %22 = vector.shape_cast %21 : vector<1x1x512xf32> to vector<1x512xf32>
    %c0_31 = arith.constant 0 : index
    %c0_32 = arith.constant 0 : index
    %c0_33 = arith.constant 0 : index
    %23 = vector.load %arg15[%c0_31, %c0_32, %c0_33] : memref<1x512x128xf32, #tpu.memory_space<vmem>>, vector<1x512x128xf32>
    %24 = vector.shape_cast %23 : vector<1x512x128xf32> to vector<512x128xf32>
    %c0_34 = arith.constant 0 : index
    %c0_35 = arith.constant 0 : index
    %c0_36 = arith.constant 0 : index
    %25 = vector.load %arg16[%c0_34, %c0_35, %c0_36] : memref<1x1x128xf32, #tpu.memory_space<vmem>>, vector<1x1x128xf32>
    %26 = vector.shape_cast %25 : vector<1x1x128xf32> to vector<1x128xf32>
    %cst = arith.constant dense<0.000000e+00> : vector<4xf32>
    %27 = vector.multi_reduction <add>, %3, %cst [1] : vector<4x128xf32> to vector<4xf32>
    %28 = vector.shape_cast %27 : vector<4xf32> to vector<4x1xf32>
    %cst_37 = arith.constant 1.280000e+02 : f32
    %29 = vector.broadcast %cst_37 : f32 to vector<4x1xf32>
    %30 = arith.divf %28, %29 : vector<4x1xf32>
    %31 = vector.broadcast %30 : vector<4x1xf32> to vector<4x128xf32>
    %32 = arith.subf %3, %31 : vector<4x128xf32>
    %33 = arith.mulf %32, %32 : vector<4x128xf32>
    %cst_38 = arith.constant dense<0.000000e+00> : vector<4xf32>
    %34 = vector.multi_reduction <add>, %33, %cst_38 [1] : vector<4x128xf32> to vector<4xf32>
    %35 = vector.shape_cast %34 : vector<4xf32> to vector<4x1xf32>
    %cst_39 = arith.constant 1.280000e+02 : f32
    %36 = vector.broadcast %cst_39 : f32 to vector<4x1xf32>
    %37 = arith.divf %35, %36 : vector<4x1xf32>
    %38 = vector.broadcast %30 : vector<4x1xf32> to vector<4x128xf32>
    %39 = arith.subf %3, %38 : vector<4x128xf32>
    %cst_40 = arith.constant 9.99999974E-6 : f32
    %40 = vector.broadcast %cst_40 : f32 to vector<4x1xf32>
    %41 = arith.addf %37, %40 : vector<4x1xf32>
    %42 = math.rsqrt %41 : vector<4x1xf32>
    %43 = vector.broadcast %42 : vector<4x1xf32> to vector<4x128xf32>
    %44 = arith.mulf %39, %43 : vector<4x128xf32>
    %45 = vector.broadcast %6 : vector<1x128xf32> to vector<4x128xf32>
    %46 = arith.mulf %44, %45 : vector<4x128xf32>
    %47 = vector.broadcast %8 : vector<1x128xf32> to vector<4x128xf32>
    %48 = arith.addf %46, %47 : vector<4x128xf32>
    %cst_41 = arith.constant dense<0.000000e+00> : vector<4x384xf32>
    %49 = tpu.matmul %48, %10, %cst_41 {dimension_numbers = #tpu.dot_dimension_numbers<[1], [0], [0], [1], [0, 0, 1, 1], [], []>} : vector<4x128xf32>, vector<128x384xf32>, vector<4x384xf32> -> vector<4x384xf32>
    %50 = vector.extract_strided_slice %49 {offsets = [0, 0], sizes = [4, 32], strides = [1, 1]} : vector<4x384xf32> to vector<4x32xf32>
    %cst_42 = arith.constant 0.176776692 : f32
    %51 = vector.broadcast %cst_42 : f32 to vector<4x32xf32>
    %52 = arith.mulf %50, %51 : vector<4x32xf32>
    %53 = vector.extract_strided_slice %49 {offsets = [0, 128], sizes = [4, 32], strides = [1, 1]} : vector<4x384xf32> to vector<4x32xf32>
    %54 = vector.extract_strided_slice %49 {offsets = [0, 256], sizes = [4, 32], strides = [1, 1]} : vector<4x384xf32> to vector<4x32xf32>
    %cst_43 = arith.constant dense<0.000000e+00> : vector<4x4xf32>
    %55 = tpu.matmul %52, %53, %cst_43 {dimension_numbers = #tpu.dot_dimension_numbers<[1], [1], [0], [0], [0, 0, 1, 0], [], []>} : vector<4x32xf32>, vector<4x32xf32>, vector<4x4xf32> -> vector<4x4xf32>
    %56 = arith.addf %55, %4 : vector<4x4xf32>
    %cst_44 = arith.constant dense<0xFF800000> : vector<4xf32>
    %57 = vector.multi_reduction <maximumf>, %56, %cst_44 [1] : vector<4x4xf32> to vector<4xf32>
    %58 = vector.shape_cast %57 : vector<4xf32> to vector<4x1xf32>
    %59 = vector.broadcast %58 : vector<4x1xf32> to vector<4x4xf32>
    %60 = arith.subf %56, %59 : vector<4x4xf32>
    %61 = math.exp %60 : vector<4x4xf32>
    %cst_45 = arith.constant dense<0.000000e+00> : vector<4xf32>
    %62 = vector.multi_reduction <add>, %61, %cst_45 [1] : vector<4x4xf32> to vector<4xf32>
    %63 = vector.shape_cast %62 : vector<4xf32> to vector<4x1xf32>
    %64 = tpu.reciprocal %63 {approx = true} : vector<4x1xf32> -> vector<4x1xf32>
    %65 = vector.broadcast %64 : vector<4x1xf32> to vector<4x4xf32>
    %66 = arith.mulf %61, %65 : vector<4x4xf32>
    %cst_46 = arith.constant dense<0.000000e+00> : vector<4x32xf32>
    %67 = tpu.matmul %66, %54, %cst_46 {dimension_numbers = #tpu.dot_dimension_numbers<[1], [0], [0], [1], [0, 0, 1, 1], [], []>} : vector<4x4xf32>, vector<4x32xf32>, vector<4x32xf32> -> vector<4x32xf32>
    %68 = vector.extract_strided_slice %49 {offsets = [0, 32], sizes = [4, 32], strides = [1, 1]} : vector<4x384xf32> to vector<4x32xf32>
    %cst_47 = arith.constant 0.176776692 : f32
    %69 = vector.broadcast %cst_47 : f32 to vector<4x32xf32>
    %70 = arith.mulf %68, %69 : vector<4x32xf32>
    %71 = vector.extract_strided_slice %49 {offsets = [0, 160], sizes = [4, 32], strides = [1, 1]} : vector<4x384xf32> to vector<4x32xf32>
    %72 = vector.extract_strided_slice %49 {offsets = [0, 288], sizes = [4, 32], strides = [1, 1]} : vector<4x384xf32> to vector<4x32xf32>
    %cst_48 = arith.constant dense<0.000000e+00> : vector<4x4xf32>
    %73 = tpu.matmul %70, %71, %cst_48 {dimension_numbers = #tpu.dot_dimension_numbers<[1], [1], [0], [0], [0, 0, 1, 0], [], []>} : vector<4x32xf32>, vector<4x32xf32>, vector<4x4xf32> -> vector<4x4xf32>
    %74 = arith.addf %73, %4 : vector<4x4xf32>
    %cst_49 = arith.constant dense<0xFF800000> : vector<4xf32>
    %75 = vector.multi_reduction <maximumf>, %74, %cst_49 [1] : vector<4x4xf32> to vector<4xf32>
    %76 = vector.shape_cast %75 : vector<4xf32> to vector<4x1xf32>
    %77 = vector.broadcast %76 : vector<4x1xf32> to vector<4x4xf32>
    %78 = arith.subf %74, %77 : vector<4x4xf32>
    %79 = math.exp %78 : vector<4x4xf32>
    %cst_50 = arith.constant dense<0.000000e+00> : vector<4xf32>
    %80 = vector.multi_reduction <add>, %79, %cst_50 [1] : vector<4x4xf32> to vector<4xf32>
    %81 = vector.shape_cast %80 : vector<4xf32> to vector<4x1xf32>
    %82 = tpu.reciprocal %81 {approx = true} : vector<4x1xf32> -> vector<4x1xf32>
    %83 = vector.broadcast %82 : vector<4x1xf32> to vector<4x4xf32>
    %84 = arith.mulf %79, %83 : vector<4x4xf32>
    %cst_51 = arith.constant dense<0.000000e+00> : vector<4x32xf32>
    %85 = tpu.matmul %84, %72, %cst_51 {dimension_numbers = #tpu.dot_dimension_numbers<[1], [0], [0], [1], [0, 0, 1, 1], [], []>} : vector<4x4xf32>, vector<4x32xf32>, vector<4x32xf32> -> vector<4x32xf32>
    %86 = vector.extract_strided_slice %49 {offsets = [0, 64], sizes = [4, 32], strides = [1, 1]} : vector<4x384xf32> to vector<4x32xf32>
    %cst_52 = arith.constant 0.176776692 : f32
    %87 = vector.broadcast %cst_52 : f32 to vector<4x32xf32>
    %88 = arith.mulf %86, %87 : vector<4x32xf32>
    %89 = vector.extract_strided_slice %49 {offsets = [0, 192], sizes = [4, 32], strides = [1, 1]} : vector<4x384xf32> to vector<4x32xf32>
    %90 = vector.extract_strided_slice %49 {offsets = [0, 320], sizes = [4, 32], strides = [1, 1]} : vector<4x384xf32> to vector<4x32xf32>
    %cst_53 = arith.constant dense<0.000000e+00> : vector<4x4xf32>
    %91 = tpu.matmul %88, %89, %cst_53 {dimension_numbers = #tpu.dot_dimension_numbers<[1], [1], [0], [0], [0, 0, 1, 0], [], []>} : vector<4x32xf32>, vector<4x32xf32>, vector<4x4xf32> -> vector<4x4xf32>
    %92 = arith.addf %91, %4 : vector<4x4xf32>
    %cst_54 = arith.constant dense<0xFF800000> : vector<4xf32>
    %93 = vector.multi_reduction <maximumf>, %92, %cst_54 [1] : vector<4x4xf32> to vector<4xf32>
    %94 = vector.shape_cast %93 : vector<4xf32> to vector<4x1xf32>
    %95 = vector.broadcast %94 : vector<4x1xf32> to vector<4x4xf32>
    %96 = arith.subf %92, %95 : vector<4x4xf32>
    %97 = math.exp %96 : vector<4x4xf32>
    %cst_55 = arith.constant dense<0.000000e+00> : vector<4xf32>
    %98 = vector.multi_reduction <add>, %97, %cst_55 [1] : vector<4x4xf32> to vector<4xf32>
    %99 = vector.shape_cast %98 : vector<4xf32> to vector<4x1xf32>
    %100 = tpu.reciprocal %99 {approx = true} : vector<4x1xf32> -> vector<4x1xf32>
    %101 = vector.broadcast %100 : vector<4x1xf32> to vector<4x4xf32>
    %102 = arith.mulf %97, %101 : vector<4x4xf32>
    %cst_56 = arith.constant dense<0.000000e+00> : vector<4x32xf32>
    %103 = tpu.matmul %102, %90, %cst_56 {dimension_numbers = #tpu.dot_dimension_numbers<[1], [0], [0], [1], [0, 0, 1, 1], [], []>} : vector<4x4xf32>, vector<4x32xf32>, vector<4x32xf32> -> vector<4x32xf32>
    %104 = vector.extract_strided_slice %49 {offsets = [0, 96], sizes = [4, 32], strides = [1, 1]} : vector<4x384xf32> to vector<4x32xf32>
    %cst_57 = arith.constant 0.176776692 : f32
    %105 = vector.broadcast %cst_57 : f32 to vector<4x32xf32>
    %106 = arith.mulf %104, %105 : vector<4x32xf32>
    %107 = vector.extract_strided_slice %49 {offsets = [0, 224], sizes = [4, 32], strides = [1, 1]} : vector<4x384xf32> to vector<4x32xf32>
    %108 = vector.extract_strided_slice %49 {offsets = [0, 352], sizes = [4, 32], strides = [1, 1]} : vector<4x384xf32> to vector<4x32xf32>
    %cst_58 = arith.constant dense<0.000000e+00> : vector<4x4xf32>
    %109 = tpu.matmul %106, %107, %cst_58 {dimension_numbers = #tpu.dot_dimension_numbers<[1], [1], [0], [0], [0, 0, 1, 0], [], []>} : vector<4x32xf32>, vector<4x32xf32>, vector<4x4xf32> -> vector<4x4xf32>
    %110 = arith.addf %109, %4 : vector<4x4xf32>
    %cst_59 = arith.constant dense<0xFF800000> : vector<4xf32>
    %111 = vector.multi_reduction <maximumf>, %110, %cst_59 [1] : vector<4x4xf32> to vector<4xf32>
    %112 = vector.shape_cast %111 : vector<4xf32> to vector<4x1xf32>
    %113 = vector.broadcast %112 : vector<4x1xf32> to vector<4x4xf32>
    %114 = arith.subf %110, %113 : vector<4x4xf32>
    %115 = math.exp %114 : vector<4x4xf32>
    %cst_60 = arith.constant dense<0.000000e+00> : vector<4xf32>
    %116 = vector.multi_reduction <add>, %115, %cst_60 [1] : vector<4x4xf32> to vector<4xf32>
    %117 = vector.shape_cast %116 : vector<4xf32> to vector<4x1xf32>
    %118 = tpu.reciprocal %117 {approx = true} : vector<4x1xf32> -> vector<4x1xf32>
    %119 = vector.broadcast %118 : vector<4x1xf32> to vector<4x4xf32>
    %120 = arith.mulf %115, %119 : vector<4x4xf32>
    %cst_61 = arith.constant dense<0.000000e+00> : vector<4x32xf32>
    %121 = tpu.matmul %120, %108, %cst_61 {dimension_numbers = #tpu.dot_dimension_numbers<[1], [0], [0], [1], [0, 0, 1, 1], [], []>} : vector<4x4xf32>, vector<4x32xf32>, vector<4x32xf32> -> vector<4x32xf32>
    %122 = tpu.concatenate %67, %85, %103, %121 in 1 : vector<4x32xf32>, vector<4x32xf32>, vector<4x32xf32>, vector<4x32xf32> -> vector<4x128xf32>
    %cst_62 = arith.constant dense<0.000000e+00> : vector<4x128xf32>
    %123 = tpu.matmul %122, %12, %cst_62 {dimension_numbers = #tpu.dot_dimension_numbers<[1], [0], [0], [1], [0, 0, 1, 1], [], []>} : vector<4x128xf32>, vector<128x128xf32>, vector<4x128xf32> -> vector<4x128xf32>
    %124 = arith.addf %3, %123 : vector<4x128xf32>
    %125 = vector.broadcast %14 : vector<1x128xf32> to vector<4x128xf32>
    %126 = arith.addf %124, %125 : vector<4x128xf32>
    %cst_63 = arith.constant dense<0.000000e+00> : vector<4xf32>
    %127 = vector.multi_reduction <add>, %126, %cst_63 [1] : vector<4x128xf32> to vector<4xf32>
    %128 = vector.shape_cast %127 : vector<4xf32> to vector<4x1xf32>
    %cst_64 = arith.constant 1.280000e+02 : f32
    %129 = vector.broadcast %cst_64 : f32 to vector<4x1xf32>
    %130 = arith.divf %128, %129 : vector<4x1xf32>
    %131 = vector.broadcast %130 : vector<4x1xf32> to vector<4x128xf32>
    %132 = arith.subf %126, %131 : vector<4x128xf32>
    %133 = arith.mulf %132, %132 : vector<4x128xf32>
    %cst_65 = arith.constant dense<0.000000e+00> : vector<4xf32>
    %134 = vector.multi_reduction <add>, %133, %cst_65 [1] : vector<4x128xf32> to vector<4xf32>
    %135 = vector.shape_cast %134 : vector<4xf32> to vector<4x1xf32>
    %cst_66 = arith.constant 1.280000e+02 : f32
    %136 = vector.broadcast %cst_66 : f32 to vector<4x1xf32>
    %137 = arith.divf %135, %136 : vector<4x1xf32>
    %138 = vector.broadcast %130 : vector<4x1xf32> to vector<4x128xf32>
    %139 = arith.subf %126, %138 : vector<4x128xf32>
    %cst_67 = arith.constant 9.99999974E-6 : f32
    %140 = vector.broadcast %cst_67 : f32 to vector<4x1xf32>
    %141 = arith.addf %137, %140 : vector<4x1xf32>
    %142 = math.rsqrt %141 : vector<4x1xf32>
    %143 = vector.broadcast %142 : vector<4x1xf32> to vector<4x128xf32>
    %144 = arith.mulf %139, %143 : vector<4x128xf32>
    %145 = vector.broadcast %16 : vector<1x128xf32> to vector<4x128xf32>
    %146 = arith.mulf %144, %145 : vector<4x128xf32>
    %147 = vector.broadcast %18 : vector<1x128xf32> to vector<4x128xf32>
    %148 = arith.addf %146, %147 : vector<4x128xf32>
    %cst_68 = arith.constant dense<0.000000e+00> : vector<4x512xf32>
    %149 = tpu.matmul %148, %20, %cst_68 {dimension_numbers = #tpu.dot_dimension_numbers<[1], [0], [0], [1], [0, 0, 1, 1], [], []>} : vector<4x128xf32>, vector<128x512xf32>, vector<4x512xf32> -> vector<4x512xf32>
    %150 = vector.broadcast %22 : vector<1x512xf32> to vector<4x512xf32>
    %151 = arith.addf %149, %150 : vector<4x512xf32>
    %cst_69 = arith.constant 5.000000e-01 : f32
    %152 = vector.broadcast %cst_69 : f32 to vector<4x512xf32>
    %153 = arith.mulf %152, %151 : vector<4x512xf32>
    %cst_70 = arith.constant 4.471500e-02 : f32
    %154 = vector.broadcast %cst_70 : f32 to vector<4x512xf32>
    %155 = arith.mulf %154, %151 : vector<4x512xf32>
    %156 = arith.mulf %155, %151 : vector<4x512xf32>
    %157 = arith.mulf %156, %151 : vector<4x512xf32>
    %158 = arith.addf %151, %157 : vector<4x512xf32>
    %cst_71 = arith.constant 0.797884583 : f32
    %159 = vector.broadcast %cst_71 : f32 to vector<4x512xf32>
    %160 = arith.mulf %159, %158 : vector<4x512xf32>
    %161 = math.tanh %160 : vector<4x512xf32>
    %cst_72 = arith.constant 1.000000e+00 : f32
    %162 = vector.broadcast %cst_72 : f32 to vector<4x512xf32>
    %163 = arith.addf %162, %161 : vector<4x512xf32>
    %164 = arith.mulf %153, %163 : vector<4x512xf32>
    %cst_73 = arith.constant dense<0.000000e+00> : vector<4x128xf32>
    %165 = tpu.matmul %164, %24, %cst_73 {dimension_numbers = #tpu.dot_dimension_numbers<[1], [0], [0], [1], [0, 0, 1, 1], [], []>} : vector<4x512xf32>, vector<512x128xf32>, vector<4x128xf32> -> vector<4x128xf32>
    %166 = arith.addf %126, %165 : vector<4x128xf32>
    %167 = vector.broadcast %26 : vector<1x128xf32> to vector<4x128xf32>
    %168 = arith.addf %166, %167 : vector<4x128xf32>
    %c0_74 = arith.constant 0 : index
    %c0_75 = arith.constant 0 : index
    %169 = vector.load %arg22[%c0_74, %c0_75] : memref<4x128xf32, #tpu.memory_space<vmem>>, vector<4x128xf32>
    tpu.vector_store %arg22[%c0_74, %c0_75], %168 {strides = array<i32>} : memref<4x128xf32, #tpu.memory_space<vmem>>, vector<4x128xf32>,
    %c1_i32 = arith.constant 1 : i32
    %170 = arith.cmpi eq, %arg0, %c1_i32 : i32
    %171 = arith.extui %170 : i1 to i32
    %c0_i32_76 = arith.constant 0 : i32
    %172 = arith.cmpi ne, %171, %c0_i32_76 : i32
    scf.if %172 {
      %c0_77 = arith.constant 0 : index
      %c0_78 = arith.constant 0 : index
      %173 = vector.load %arg22[%c0_77, %c0_78] : memref<4x128xf32, #tpu.memory_space<vmem>>, vector<4x128xf32>
      %c0_79 = arith.constant 0 : index
      %c0_80 = arith.constant 0 : index
      %174 = vector.load %arg17[%c0_79, %c0_80] : memref<1x128xf32, #tpu.memory_space<vmem>>, vector<1x128xf32>
      %c0_81 = arith.constant 0 : index
      %c0_82 = arith.constant 0 : index
      %175 = vector.load %arg18[%c0_81, %c0_82] : memref<1x128xf32, #tpu.memory_space<vmem>>, vector<1x128xf32>
      %cst_83 = arith.constant dense<0.000000e+00> : vector<4xf32>
      %176 = vector.multi_reduction <add>, %173, %cst_83 [1] : vector<4x128xf32> to vector<4xf32>
      %177 = vector.shape_cast %176 : vector<4xf32> to vector<4x1xf32>
      %cst_84 = arith.constant 1.280000e+02 : f32
      %178 = vector.broadcast %cst_84 : f32 to vector<4x1xf32>
      %179 = arith.divf %177, %178 : vector<4x1xf32>
      %180 = vector.broadcast %179 : vector<4x1xf32> to vector<4x128xf32>
      %181 = arith.subf %173, %180 : vector<4x128xf32>
      %182 = arith.mulf %181, %181 : vector<4x128xf32>
      %cst_85 = arith.constant dense<0.000000e+00> : vector<4xf32>
      %183 = vector.multi_reduction <add>, %182, %cst_85 [1] : vector<4x128xf32> to vector<4xf32>
      %184 = vector.shape_cast %183 : vector<4xf32> to vector<4x1xf32>
      %cst_86 = arith.constant 1.280000e+02 : f32
      %185 = vector.broadcast %cst_86 : f32 to vector<4x1xf32>
      %186 = arith.divf %184, %185 : vector<4x1xf32>
      %187 = vector.broadcast %179 : vector<4x1xf32> to vector<4x128xf32>
      %188 = arith.subf %173, %187 : vector<4x128xf32>
      %cst_87 = arith.constant 9.99999974E-6 : f32
      %189 = vector.broadcast %cst_87 : f32 to vector<4x1xf32>
      %190 = arith.addf %186, %189 : vector<4x1xf32>
      %191 = math.rsqrt %190 : vector<4x1xf32>
      %192 = vector.broadcast %191 : vector<4x1xf32> to vector<4x128xf32>
      %193 = arith.mulf %188, %192 : vector<4x128xf32>
      %194 = vector.broadcast %174 : vector<1x128xf32> to vector<4x128xf32>
      %195 = arith.mulf %193, %194 : vector<4x128xf32>
      %196 = vector.broadcast %175 : vector<1x128xf32> to vector<4x128xf32>
      %197 = arith.addf %195, %196 : vector<4x128xf32>
      %c0_88 = arith.constant 0 : index
      %c0_89 = arith.constant 0 : index
      %198 = vector.load %arg19[%c0_88, %c0_89] : memref<128x128xf32, #tpu.memory_space<vmem>>, vector<128x128xf32>
      %cst_90 = arith.constant dense<0.000000e+00> : vector<4x128xf32>
      %199 = tpu.matmul %197, %198, %cst_90 {dimension_numbers = #tpu.dot_dimension_numbers<[1], [0], [0], [1], [0, 0, 1, 1], [], []>} : vector<4x128xf32>, vector<128x128xf32>, vector<4x128xf32> -> vector<4x128xf32>
      %c0_91 = arith.constant 0 : index
      %c0_92 = arith.constant 0 : index
      %200 = vector.load %arg20[%c0_91, %c0_92] : memref<4x128xf32, #tpu.memory_space<vmem>>, vector<4x128xf32>
      %201 = arith.addf %199, %200 : vector<4x128xf32>
      %c0_93 = arith.constant 0 : index
      %c0_94 = arith.constant 0 : index
      %202 = vector.load %arg21[%c0_93, %c0_94] : memref<4x128xf32, #tpu.memory_space<vmem>>, vector<4x128xf32>
      tpu.vector_store %arg21[%c0_93, %c0_94], %201 {strides = array<i32>} : memref<4x128xf32, #tpu.memory_space<vmem>>, vector<4x128xf32>,
    } else {
    }
    return
  }
  func.func @transform_0(%arg0: i32) -> (i32, i32) {
    %c0_i32 = arith.constant 0 : i32
    %c0_i32_0 = arith.constant 0 : i32
    %c0_i32_1 = arith.constant 0 : i32
    return %c0_i32, %c0_i32_0 : i32, i32
  }
  func.func @transform_1(%arg0: i32) -> (i32, i32) {
    %c0_i32 = arith.constant 0 : i32
    %c0_i32_0 = arith.constant 0 : i32
    %c0_i32_1 = arith.constant 0 : i32
    return %c0_i32, %c0_i32_0 : i32, i32
  }
  func.func @transform_2(%arg0: i32) -> (i32, i32) {
    %c0_i32 = arith.constant 0 : i32
    %c0_i32_0 = arith.constant 0 : i32
    %c0_i32_1 = arith.constant 0 : i32
    return %c0_i32, %c0_i32_0 : i32, i32
  }
  func.func @transform_3(%arg0: i32) -> (i32, i32) {
    %c0_i32 = arith.constant 0 : i32
    %c0_i32_0 = arith.constant 0 : i32
    %c0_i32_1 = arith.constant 0 : i32
    return %c0_i32, %c0_i32_0 : i32, i32
  }
  func.func @transform_4(%arg0: i32) -> (i32, i32) {
    %c0_i32 = arith.constant 0 : i32
    %c0_i32_0 = arith.constant 0 : i32
    %c0_i32_1 = arith.constant 0 : i32
    return %c0_i32, %c0_i32_0 : i32, i32
  }
  func.func @transform_5(%arg0: i32) -> (i32, i32, i32) {
    %c0_i32 = arith.constant 0 : i32
    %c0_i32_0 = arith.constant 0 : i32
    %c0_i32_1 = arith.constant 0 : i32
    return %arg0, %c0_i32, %c0_i32_0 : i32, i32, i32
  }
  func.func @transform_6(%arg0: i32) -> (i32, i32, i32) {
    %c0_i32 = arith.constant 0 : i32
    %c0_i32_0 = arith.constant 0 : i32
    %c0_i32_1 = arith.constant 0 : i32
    return %arg0, %c0_i32, %c0_i32_0 : i32, i32, i32
  }
  func.func @transform_7(%arg0: i32) -> (i32, i32, i32) {
    %c0_i32 = arith.constant 0 : i32
    %c0_i32_0 = arith.constant 0 : i32
    %c0_i32_1 = arith.constant 0 : i32
    return %arg0, %c0_i32, %c0_i32_0 : i32, i32, i32
  }
  func.func @transform_8(%arg0: i32) -> (i32, i32, i32) {
    %c0_i32 = arith.constant 0 : i32
    %c0_i32_0 = arith.constant 0 : i32
    %c0_i32_1 = arith.constant 0 : i32
    return %arg0, %c0_i32, %c0_i32_0 : i32, i32, i32
  }
  func.func @transform_9(%arg0: i32) -> (i32, i32, i32) {
    %c0_i32 = arith.constant 0 : i32
    %c0_i32_0 = arith.constant 0 : i32
    %c0_i32_1 = arith.constant 0 : i32
    return %arg0, %c0_i32, %c0_i32_0 : i32, i32, i32
  }
  func.func @transform_10(%arg0: i32) -> (i32, i32, i32) {
    %c0_i32 = arith.constant 0 : i32
    %c0_i32_0 = arith.constant 0 : i32
    %c0_i32_1 = arith.constant 0 : i32
    return %arg0, %c0_i32, %c0_i32_0 : i32, i32, i32
  }
  func.func @transform_11(%arg0: i32) -> (i32, i32, i32) {
    %c0_i32 = arith.constant 0 : i32
    %c0_i32_0 = arith.constant 0 : i32
    %c0_i32_1 = arith.constant 0 : i32
    return %arg0, %c0_i32, %c0_i32_0 : i32, i32, i32
  }
  func.func @transform_12(%arg0: i32) -> (i32, i32, i32) {
    %c0_i32 = arith.constant 0 : i32
    %c0_i32_0 = arith.constant 0 : i32
    %c0_i32_1 = arith.constant 0 : i32
    return %arg0, %c0_i32, %c0_i32_0 : i32, i32, i32
  }
  func.func @transform_13(%arg0: i32) -> (i32, i32, i32) {
    %c0_i32 = arith.constant 0 : i32
    %c0_i32_0 = arith.constant 0 : i32
    %c0_i32_1 = arith.constant 0 : i32
    return %arg0, %c0_i32, %c0_i32_0 : i32, i32, i32
  }
  func.func @transform_14(%arg0: i32) -> (i32, i32, i32) {
    %c0_i32 = arith.constant 0 : i32
    %c0_i32_0 = arith.constant 0 : i32
    %c0_i32_1 = arith.constant 0 : i32
    return %arg0, %c0_i32, %c0_i32_0 : i32, i32, i32
  }
  func.func @transform_15(%arg0: i32) -> (i32, i32, i32) {
    %c0_i32 = arith.constant 0 : i32
    %c0_i32_0 = arith.constant 0 : i32
    %c0_i32_1 = arith.constant 0 : i32
    return %arg0, %c0_i32, %c0_i32_0 : i32, i32, i32
  }
  func.func @transform_16(%arg0: i32) -> (i32, i32) {
    %c0_i32 = arith.constant 0 : i32
    %c0_i32_0 = arith.constant 0 : i32
    %c0_i32_1 = arith.constant 0 : i32
    return %c0_i32, %c0_i32_0 : i32, i32
  }
  func.func @transform_17(%arg0: i32) -> (i32, i32) {
    %c0_i32 = arith.constant 0 : i32
    %c0_i32_0 = arith.constant 0 : i32
    %c0_i32_1 = arith.constant 0 : i32
    return %c0_i32, %c0_i32_0 : i32, i32
  }
  func.func @transform_18(%arg0: i32) -> (i32, i32) {
    %c0_i32 = arith.constant 0 : i32
    %c0_i32_0 = arith.constant 0 : i32
    %c0_i32_1 = arith.constant 0 : i32
    return %c0_i32, %c0_i32_0 : i32, i32
  }
  func.func @transform_19(%arg0: i32) -> (i32, i32) {
    %c0_i32 = arith.constant 0 : i32
    %c0_i32_0 = arith.constant 0 : i32
    %c0_i32_1 = arith.constant 0 : i32
    return %c0_i32, %c0_i32_0 : i32, i32
  }
  func.func @transform_20(%arg0: i32) -> (i32, i32) {
    %c0_i32 = arith.constant 0 : i32
    %c0_i32_0 = arith.constant 0 : i32
    %c0_i32_1 = arith.constant 0 : i32
    return %c0_i32, %c0_i32_0 : i32, i32
  }
}

</mosaic_0001>

<llo_original>
// kernel: tpu_custom_call.1
$region0: #{tpu_custom_call.1}
  #allocation0 [shape = 'u32[]', space=smem, size = 0x4, offset = 0x4, fixed_abs, tag = 'smem constant byte address 0x4 - core index']
  #allocation1 [shape = 'u32[144,128]{1,0:T(1,128)}', space=vmem, size = 0x12000, scoped, tag = 'internal scratch']
  #allocation2 [shape = 'f32[4,128]{1,0:T(4,128)}', space=vmem, size = 0x800, scoped, tag = 'scratch operand']
  %s0 = inlined_call_operand.hbm [shape: f32[4,128], index: 0, kind: input, shape index: {}]
  %s1 = inlined_call_operand.hbm [shape: f32[4,4], index: 1, kind: input, shape index: {}]
  %s2 = inlined_call_operand.vmem [shape: f32[4,128], index: 2, kind: input, shape index: {}]
  %s3 = inlined_call_operand.hbm [shape: f32[128,128], index: 3, kind: input, shape index: {}]
  %s4 = inlined_call_operand.hbm [shape: f32[1,128], index: 4, kind: input, shape index: {}]
  %s5 = inlined_call_operand.vmem [shape: f32[2,1,128], index: 5, kind: input, shape index: {}]
  %s6 = inlined_call_operand.vmem [shape: f32[2,1,128], index: 6, kind: input, shape index: {}]
  %s7 = inlined_call_operand.hbm [shape: f32[2,128,384], index: 7, kind: input, shape index: {}]
  %s8 = inlined_call_operand.hbm [shape: f32[2,128,128], index: 8, kind: input, shape index: {}]
  %s9 = inlined_call_operand.vmem [shape: f32[2,1,128], index: 9, kind: input, shape index: {}]
  %s10 = inlined_call_operand.vmem [shape: f32[2,1,128], index: 10, kind: input, shape index: {}]
  %s11 = inlined_call_operand.vmem [shape: f32[2,1,128], index: 11, kind: input, shape index: {}]
  %s12 = inlined_call_operand.hbm [shape: f32[2,128,512], index: 12, kind: input, shape index: {}]
  %s13 = inlined_call_operand.vmem [shape: f32[2,1,512], index: 13, kind: input, shape index: {}]
  %s14 = inlined_call_operand.hbm [shape: f32[2,512,128], index: 14, kind: input, shape index: {}]
  %s15 = inlined_call_operand.vmem [shape: f32[2,1,128], index: 15, kind: input, shape index: {}]
  %s16 = inlined_call_operand.vmem [shape: f32[1,128], index: 16, kind: input, shape index: {}]
  %s17 = inlined_call_operand.vmem [shape: f32[1,128], index: 17, kind: input, shape index: {}]
  %s18 = inlined_call_operand.hbm [shape: f32[128,128], index: 18, kind: input, shape index: {}]
  %s19 = inlined_call_operand.vmem [shape: f32[4,128], index: 19, kind: input, shape index: {}]
  %s20 = inlined_call_operand.hbm [shape: f32[4,128], index: 20, kind: output, shape index: {}]
  %s21 = sld [smem:[#allocation0]]
  $region157: #{tpu_custom_call.1} parent=0
    _
  %s23 = ssub.s32 1, %s21
  %s24 = scalar_select 0, %s23, %s21
  $region1: #{tpu_custom_call.1} parent=0
    #allocation3 [shape = 'u8[2048]{0}', space=vmem, size = 0x800, scoped, tag = 'input window, operand 0, single buffered']
    #allocation4 [shape = 's32[2]{0}', space=sflag, size = 0x8, scoped, tag = 'scoped memory for tpu_custom_call.1']
    #allocation5 [shape = 's32[2]{0}', space=sflag, size = 0x8, scoped, tag = 'scoped memory for tpu_custom_call.1']
    #allocation6 [shape = 'u8[2048]{0}', space=vmem, size = 0x800, scoped, tag = 'input window, operand 1, single buffered']
    #allocation7 [shape = 's32[1]{0}', space=sflag, size = 0x4, scoped, tag = 'scoped memory for tpu_custom_call.1']
    #allocation8 [shape = 'u8[65536]{0}', space=vmem, size = 0x10000, scoped, tag = 'input window, operand 3, single buffered']
    #allocation9 [shape = 'u8[512]{0}', space=vmem, size = 0x400, scoped, tag = 'input window, operand 4, single buffered']
    #allocation10 [shape = 's32[1]{0}', space=sflag, size = 0x4, scoped, tag = 'scoped memory for tpu_custom_call.1']
    #allocation11 [shape = 'u8[393216]{0}', space=vmem, size = 0x60000, scoped, tag = 'input window, operand 7']
    #allocation12 [shape = 'u8[131072]{0}', space=vmem, size = 0x20000, scoped, tag = 'input window, operand 8']
    #allocation13 [shape = 'u8[524288]{0}', space=vmem, size = 0x80000, scoped, tag = 'input window, operand 12']
    #allocation14 [shape = 'u8[524288]{0}', space=vmem, size = 0x80000, scoped, tag = 'input window, operand 14']
    #allocation15 [shape = 'u8[65536]{0}', space=vmem, size = 0x10000, scoped, tag = 'input window, operand 18, single buffered']
    #allocation16 [shape = 'u8[2048]{0}', space=vmem, size = 0x800, scoped, tag = 'output window, operand 0, single buffered']
    %25 = vsyncpa [#allocation4], 0
    %26 = vsyncpa [#allocation7], 0
    %27 = vsyncpa [#allocation10], 0
    %28 = vsyncpa [#allocation5], 0
    loop: start=0, step=1, limit=4
    $region2: #{tpu_custom_call.1} parent=1 // loop_pre_header
      _
    $region3: #{tpu_custom_call.1} parent=1 // loop_header
      %s30 = sphi 0, %s34
      %p31 = scmp.ge.s32.totalorder %s30, 4
      %s38 = sphi 0, %s38
      %s40 = sphi 0, %s38
      %s41 = sphi 0, %s40
      %s55 = sphi 0, %s41
      %s59 = sphi 0, %s59
      %s61 = sphi 0, %s59
      %s62 = sphi 0, %s61
      %s76 = sphi 0, %s62
      %s80 = sphi 0, %s80
      %s82 = sphi 0, %s80
      %s83 = sphi 0, %s82
      %s97 = sphi 0, %s83
      %s101 = sphi 0, %s101
      %s103 = sphi 0, %s101
      %s104 = sphi 0, %s103
      %s118 = sphi 0, %s104
      %s122 = sphi 0, %s122
      %s124 = sphi 0, %s122
      %s125 = sphi 0, %s124
      %s139 = sphi 0, %s125
      %s145 = sphi 0, %s147
      %s148 = sphi 0, %s145
      %s149 = sphi 0, %s148
      %s165 = sphi 0, %s149
      %s171 = sphi 0, %s173
      %s174 = sphi 0, %s171
      %s175 = sphi 0, %s174
      %s191 = sphi 0, %s175
      %s197 = sphi 0, %s199
      %s200 = sphi 0, %s197
      %s201 = sphi 0, %s200
      %s217 = sphi 0, %s201
      %s223 = sphi 0, %s225
      %s226 = sphi 0, %s223
      %s227 = sphi 0, %s226
      %s243 = sphi 0, %s227
      %s249 = sphi 0, %s251
      %s252 = sphi 0, %s249
      %s253 = sphi 0, %s252
      %s269 = sphi 0, %s253
      %s275 = sphi 0, %s277
      %s278 = sphi 0, %s275
      %s279 = sphi 0, %s278
      %s295 = sphi 0, %s279
      %s301 = sphi 0, %s303
      %s304 = sphi 0, %s301
      %s305 = sphi 0, %s304
      %s321 = sphi 0, %s305
      %s327 = sphi 0, %s329
      %s330 = sphi 0, %s327
      %s331 = sphi 0, %s330
      %s347 = sphi 0, %s331
      %s353 = sphi 0, %s355
      %s356 = sphi 0, %s353
      %s357 = sphi 0, %s356
      %s373 = sphi 0, %s357
      %s379 = sphi 0, %s381
      %s382 = sphi 0, %s379
      %s383 = sphi 0, %s382
      %s399 = sphi 0, %s383
      %s405 = sphi 0, %s407
      %s408 = sphi 0, %s405
      %s409 = sphi 0, %s408
      %s425 = sphi 0, %s409
      %s429 = sphi 0, %s429
      %s431 = sphi 0, %s429
      %s432 = sphi 0, %s431
      %s446 = sphi 0, %s432
      %s450 = sphi 0, %s450
      %s452 = sphi 0, %s450
      %s453 = sphi 0, %s452
      %s467 = sphi 0, %s453
      %s471 = sphi 0, %s471
      %s473 = sphi 0, %s471
      %s474 = sphi 0, %s473
      %s488 = sphi 0, %s474
      %s492 = sphi 0, %s492
      %s494 = sphi 0, %s492
      %s495 = sphi 0, %s494
      %s509 = sphi 0, %s495
      %s513 = sphi 0, %s513
      %s515 = sphi 0, %s513
      %s516 = sphi 0, %s515
      %s530 = sphi 0, %s516
    $region4: #{tpu_custom_call.1} parent=1 // loop_header_branch
      %33 = sbr.rel (%p31) target = $region8
    $region5: #{tpu_custom_call.1} parent=1 // loop_body
      %s35 = ssub.s32 %s30, 1
      %s36 = ssub.s32 %s30, 2
      %s37 = sadd.s32 %s30, 1
      %s39 = sadd.s32 %s38, 1
      %p42 = scmp.eq.s32.totalorder %s30, 1
      %p43 = scmp.ne.s32.totalorder %s38, %s40
      %p44 = scmp.eq.s32.totalorder %s30, 0
      %p45 = por %p43, %p44
      %p46 = scmp.ne.s32.totalorder %s38, %s40
      %p47 = scmp.eq.s32.totalorder %s35, 1
      %p48 = por %p46, %p47
      %p49 = scmp.ne.s32.totalorder %s40, %s41
      %p50 = scmp.eq.s32.totalorder %s35, 0
      %p51 = por %p49, %p50
      %p52 = scmp.ne.s32.totalorder %s40, %s41
      %p53 = scmp.eq.s32.totalorder %s36, 1
      %p54 = por %p52, %p53
      %p56 = scmp.ne.s32.totalorder %s41, %s55
      %p57 = scmp.eq.s32.totalorder %s36, 0
      %p58 = por %p56, %p57
      %s60 = sadd.s32 %s59, 1
      %p63 = scmp.eq.s32.totalorder %s30, 1
      %p64 = scmp.ne.s32.totalorder %s59, %s61
      %p65 = scmp.eq.s32.totalorder %s30, 0
      %p66 = por %p64, %p65
      %p67 = scmp.ne.s32.totalorder %s59, %s61
      %p68 = scmp.eq.s32.totalorder %s35, 1
      %p69 = por %p67, %p68
      %p70 = scmp.ne.s32.totalorder %s61, %s62
      %p71 = scmp.eq.s32.totalorder %s35, 0
      %p72 = por %p70, %p71
      %p73 = scmp.ne.s32.totalorder %s61, %s62
      %p74 = scmp.eq.s32.totalorder %s36, 1
      %p75 = por %p73, %p74
      %p77 = scmp.ne.s32.totalorder %s62, %s76
      %p78 = scmp.eq.s32.totalorder %s36, 0
      %p79 = por %p77, %p78
      %s81 = sadd.s32 %s80, 1
      %p84 = scmp.eq.s32.totalorder %s30, 1
      %p85 = scmp.ne.s32.totalorder %s80, %s82
      %p86 = scmp.eq.s32.totalorder %s30, 0
      %p87 = por %p85, %p86
      %p88 = scmp.ne.s32.totalorder %s80, %s82
      %p89 = scmp.eq.s32.totalorder %s35, 1
      %p90 = por %p88, %p89
      %p91 = scmp.ne.s32.totalorder %s82, %s83
      %p92 = scmp.eq.s32.totalorder %s35, 0
      %p93 = por %p91, %p92
      %p94 = scmp.ne.s32.totalorder %s82, %s83
      %p95 = scmp.eq.s32.totalorder %s36, 1
      %p96 = por %p94, %p95
      %p98 = scmp.ne.s32.totalorder %s83, %s97
      %p99 = scmp.eq.s32.totalorder %s36, 0
      %p100 = por %p98, %p99
      %s102 = sadd.s32 %s101, 1
      %p105 = scmp.eq.s32.totalorder %s30, 1
      %p106 = scmp.ne.s32.totalorder %s101, %s103
      %p107 = scmp.eq.s32.totalorder %s30, 0
      %p108 = por %p106, %p107
      %p109 = scmp.ne.s32.totalorder %s101, %s103
      %p110 = scmp.eq.s32.totalorder %s35, 1
      %p111 = por %p109, %p110
      %p112 = scmp.ne.s32.totalorder %s103, %s104
      %p113 = scmp.eq.s32.totalorder %s35, 0
      %p114 = por %p112, %p113
      %p115 = scmp.ne.s32.totalorder %s103, %s104
      %p116 = scmp.eq.s32.totalorder %s36, 1
      %p117 = por %p115, %p116
      %p119 = scmp.ne.s32.totalorder %s104, %s118
      %p120 = scmp.eq.s32.totalorder %s36, 0
      %p121 = por %p119, %p120
      %s123 = sadd.s32 %s122, 1
      %p126 = scmp.eq.s32.totalorder %s30, 1
      %p127 = scmp.ne.s32.totalorder %s122, %s124
      %p128 = scmp.eq.s32.totalorder %s30, 0
      %p129 = por %p127, %p128
      %p130 = scmp.ne.s32.totalorder %s122, %s124
      %p131 = scmp.eq.s32.totalorder %s35, 1
      %p132 = por %p130, %p131
      %p133 = scmp.ne.s32.totalorder %s124, %s125
      %p134 = scmp.eq.s32.totalorder %s35, 0
      %p135 = por %p133, %p134
      %p136 = scmp.ne.s32.totalorder %s124, %s125
      %p137 = scmp.eq.s32.totalorder %s36, 1
      %p138 = por %p136, %p137
      %p140 = scmp.ne.s32.totalorder %s125, %s139
      %p141 = scmp.eq.s32.totalorder %s36, 0
      %p142 = por %p140, %p141
      %s143 = ssub.s32 %s30, %s37
      %p144 = scmp.eq.s32.totalorder %s143, 0
      %s146 = sadd.s32 %s145, 1
      %s147 = scalar_select %p144, %s145, %s146
      %p150 = pneg %p144
      %p151 = scmp.eq.s32.totalorder %s30, 1
      %p152 = por %p150, %p151
      %p153 = scmp.ne.s32.totalorder %s145, %s148
      %p154 = scmp.eq.s32.totalorder %s30, 0
      %p155 = por %p153, %p154
      %p156 = scmp.ne.s32.totalorder %s145, %s148
      %p157 = scmp.eq.s32.totalorder %s35, 1
      %p158 = por %p156, %p157
      %p159 = scmp.ne.s32.totalorder %s148, %s149
      %p160 = scmp.eq.s32.totalorder %s35, 0
      %p161 = por %p159, %p160
      %p162 = scmp.ne.s32.totalorder %s148, %s149
      %p163 = scmp.eq.s32.totalorder %s36, 1
      %p164 = por %p162, %p163
      %p166 = scmp.ne.s32.totalorder %s149, %s165
      %p167 = scmp.eq.s32.totalorder %s36, 0
      %p168 = por %p166, %p167
      %s169 = ssub.s32 %s30, %s37
      %p170 = scmp.eq.s32.totalorder %s169, 0
      %s172 = sadd.s32 %s171, 1
      %s173 = scalar_select %p170, %s171, %s172
      %p176 = pneg %p170
      %p177 = scmp.eq.s32.totalorder %s30, 1
      %p178 = por %p176, %p177
      %p179 = scmp.ne.s32.totalorder %s171, %s174
      %p180 = scmp.eq.s32.totalorder %s30, 0
      %p181 = por %p179, %p180
      %p182 = scmp.ne.s32.totalorder %s171, %s174
      %p183 = scmp.eq.s32.totalorder %s35, 1
      %p184 = por %p182, %p183
      %p185 = scmp.ne.s32.totalorder %s174, %s175
      %p186 = scmp.eq.s32.totalorder %s35, 0
      %p187 = por %p185, %p186
      %p188 = scmp.ne.s32.totalorder %s174, %s175
      %p189 = scmp.eq.s32.totalorder %s36, 1
      %p190 = por %p188, %p189
      %p192 = scmp.ne.s32.totalorder %s175, %s191
      %p193 = scmp.eq.s32.totalorder %s36, 0
      %p194 = por %p192, %p193
      %s195 = ssub.s32 %s30, %s37
      %p196 = scmp.eq.s32.totalorder %s195, 0
      %s198 = sadd.s32 %s197, 1
      %s199 = scalar_select %p196, %s197, %s198
      %p202 = pneg %p196
      %p203 = scmp.eq.s32.totalorder %s30, 1
      %p204 = por %p202, %p203
      %p205 = scmp.ne.s32.totalorder %s197, %s200
      %p206 = scmp.eq.s32.totalorder %s30, 0
      %p207 = por %p205, %p206
      %p208 = scmp.ne.s32.totalorder %s197, %s200
      %p209 = scmp.eq.s32.totalorder %s35, 1
      %p210 = por %p208, %p209
      %p211 = scmp.ne.s32.totalorder %s200, %s201
      %p212 = scmp.eq.s32.totalorder %s35, 0
      %p213 = por %p211, %p212
      %p214 = scmp.ne.s32.totalorder %s200, %s201
      %p215 = scmp.eq.s32.totalorder %s36, 1
      %p216 = por %p214, %p215
      %p218 = scmp.ne.s32.totalorder %s201, %s217
      %p219 = scmp.eq.s32.totalorder %s36, 0
      %p220 = por %p218, %p219
      %s221 = ssub.s32 %s30, %s37
      %p222 = scmp.eq.s32.totalorder %s221, 0
      %s224 = sadd.s32 %s223, 1
      %s225 = scalar_select %p222, %s223, %s224
      %p228 = pneg %p222
      %p229 = scmp.eq.s32.totalorder %s30, 1
      %p230 = por %p228, %p229
      %p231 = scmp.ne.s32.totalorder %s223, %s226
      %p232 = scmp.eq.s32.totalorder %s30, 0
      %p233 = por %p231, %p232
      %p234 = scmp.ne.s32.totalorder %s223, %s226
      %p235 = scmp.eq.s32.totalorder %s35, 1
      %p236 = por %p234, %p235
      %p237 = scmp.ne.s32.totalorder %s226, %s227
      %p238 = scmp.eq.s32.totalorder %s35, 0
      %p239 = por %p237, %p238
      %p240 = scmp.ne.s32.totalorder %s226, %s227
      %p241 = scmp.eq.s32.totalorder %s36, 1
      %p242 = por %p240, %p241
      %p244 = scmp.ne.s32.totalorder %s227, %s243
      %p245 = scmp.eq.s32.totalorder %s36, 0
      %p246 = por %p244, %p245
      %s247 = ssub.s32 %s30, %s37
      %p248 = scmp.eq.s32.totalorder %s247, 0
      %s250 = sadd.s32 %s249, 1
      %s251 = scalar_select %p248, %s249, %s250
      %p254 = pneg %p248
      %p255 = scmp.eq.s32.totalorder %s30, 1
      %p256 = por %p254, %p255
      %p257 = scmp.ne.s32.totalorder %s249, %s252
      %p258 = scmp.eq.s32.totalorder %s30, 0
      %p259 = por %p257, %p258
      %p260 = scmp.ne.s32.totalorder %s249, %s252
      %p261 = scmp.eq.s32.totalorder %s35, 1
      %p262 = por %p260, %p261
      %p263 = scmp.ne.s32.totalorder %s252, %s253
      %p264 = scmp.eq.s32.totalorder %s35, 0
      %p265 = por %p263, %p264
      %p266 = scmp.ne.s32.totalorder %s252, %s253
      %p267 = scmp.eq.s32.totalorder %s36, 1
      %p268 = por %p266, %p267
      %p270 = scmp.ne.s32.totalorder %s253, %s269
      %p271 = scmp.eq.s32.totalorder %s36, 0
      %p272 = por %p270, %p271
      %s273 = ssub.s32 %s30, %s37
      %p274 = scmp.eq.s32.totalorder %s273, 0
      %s276 = sadd.s32 %s275, 1
      %s277 = scalar_select %p274, %s275, %s276
      %p280 = pneg %p274
      %p281 = scmp.eq.s32.totalorder %s30, 1
      %p282 = por %p280, %p281
      %p283 = scmp.ne.s32.totalorder %s275, %s278
      %p284 = scmp.eq.s32.totalorder %s30, 0
      %p285 = por %p283, %p284
      %p286 = scmp.ne.s32.totalorder %s275, %s278
      %p287 = scmp.eq.s32.totalorder %s35, 1
      %p288 = por %p286, %p287
      %p289 = scmp.ne.s32.totalorder %s278, %s279
      %p290 = scmp.eq.s32.totalorder %s35, 0
      %p291 = por %p289, %p290
      %p292 = scmp.ne.s32.totalorder %s278, %s279
      %p293 = scmp.eq.s32.totalorder %s36, 1
      %p294 = por %p292, %p293
      %p296 = scmp.ne.s32.totalorder %s279, %s295
      %p297 = scmp.eq.s32.totalorder %s36, 0
      %p298 = por %p296, %p297
      %s299 = ssub.s32 %s30, %s37
      %p300 = scmp.eq.s32.totalorder %s299, 0
      %s302 = sadd.s32 %s301, 1
      %s303 = scalar_select %p300, %s301, %s302
      %p306 = pneg %p300
      %p307 = scmp.eq.s32.totalorder %s30, 1
      %p308 = por %p306, %p307
      %p309 = scmp.ne.s32.totalorder %s301, %s304
      %p310 = scmp.eq.s32.totalorder %s30, 0
      %p311 = por %p309, %p310
      %p312 = scmp.ne.s32.totalorder %s301, %s304
      %p313 = scmp.eq.s32.totalorder %s35, 1
      %p314 = por %p312, %p313
      %p315 = scmp.ne.s32.totalorder %s304, %s305
      %p316 = scmp.eq.s32.totalorder %s35, 0
      %p317 = por %p315, %p316
      %p318 = scmp.ne.s32.totalorder %s304, %s305
      %p319 = scmp.eq.s32.totalorder %s36, 1
      %p320 = por %p318, %p319
      %p322 = scmp.ne.s32.totalorder %s305, %s321
      %p323 = scmp.eq.s32.totalorder %s36, 0
      %p324 = por %p322, %p323
      %s325 = ssub.s32 %s30, %s37
      %p326 = scmp.eq.s32.totalorder %s325, 0
      %s328 = sadd.s32 %s327, 1
      %s329 = scalar_select %p326, %s327, %s328
      %p332 = pneg %p326
      %p333 = scmp.eq.s32.totalorder %s30, 1
      %p334 = por %p332, %p333
      %p335 = scmp.ne.s32.totalorder %s327, %s330
      %p336 = scmp.eq.s32.totalorder %s30, 0
      %p337 = por %p335, %p336
      %p338 = scmp.ne.s32.totalorder %s327, %s330
      %p339 = scmp.eq.s32.totalorder %s35, 1
      %p340 = por %p338, %p339
      %p341 = scmp.ne.s32.totalorder %s330, %s331
      %p342 = scmp.eq.s32.totalorder %s35, 0
      %p343 = por %p341, %p342
      %p344 = scmp.ne.s32.totalorder %s330, %s331
      %p345 = scmp.eq.s32.totalorder %s36, 1
      %p346 = por %p344, %p345
      %p348 = scmp.ne.s32.totalorder %s331, %s347
      %p349 = scmp.eq.s32.totalorder %s36, 0
      %p350 = por %p348, %p349
      %s351 = ssub.s32 %s30, %s37
      %p352 = scmp.eq.s32.totalorder %s351, 0
      %s354 = sadd.s32 %s353, 1
      %s355 = scalar_select %p352, %s353, %s354
      %p358 = pneg %p352
      %p359 = scmp.eq.s32.totalorder %s30, 1
      %p360 = por %p358, %p359
      %p361 = scmp.ne.s32.totalorder %s353, %s356
      %p362 = scmp.eq.s32.totalorder %s30, 0
      %p363 = por %p361, %p362
      %p364 = scmp.ne.s32.totalorder %s353, %s356
      %p365 = scmp.eq.s32.totalorder %s35, 1
      %p366 = por %p364, %p365
      %p367 = scmp.ne.s32.totalorder %s356, %s357
      %p368 = scmp.eq.s32.totalorder %s35, 0
      %p369 = por %p367, %p368
      %p370 = scmp.ne.s32.totalorder %s356, %s357
      %p371 = scmp.eq.s32.totalorder %s36, 1
      %p372 = por %p370, %p371
      %p374 = scmp.ne.s32.totalorder %s357, %s373
      %p375 = scmp.eq.s32.totalorder %s36, 0
      %p376 = por %p374, %p375
      %s377 = ssub.s32 %s30, %s37
      %p378 = scmp.eq.s32.totalorder %s377, 0
      %s380 = sadd.s32 %s379, 1
      %s381 = scalar_select %p378, %s379, %s380
      %p384 = pneg %p378
      %p385 = scmp.eq.s32.totalorder %s30, 1
      %p386 = por %p384, %p385
      %p387 = scmp.ne.s32.totalorder %s379, %s382
      %p388 = scmp.eq.s32.totalorder %s30, 0
      %p389 = por %p387, %p388
      %p390 = scmp.ne.s32.totalorder %s379, %s382
      %p391 = scmp.eq.s32.totalorder %s35, 1
      %p392 = por %p390, %p391
      %p393 = scmp.ne.s32.totalorder %s382, %s383
      %p394 = scmp.eq.s32.totalorder %s35, 0
      %p395 = por %p393, %p394
      %p396 = scmp.ne.s32.totalorder %s382, %s383
      %p397 = scmp.eq.s32.totalorder %s36, 1
      %p398 = por %p396, %p397
      %p400 = scmp.ne.s32.totalorder %s383, %s399
      %p401 = scmp.eq.s32.totalorder %s36, 0
      %p402 = por %p400, %p401
      %s403 = ssub.s32 %s30, %s37
      %p404 = scmp.eq.s32.totalorder %s403, 0
      %s406 = sadd.s32 %s405, 1
      %s407 = scalar_select %p404, %s405, %s406
      %p410 = pneg %p404
      %p411 = scmp.eq.s32.totalorder %s30, 1
      %p412 = por %p410, %p411
      %p413 = scmp.ne.s32.totalorder %s405, %s408
      %p414 = scmp.eq.s32.totalorder %s30, 0
      %p415 = por %p413, %p414
      %p416 = scmp.ne.s32.totalorder %s405, %s408
      %p417 = scmp.eq.s32.totalorder %s35, 1
      %p418 = por %p416, %p417
      %p419 = scmp.ne.s32.totalorder %s408, %s409
      %p420 = scmp.eq.s32.totalorder %s35, 0
      %p421 = por %p419, %p420
      %p422 = scmp.ne.s32.totalorder %s408, %s409
      %p423 = scmp.eq.s32.totalorder %s36, 1
      %p424 = por %p422, %p423
      %p426 = scmp.ne.s32.totalorder %s409, %s425
      %p427 = scmp.eq.s32.totalorder %s36, 0
      %p428 = por %p426, %p427
      %s430 = sadd.s32 %s429, 1
      %p433 = scmp.eq.s32.totalorder %s30, 1
      %p434 = scmp.ne.s32.totalorder %s429, %s431
      %p435 = scmp.eq.s32.totalorder %s30, 0
      %p436 = por %p434, %p435
      %p437 = scmp.ne.s32.totalorder %s429, %s431
      %p438 = scmp.eq.s32.totalorder %s35, 1
      %p439 = por %p437, %p438
      %p440 = scmp.ne.s32.totalorder %s431, %s432
      %p441 = scmp.eq.s32.totalorder %s35, 0
      %p442 = por %p440, %p441
      %p443 = scmp.ne.s32.totalorder %s431, %s432
      %p444 = scmp.eq.s32.totalorder %s36, 1
      %p445 = por %p443, %p444
      %p447 = scmp.ne.s32.totalorder %s432, %s446
      %p448 = scmp.eq.s32.totalorder %s36, 0
      %p449 = por %p447, %p448
      %s451 = sadd.s32 %s450, 1
      %p454 = scmp.eq.s32.totalorder %s30, 1
      %p455 = scmp.ne.s32.totalorder %s450, %s452
      %p456 = scmp.eq.s32.totalorder %s30, 0
      %p457 = por %p455, %p456
      %p458 = scmp.ne.s32.totalorder %s450, %s452
      %p459 = scmp.eq.s32.totalorder %s35, 1
      %p460 = por %p458, %p459
      %p461 = scmp.ne.s32.totalorder %s452, %s453
      %p462 = scmp.eq.s32.totalorder %s35, 0
      %p463 = por %p461, %p462
      %p464 = scmp.ne.s32.totalorder %s452, %s453
      %p465 = scmp.eq.s32.totalorder %s36, 1
      %p466 = por %p464, %p465
      %p468 = scmp.ne.s32.totalorder %s453, %s467
      %p469 = scmp.eq.s32.totalorder %s36, 0
      %p470 = por %p468, %p469
      %s472 = sadd.s32 %s471, 1
      %p475 = scmp.eq.s32.totalorder %s30, 1
      %p476 = scmp.ne.s32.totalorder %s471, %s473
      %p477 = scmp.eq.s32.totalorder %s30, 0
      %p478 = por %p476, %p477
      %p479 = scmp.ne.s32.totalorder %s471, %s473
      %p480 = scmp.eq.s32.totalorder %s35, 1
      %p481 = por %p479, %p480
      %p482 = scmp.ne.s32.totalorder %s473, %s474
      %p483 = scmp.eq.s32.totalorder %s35, 0
      %p484 = por %p482, %p483
      %p485 = scmp.ne.s32.totalorder %s473, %s474
      %p486 = scmp.eq.s32.totalorder %s36, 1
      %p487 = por %p485, %p486
      %p489 = scmp.ne.s32.totalorder %s474, %s488
      %p490 = scmp.eq.s32.totalorder %s36, 0
      %p491 = por %p489, %p490
      %s493 = sadd.s32 %s492, 1
      %p496 = scmp.eq.s32.totalorder %s30, 1
      %p497 = scmp.ne.s32.totalorder %s492, %s494
      %p498 = scmp.eq.s32.totalorder %s30, 0
      %p499 = por %p497, %p498
      %p500 = scmp.ne.s32.totalorder %s492, %s494
      %p501 = scmp.eq.s32.totalorder %s35, 1
      %p502 = por %p500, %p501
      %p503 = scmp.ne.s32.totalorder %s494, %s495
      %p504 = scmp.eq.s32.totalorder %s35, 0
      %p505 = por %p503, %p504
      %p506 = scmp.ne.s32.totalorder %s494, %s495
      %p507 = scmp.eq.s32.totalorder %s36, 1
      %p508 = por %p506, %p507
      %p510 = scmp.ne.s32.totalorder %s495, %s509
      %p511 = scmp.eq.s32.totalorder %s36, 0
      %p512 = por %p510, %p511
      %s514 = sadd.s32 %s513, 1
      %p517 = scmp.eq.s32.totalorder %s30, 1
      %p518 = scmp.ne.s32.totalorder %s513, %s515
      %p519 = scmp.eq.s32.totalorder %s30, 0
      %p520 = por %p518, %p519
      %p521 = scmp.ne.s32.totalorder %s513, %s515
      %p522 = scmp.eq.s32.totalorder %s35, 1
      %p523 = por %p521, %p522
      %p524 = scmp.ne.s32.totalorder %s515, %s516
      %p525 = scmp.eq.s32.totalorder %s35, 0
      %p526 = por %p524, %p525
      %p527 = scmp.ne.s32.totalorder %s515, %s516
      %p528 = scmp.eq.s32.totalorder %s36, 1
      %p529 = por %p527, %p528
      %p531 = scmp.ne.s32.totalorder %s516, %s530
      %p532 = scmp.eq.s32.totalorder %s36, 0
      %p533 = por %p531, %p532
      %p534 = scmp.le.s32.totalorder 1, %s30
      %p535 = scmp.lt.s32.totalorder %s30, 3
      %p536 = pnand %p534, %p535
      %p537 = pneg %p536
      // Predicated region
      $region9: #{tpu_custom_call.1} parent=5 // pred_check
        _
      $region10: #{tpu_custom_call.1} parent=5 // pred_check_branch
        %539 = sbr.rel (%p536) target = $region12
      $region11: #{tpu_custom_call.1} parent=5 // pred_region
        %s540 = ssub.s32 %s30, 1
        // Predicated region
        $region13: #{tpu_custom_call.1} parent=11 // pred_check
          %p541 = pneg %p51
        $region14: #{tpu_custom_call.1} parent=11 // pred_check_branch
          %543 = sbr.rel (%p541) target = $region16
        $region15: #{tpu_custom_call.1} parent=11 // pred_region
          %s545 = ssub.s32 64, 64
          %546 = vsyncadd [#allocation4], %s545
          %s548 = sshll.u32 [#allocation3], 4
          %s549 = int_to_ptr.vmem [resolvable:$true] %s548
          %551 = dma.hbm_to_vmem [thread:$0]  %s0, 64, %s549, [#allocation4]
        $region16: #{tpu_custom_call.1} parent=11 // pred_fallthru
          _
        // Predicated region
        $region17: #{tpu_custom_call.1} parent=11 // pred_check
          %p552 = pneg %p72
        $region18: #{tpu_custom_call.1} parent=11 // pred_check_branch
          %554 = sbr.rel (%p552) target = $region20
        $region19: #{tpu_custom_call.1} parent=11 // pred_region
          %s556 = ssub.s32 64, 64
          %557 = vsyncadd [#allocation7], %s556
          %s559 = sshll.u32 [#allocation6], 4
          %s560 = int_to_ptr.vmem [resolvable:$true] %s559
          %562 = dma.hbm_to_vmem [thread:$0]  %s1, 64, %s560, [#allocation7]
        $region20: #{tpu_custom_call.1} parent=11 // pred_fallthru
          _
        // Predicated region
        $region21: #{tpu_custom_call.1} parent=11 // pred_check
          %p563 = pneg %p93
        $region22: #{tpu_custom_call.1} parent=11 // pred_check_branch
          %565 = sbr.rel (%p563) target = $region24
        $region23: #{tpu_custom_call.1} parent=11 // pred_region
          _
        $region24: #{tpu_custom_call.1} parent=11 // pred_fallthru
          _
        // Predicated region
        $region25: #{tpu_custom_call.1} parent=11 // pred_check
          %p566 = pneg %p114
        $region26: #{tpu_custom_call.1} parent=11 // pred_check_branch
          %568 = sbr.rel (%p566) target = $region28
        $region27: #{tpu_custom_call.1} parent=11 // pred_region
          %s570 = ssub.s32 2048, 2048
          %571 = vsyncadd [#allocation7], %s570
          %s572 = sshll.u32 [#allocation8], 4
          %s573 = int_to_ptr.vmem [resolvable:$true] %s572
          %578 = dma.hbm_to_vmem [thread:$0]  %s3, 2048, %s573, [#allocation7], 128, 128, 8
        $region28: #{tpu_custom_call.1} parent=11 // pred_fallthru
          _
        // Predicated region
        $region29: #{tpu_custom_call.1} parent=11 // pred_check
          %p579 = pneg %p135
        $region30: #{tpu_custom_call.1} parent=11 // pred_check_branch
          %581 = sbr.rel (%p579) target = $region32
        $region31: #{tpu_custom_call.1} parent=11 // pred_region
          %s583 = ssub.s32 16, 16
          %584 = vsyncadd [#allocation10], %s583
          %s586 = sshll.u32 [#allocation9], 4
          %s587 = int_to_ptr.vmem [resolvable:$true] %s586
          %589 = dma.hbm_to_vmem [thread:$0]  %s4, 16, %s587, [#allocation10]
        $region32: #{tpu_custom_call.1} parent=11 // pred_fallthru
          _
        // Predicated region
        $region33: #{tpu_custom_call.1} parent=11 // pred_check
          %p590 = pneg %p442
        $region34: #{tpu_custom_call.1} parent=11 // pred_check_branch
          %592 = sbr.rel (%p590) target = $region36
        $region35: #{tpu_custom_call.1} parent=11 // pred_region
          _
        $region36: #{tpu_custom_call.1} parent=11 // pred_fallthru
          _
        // Predicated region
        $region37: #{tpu_custom_call.1} parent=11 // pred_check
          %p593 = pneg %p463
        $region38: #{tpu_custom_call.1} parent=11 // pred_check_branch
          %595 = sbr.rel (%p593) target = $region40
        $region39: #{tpu_custom_call.1} parent=11 // pred_region
          _
        $region40: #{tpu_custom_call.1} parent=11 // pred_fallthru
          _
        // Predicated region
        $region41: #{tpu_custom_call.1} parent=11 // pred_check
          %p596 = pneg %p484
        $region42: #{tpu_custom_call.1} parent=11 // pred_check_branch
          %598 = sbr.rel (%p596) target = $region44
        $region43: #{tpu_custom_call.1} parent=11 // pred_region
          %s600 = ssub.s32 2048, 2048
          %601 = vsyncadd [#allocation7], %s600
          %s602 = sshll.u32 [#allocation15], 4
          %s603 = int_to_ptr.vmem [resolvable:$true] %s602
          %608 = dma.hbm_to_vmem [thread:$0]  %s18, 2048, %s603, [#allocation7], 128, 128, 8
        $region44: #{tpu_custom_call.1} parent=11 // pred_fallthru
          _
        // Predicated region
        $region45: #{tpu_custom_call.1} parent=11 // pred_check
          %p609 = pneg %p505
        $region46: #{tpu_custom_call.1} parent=11 // pred_check_branch
          %611 = sbr.rel (%p609) target = $region48
        $region47: #{tpu_custom_call.1} parent=11 // pred_region
          _
        $region48: #{tpu_custom_call.1} parent=11 // pred_fallthru
          _
      $region12: #{tpu_custom_call.1} parent=5 // pred_fallthru
        _
      %p612 = scmp.lt.s32.totalorder %s30, 2
      // Predicated region
      $region49: #{tpu_custom_call.1} parent=5 // pred_check
        %p613 = pneg %p612
      $region50: #{tpu_custom_call.1} parent=5 // pred_check_branch
        %615 = sbr.rel (%p613) target = $region52
      $region51: #{tpu_custom_call.1} parent=5 // pred_region
        // Predicated region
        $region53: #{tpu_custom_call.1} parent=51 // pred_check
          %p616 = pneg %p155
        $region54: #{tpu_custom_call.1} parent=51 // pred_check_branch
          %618 = sbr.rel (%p616) target = $region56
        $region55: #{tpu_custom_call.1} parent=51 // pred_region
          %p619 = scmp.lt.s32.totalorder %s30, 1
          %s620 = scalar_select %p619, %s30, 1
          %s621 = scalar_lea.vmem %s5, %s620
        $region56: #{tpu_custom_call.1} parent=51 // pred_fallthru
          _
        // Predicated region
        $region57: #{tpu_custom_call.1} parent=51 // pred_check
          %p622 = pneg %p181
        $region58: #{tpu_custom_call.1} parent=51 // pred_check_branch
          %624 = sbr.rel (%p622) target = $region60
        $region59: #{tpu_custom_call.1} parent=51 // pred_region
          %p625 = scmp.lt.s32.totalorder %s30, 1
          %s626 = scalar_select %p625, %s30, 1
          %s627 = scalar_lea.vmem %s6, %s626
        $region60: #{tpu_custom_call.1} parent=51 // pred_fallthru
          _
        // Predicated region
        $region61: #{tpu_custom_call.1} parent=51 // pred_check
          %p628 = pneg %p207
        $region62: #{tpu_custom_call.1} parent=51 // pred_check_branch
          %630 = sbr.rel (%p628) target = $region64
        $region63: #{tpu_custom_call.1} parent=51 // pred_region
          %s631 = sand.u32 %s30, 1
          %s632 = scalar_lea.sflag [#allocation4], %s631
          %s633 = sand.u32 %s197, 1
          %s634 = smul.addr %s633, 384
          %s635 = scalar_lea.vmem [#allocation11], %s634
          %s637 = ssub.s32 6144, 6144
          %638 = vsyncadd %s632, %s637
          %s639 = smul.addr %s30, 48
          %s640 = smul.addr %s639, 128
          %s641 = scalar_lea.hbm %s7, %s640
          %s642 = sshll.u32 %s635, 4
          %s643 = int_to_ptr.vmem [resolvable:$true] %s642
          %648 = dma.hbm_to_vmem [thread:$0]  %s641, 6144, %s643, %s632, 384, 384, 24
        $region64: #{tpu_custom_call.1} parent=51 // pred_fallthru
          _
        // Predicated region
        $region65: #{tpu_custom_call.1} parent=51 // pred_check
          %p649 = pneg %p233
        $region66: #{tpu_custom_call.1} parent=51 // pred_check_branch
          %651 = sbr.rel (%p649) target = $region68
        $region67: #{tpu_custom_call.1} parent=51 // pred_region
          %s652 = sand.u32 %s30, 1
          %s653 = scalar_lea.sflag [#allocation4], %s652
          %s654 = sand.u32 %s223, 1
          %s655 = smul.addr %s654, 128
          %s656 = scalar_lea.vmem [#allocation12], %s655
          %s658 = ssub.s32 2048, 2048
          %659 = vsyncadd %s653, %s658
          %s660 = smul.addr %s30, 16
          %s661 = smul.addr %s660, 128
          %s662 = scalar_lea.hbm %s8, %s661
          %s663 = sshll.u32 %s656, 4
          %s664 = int_to_ptr.vmem [resolvable:$true] %s663
          %669 = dma.hbm_to_vmem [thread:$0]  %s662, 2048, %s664, %s653, 128, 128, 8
        $region68: #{tpu_custom_call.1} parent=51 // pred_fallthru
          _
        // Predicated region
        $region69: #{tpu_custom_call.1} parent=51 // pred_check
          %p670 = pneg %p259
        $region70: #{tpu_custom_call.1} parent=51 // pred_check_branch
          %672 = sbr.rel (%p670) target = $region72
        $region71: #{tpu_custom_call.1} parent=51 // pred_region
          %p673 = scmp.lt.s32.totalorder %s30, 1
          %s674 = scalar_select %p673, %s30, 1
          %s675 = scalar_lea.vmem %s9, %s674
        $region72: #{tpu_custom_call.1} parent=51 // pred_fallthru
          _
        // Predicated region
        $region73: #{tpu_custom_call.1} parent=51 // pred_check
          %p676 = pneg %p285
        $region74: #{tpu_custom_call.1} parent=51 // pred_check_branch
          %678 = sbr.rel (%p676) target = $region76
        $region75: #{tpu_custom_call.1} parent=51 // pred_region
          %p679 = scmp.lt.s32.totalorder %s30, 1
          %s680 = scalar_select %p679, %s30, 1
          %s681 = scalar_lea.vmem %s10, %s680
        $region76: #{tpu_custom_call.1} parent=51 // pred_fallthru
          _
        // Predicated region
        $region77: #{tpu_custom_call.1} parent=51 // pred_check
          %p682 = pneg %p311
        $region78: #{tpu_custom_call.1} parent=51 // pred_check_branch
          %684 = sbr.rel (%p682) target = $region80
        $region79: #{tpu_custom_call.1} parent=51 // pred_region
          %p685 = scmp.lt.s32.totalorder %s30, 1
          %s686 = scalar_select %p685, %s30, 1
          %s687 = scalar_lea.vmem %s11, %s686
        $region80: #{tpu_custom_call.1} parent=51 // pred_fallthru
          _
        // Predicated region
        $region81: #{tpu_custom_call.1} parent=51 // pred_check
          %p688 = pneg %p337
        $region82: #{tpu_custom_call.1} parent=51 // pred_check_branch
          %690 = sbr.rel (%p688) target = $region84
        $region83: #{tpu_custom_call.1} parent=51 // pred_region
          %s691 = sand.u32 %s30, 1
          %s692 = scalar_lea.sflag [#allocation4], %s691
          %s693 = sand.u32 %s327, 1
          %s694 = smul.addr %s693, 512
          %s695 = scalar_lea.vmem [#allocation13], %s694
          %s697 = ssub.s32 8192, 8192
          %698 = vsyncadd %s692, %s697
          %s699 = smul.addr %s30, 64
          %s700 = smul.addr %s699, 128
          %s701 = scalar_lea.hbm %s12, %s700
          %s702 = sshll.u32 %s695, 4
          %s703 = int_to_ptr.vmem [resolvable:$true] %s702
          %708 = dma.hbm_to_vmem [thread:$0]  %s701, 8192, %s703, %s692, 512, 512, 32
        $region84: #{tpu_custom_call.1} parent=51 // pred_fallthru
          _
        // Predicated region
        $region85: #{tpu_custom_call.1} parent=51 // pred_check
          %p709 = pneg %p363
        $region86: #{tpu_custom_call.1} parent=51 // pred_check_branch
          %711 = sbr.rel (%p709) target = $region88
        $region87: #{tpu_custom_call.1} parent=51 // pred_region
          %p712 = scmp.lt.s32.totalorder %s30, 1
          %s713 = scalar_select %p712, %s30, 1
          %s714 = smul.addr %s713, 4
          %s715 = scalar_lea.vmem %s13, %s714
        $region88: #{tpu_custom_call.1} parent=51 // pred_fallthru
          _
        // Predicated region
        $region89: #{tpu_custom_call.1} parent=51 // pred_check
          %p716 = pneg %p389
        $region90: #{tpu_custom_call.1} parent=51 // pred_check_branch
          %718 = sbr.rel (%p716) target = $region92
        $region91: #{tpu_custom_call.1} parent=51 // pred_region
          %s719 = sand.u32 %s30, 1
          %s720 = scalar_lea.sflag [#allocation4], %s719
          %s721 = sand.u32 %s379, 1
          %s722 = smul.addr %s721, 512
          %s723 = scalar_lea.vmem [#allocation14], %s722
          %s725 = ssub.s32 8192, 8192
          %726 = vsyncadd %s720, %s725
          %s727 = smul.addr %s30, 64
          %s728 = smul.addr %s727, 128
          %s729 = scalar_lea.hbm %s14, %s728
          %s730 = sshll.u32 %s723, 4
          %s731 = int_to_ptr.vmem [resolvable:$true] %s730
          %736 = dma.hbm_to_vmem [thread:$0]  %s729, 8192, %s731, %s720, 128, 128, 8
        $region92: #{tpu_custom_call.1} parent=51 // pred_fallthru
          _
        // Predicated region
        $region93: #{tpu_custom_call.1} parent=51 // pred_check
          %p737 = pneg %p415
        $region94: #{tpu_custom_call.1} parent=51 // pred_check_branch
          %739 = sbr.rel (%p737) target = $region96
        $region95: #{tpu_custom_call.1} parent=51 // pred_region
          %p740 = scmp.lt.s32.totalorder %s30, 1
          %s741 = scalar_select %p740, %s30, 1
          %s742 = scalar_lea.vmem %s15, %s741
        $region96: #{tpu_custom_call.1} parent=51 // pred_fallthru
          _
      $region52: #{tpu_custom_call.1} parent=5 // pred_fallthru
        _
      %p743 = scmp.le.s32.totalorder 1, %s30
      %p744 = scmp.lt.s32.totalorder %s30, 3
      %p745 = pnand %p743, %p744
      %p746 = pneg %p745
      // Predicated region
      $region97: #{tpu_custom_call.1} parent=5 // pred_check
        _
      $region98: #{tpu_custom_call.1} parent=5 // pred_check_branch
        %748 = sbr.rel (%p745) target = $region100
      $region99: #{tpu_custom_call.1} parent=5 // pred_region
        %s749 = ssub.s32 %s30, 1
        // Predicated region
        $region101: #{tpu_custom_call.1} parent=99 // pred_check
          %p750 = pneg %p51
        $region102: #{tpu_custom_call.1} parent=99 // pred_check_branch
          %752 = sbr.rel (%p750) target = $region104
        $region103: #{tpu_custom_call.1} parent=99 // pred_region
          %753 = dma.done [#allocation4], 64
        $region104: #{tpu_custom_call.1} parent=99 // pred_fallthru
          _
        // Predicated region
        $region105: #{tpu_custom_call.1} parent=99 // pred_check
          %p754 = pneg %p72
        $region106: #{tpu_custom_call.1} parent=99 // pred_check_branch
          %756 = sbr.rel (%p754) target = $region108
        $region107: #{tpu_custom_call.1} parent=99 // pred_region
          %757 = dma.done [#allocation7], 64
        $region108: #{tpu_custom_call.1} parent=99 // pred_fallthru
          _
        // Predicated region
        $region109: #{tpu_custom_call.1} parent=99 // pred_check
          %p758 = pneg %p114
        $region110: #{tpu_custom_call.1} parent=99 // pred_check_branch
          %760 = sbr.rel (%p758) target = $region112
        $region111: #{tpu_custom_call.1} parent=99 // pred_region
          %761 = dma.done [#allocation7], 2048
        $region112: #{tpu_custom_call.1} parent=99 // pred_fallthru
          _
        // Predicated region
        $region113: #{tpu_custom_call.1} parent=99 // pred_check
          %p762 = pneg %p135
        $region114: #{tpu_custom_call.1} parent=99 // pred_check_branch
          %764 = sbr.rel (%p762) target = $region116
        $region115: #{tpu_custom_call.1} parent=99 // pred_region
          %765 = dma.done [#allocation10], 16
        $region116: #{tpu_custom_call.1} parent=99 // pred_fallthru
          _
        %s766 = sand.u32 %s35, 1
        %s767 = scalar_lea.sflag [#allocation4], %s766
        %s768 = sand.u32 %s200, 1
        %s769 = smul.addr %s768, 384
        %s770 = scalar_lea.vmem [#allocation11], %s769
        // Predicated region
        $region117: #{tpu_custom_call.1} parent=99 // pred_check
          %p771 = pneg %p213
        $region118: #{tpu_custom_call.1} parent=99 // pred_check_branch
          %773 = sbr.rel (%p771) target = $region120
        $region119: #{tpu_custom_call.1} parent=99 // pred_region
          %774 = dma.done %s767, 6144
        $region120: #{tpu_custom_call.1} parent=99 // pred_fallthru
          _
        %s775 = sand.u32 %s35, 1
        %s776 = scalar_lea.sflag [#allocation4], %s775
        %s777 = sand.u32 %s226, 1
        %s778 = smul.addr %s777, 128
        %s779 = scalar_lea.vmem [#allocation12], %s778
        // Predicated region
        $region121: #{tpu_custom_call.1} parent=99 // pred_check
          %p780 = pneg %p239
        $region122: #{tpu_custom_call.1} parent=99 // pred_check_branch
          %782 = sbr.rel (%p780) target = $region124
        $region123: #{tpu_custom_call.1} parent=99 // pred_region
          %783 = dma.done %s776, 2048
        $region124: #{tpu_custom_call.1} parent=99 // pred_fallthru
          _
        %s784 = sand.u32 %s35, 1
        %s785 = scalar_lea.sflag [#allocation4], %s784
        %s786 = sand.u32 %s330, 1
        %s787 = smul.addr %s786, 512
        %s788 = scalar_lea.vmem [#allocation13], %s787
        // Predicated region
        $region125: #{tpu_custom_call.1} parent=99 // pred_check
          %p789 = pneg %p343
        $region126: #{tpu_custom_call.1} parent=99 // pred_check_branch
          %791 = sbr.rel (%p789) target = $region128
        $region127: #{tpu_custom_call.1} parent=99 // pred_region
          %792 = dma.done %s785, 8192
        $region128: #{tpu_custom_call.1} parent=99 // pred_fallthru
          _
        %s793 = sand.u32 %s35, 1
        %s794 = scalar_lea.sflag [#allocation4], %s793
        %s795 = sand.u32 %s382, 1
        %s796 = smul.addr %s795, 512
        %s797 = scalar_lea.vmem [#allocation14], %s796
        // Predicated region
        $region129: #{tpu_custom_call.1} parent=99 // pred_check
          %p798 = pneg %p395
        $region130: #{tpu_custom_call.1} parent=99 // pred_check_branch
          %800 = sbr.rel (%p798) target = $region132
        $region131: #{tpu_custom_call.1} parent=99 // pred_region
          %801 = dma.done %s794, 8192
        $region132: #{tpu_custom_call.1} parent=99 // pred_fallthru
          _
        // Predicated region
        $region133: #{tpu_custom_call.1} parent=99 // pred_check
          %p802 = pneg %p484
        $region134: #{tpu_custom_call.1} parent=99 // pred_check_branch
          %804 = sbr.rel (%p802) target = $region136
        $region135: #{tpu_custom_call.1} parent=99 // pred_region
          %805 = dma.done [#allocation7], 2048
        $region136: #{tpu_custom_call.1} parent=99 // pred_fallthru
          _
        %p806 = pneg %p51
        %p807 = pneg %p48
        %p808 = pneg %p72
        %p809 = pneg %p69
        %p810 = pneg %p93
        %p811 = pneg %p90
        %p812 = pneg %p114
        %p813 = pneg %p111
        %p814 = pneg %p135
        %p815 = pneg %p132
        %p816 = scmp.lt.s32.totalorder %s35, 1
        %s817 = scalar_select %p816, %s35, 1
        %s818 = scalar_lea.vmem %s5, %s817
        %p819 = pneg %p161
        %p820 = pneg %p158
        %p821 = scmp.lt.s32.totalorder %s35, 1
        %s822 = scalar_select %p821, %s35, 1
        %s823 = scalar_lea.vmem %s6, %s822
        %p824 = pneg %p187
        %p825 = pneg %p184
        %s826 = sand.u32 %s35, 1
        %s827 = scalar_lea.sflag [#allocation4], %s826
        %s828 = sand.u32 %s200, 1
        %s829 = smul.addr %s828, 384
        %s830 = scalar_lea.vmem [#allocation11], %s829
        %p831 = pneg %p213
        %p832 = pneg %p210
        %s833 = sand.u32 %s35, 1
        %s834 = scalar_lea.sflag [#allocation4], %s833
        %s835 = sand.u32 %s226, 1
        %s836 = smul.addr %s835, 128
        %s837 = scalar_lea.vmem [#allocation12], %s836
        %p838 = pneg %p239
        %p839 = pneg %p236
        %p840 = scmp.lt.s32.totalorder %s35, 1
        %s841 = scalar_select %p840, %s35, 1
        %s842 = scalar_lea.vmem %s9, %s841
        %p843 = pneg %p265
        %p844 = pneg %p262
        %p845 = scmp.lt.s32.totalorder %s35, 1
        %s846 = scalar_select %p845, %s35, 1
        %s847 = scalar_lea.vmem %s10, %s846
        %p848 = pneg %p291
        %p849 = pneg %p288
        %p850 = scmp.lt.s32.totalorder %s35, 1
        %s851 = scalar_select %p850, %s35, 1
        %s852 = scalar_lea.vmem %s11, %s851
        %p853 = pneg %p317
        %p854 = pneg %p314
        %s855 = sand.u32 %s35, 1
        %s856 = scalar_lea.sflag [#allocation4], %s855
        %s857 = sand.u32 %s330, 1
        %s858 = smul.addr %s857, 512
        %s859 = scalar_lea.vmem [#allocation13], %s858
        %p860 = pneg %p343
        %p861 = pneg %p340
        %p862 = scmp.lt.s32.totalorder %s35, 1
        %s863 = scalar_select %p862, %s35, 1
        %s864 = smul.addr %s863, 4
        %s865 = scalar_lea.vmem %s13, %s864
        %p866 = pneg %p369
        %p867 = pneg %p366
        %s868 = sand.u32 %s35, 1
        %s869 = scalar_lea.sflag [#allocation4], %s868
        %s870 = sand.u32 %s382, 1
        %s871 = smul.addr %s870, 512
        %s872 = scalar_lea.vmem [#allocation14], %s871
        %p873 = pneg %p395
        %p874 = pneg %p392
        %p875 = scmp.lt.s32.totalorder %s35, 1
        %s876 = scalar_select %p875, %s35, 1
        %s877 = scalar_lea.vmem %s15, %s876
        %p878 = pneg %p421
        %p879 = pneg %p418
        %p880 = pneg %p442
        %p881 = pneg %p439
        %p882 = pneg %p463
        %p883 = pneg %p460
        %p884 = pneg %p484
        %p885 = pneg %p481
        %p886 = pneg %p505
        %p887 = pneg %p502
        %p888 = pneg %p526
        %p889 = pneg %p523
        %p890 = scmp.lt.s32.totalorder %s35, 1
        %s891 = scalar_select %p890, %s35, 1
        %s892 = scalar_lea.vmem %s5, %s891
        %p893 = scmp.lt.s32.totalorder %s35, 1
        %s894 = scalar_select %p893, %s35, 1
        %s895 = scalar_lea.vmem %s6, %s894
        %p896 = scmp.lt.s32.totalorder %s35, 1
        %s897 = scalar_select %p896, %s35, 1
        %s898 = scalar_lea.vmem %s9, %s897
        %p899 = scmp.lt.s32.totalorder %s35, 1
        %s900 = scalar_select %p899, %s35, 1
        %s901 = scalar_lea.vmem %s10, %s900
        %p902 = scmp.lt.s32.totalorder %s35, 1
        %s903 = scalar_select %p902, %s35, 1
        %s904 = scalar_lea.vmem %s11, %s903
        %p905 = scmp.lt.s32.totalorder %s35, 1
        %s906 = scalar_select %p905, %s35, 1
        %s907 = smul.addr %s906, 4
        %s908 = scalar_lea.vmem %s13, %s907
        %p909 = scmp.lt.s32.totalorder %s35, 1
        %s910 = scalar_select %p909, %s35, 1
        %s911 = scalar_lea.vmem %s15, %s910
        %p912 = scmp.eq.s32.totalorder %s35, 0
        // Predicated region
        $region137: #{tpu_custom_call.1} parent=99 // pred_check
          %p913 = pneg %p912
        $region138: #{tpu_custom_call.1} parent=99 // pred_check_branch
          %915 = sbr.rel (%p913) target = $region140
        $region139: #{tpu_custom_call.1} parent=99 // pred_region
          %v916 = vld [vmem:[#allocation3] sm:$0xf]
          %v917 = vld [vmem:[#allocation8] sm:$0xff]
          %v918 = vld [vmem:[#allocation8 + $0x8] sm:$0xff]
          %v919 = vld [vmem:[#allocation8 + $0x10] sm:$0xff]
          %v920 = vld [vmem:[#allocation8 + $0x18] sm:$0xff]
          %v921 = vld [vmem:[#allocation8 + $0x20] sm:$0xff]
          %v922 = vld [vmem:[#allocation8 + $0x28] sm:$0xff]
          %v923 = vld [vmem:[#allocation8 + $0x30] sm:$0xff]
          %v924 = vld [vmem:[#allocation8 + $0x38] sm:$0xff]
          %v925 = vld [vmem:[#allocation8 + $0x40] sm:$0xff]
          %v926 = vld [vmem:[#allocation8 + $0x48] sm:$0xff]
          %v927 = vld [vmem:[#allocation8 + $0x50] sm:$0xff]
          %v928 = vld [vmem:[#allocation8 + $0x58] sm:$0xff]
          %v929 = vld [vmem:[#allocation8 + $0x60] sm:$0xff]
          %v930 = vld [vmem:[#allocation8 + $0x68] sm:$0xff]
          %v931 = vld [vmem:[#allocation8 + $0x70] sm:$0xff]
          %v932 = vld [vmem:[#allocation8 + $0x78] sm:$0xff]
          %v933 = vld [vmem:[#allocation9] sm:$0x1]
          %v935 = vlaneseq
          %v936 = vshrl.u32 %v935, 7
          %v937 = vsub.s32 0, %v936
          %v938 = vrot.slane %v933, %v937
          %940 = vmatprep.subr.mxu0 0.0
          %941 = vmatpush1.msra.mxu0 %v917
          %942 = vmatprep.subr.mxu0 0.0
          %943 = vmatpush1.msra.mxu0 %v918
          %944 = vmatprep.subr.mxu0 0.0
          %945 = vmatpush1.msra.mxu0 %v919
          %946 = vmatprep.subr.mxu0 0.0
          %947 = vmatpush1.msra.mxu0 %v920
          %948 = vmatprep.subr.mxu0 0.0
          %949 = vmatpush1.msra.mxu0 %v921
          %950 = vmatprep.subr.mxu0 0.0
          %951 = vmatpush1.msra.mxu0 %v922
          %952 = vmatprep.subr.mxu0 0.0
          %953 = vmatpush1.msra.mxu0 %v923
          %954 = vmatprep.subr.mxu0 0.0
          %955 = vmatpush1.msra.mxu0 %v924
          %956 = vmatprep.subr.mxu0 0.0
          %957 = vmatpush1.msra.mxu0 %v925
          %958 = vmatprep.subr.mxu0 0.0
          %959 = vmatpush1.msra.mxu0 %v926
          %960 = vmatprep.subr.mxu0 0.0
          %961 = vmatpush1.msra.mxu0 %v927
          %962 = vmatprep.subr.mxu0 0.0
          %963 = vmatpush1.msra.mxu0 %v928
          %964 = vmatprep.subr.mxu0 0.0
          %965 = vmatpush1.msra.mxu0 %v929
          %966 = vmatprep.subr.mxu0 0.0
          %967 = vmatpush1.msra.mxu0 %v930
          %968 = vmatprep.subr.mxu0 0.0
          %969 = vmatpush1.msra.mxu0 %v931
          %970 = vmatprep.subr.mxu0 0.0
          %971 = vmatpush1.msra.mxu0 %v932
          %972 = vmatprep.subr.mxu0 0.0
          %973 = vmatpush1.msra.mxu0 0.0
          %974 = vmatprep.subr.mxu0 0.0
          %975 = vmatpush1.msra.mxu0 0.0
          %976 = vmatprep.subr.mxu0 0.0
          %977 = vmatpush1.msra.mxu0 0.0
          %978 = vmatprep.subr.mxu0 0.0
          %979 = vmatpush1.msra.mxu0 0.0
          %980 = vmatprep.subr.mxu0 0.0
          %981 = vmatpush1.msra.mxu0 0.0
          %982 = vmatprep.subr.mxu0 0.0
          %983 = vmatpush1.msra.mxu0 0.0
          %984 = vmatprep.subr.mxu0 0.0
          %985 = vmatpush1.msra.mxu0 0.0
          %986 = vmatprep.subr.mxu0 0.0
          %987 = vmatpush1.msra.mxu0 0.0
          %988 = vmatprep.subr.mxu0 0.0
          %989 = vmatpush1.msra.mxu0 0.0
          %990 = vmatprep.subr.mxu0 0.0
          %991 = vmatpush1.msra.mxu0 0.0
          %992 = vmatprep.subr.mxu0 0.0
          %993 = vmatpush1.msra.mxu0 0.0
          %994 = vmatprep.subr.mxu0 0.0
          %995 = vmatpush1.msra.mxu0 0.0
          %996 = vmatprep.subr.mxu0 0.0
          %997 = vmatpush1.msra.mxu0 0.0
          %998 = vmatprep.subr.mxu0 0.0
          %999 = vmatpush1.msra.mxu0 0.0
          %1000 = vmatprep.subr.mxu0 0.0
          %1001 = vmatpush1.msra.mxu0 0.0
          %1002 = vmatprep.subr.mxu0 0.0
          %1003 = vmatpush1.msra.mxu0 0.0
          %1004 = vmatprep.mubr.f32.mxu0 0.0
          %1005 = vmatmul.mubr.f32.gmra.mrb[0].mxu0 %v916
          %v1006 = vpop.f32.mrb[0].mxu0
          %v1007 = vadd.f32 %v938, %v1006
          %v1008 = vpop.f32.mrb[0].mxu0
          %1009 = vdwg.mxu0
          %v1010 = vld [vmem:[%s2] sm:$0xf]
          %v1011 = vadd.f32 %v1007, %v1010
          %1012 = vst [vmem:[#allocation2] sm:$0xf] %v1011
        $region140: #{tpu_custom_call.1} parent=99 // pred_fallthru
          _
        %v1013 = vld [vmem:[#allocation2] sm:$0xf]
        %v1014 = vld [vmem:[#allocation6] sm:$0xf]
        %v1015 = vld [vmem:[%s892] sm:$0x1]
        %v1016 = vld [vmem:[%s895] sm:$0x1]
        %v1017 = vld [vmem:[%s770] sm:$0xff]
        %v1018 = vld [vmem:[%s770 + $0x8] sm:$0xff]
        %v1019 = vld [vmem:[%s770 + $0x10] sm:$0xff]
        %v1020 = vld [vmem:[%s770 + $0x18] sm:$0xff]
        %v1021 = vld [vmem:[%s770 + $0x20] sm:$0xff]
        %v1022 = vld [vmem:[%s770 + $0x28] sm:$0xff]
        %v1023 = vld [vmem:[%s770 + $0x30] sm:$0xff]
        %v1024 = vld [vmem:[%s770 + $0x38] sm:$0xff]
        %v1025 = vld [vmem:[%s770 + $0x40] sm:$0xff]
        %v1026 = vld [vmem:[%s770 + $0x48] sm:$0xff]
        %v1027 = vld [vmem:[%s770 + $0x50] sm:$0xff]
        %v1028 = vld [vmem:[%s770 + $0x58] sm:$0xff]
        %v1029 = vld [vmem:[%s770 + $0x60] sm:$0xff]
        %v1030 = vld [vmem:[%s770 + $0x68] sm:$0xff]
        %v1031 = vld [vmem:[%s770 + $0x70] sm:$0xff]
        %v1032 = vld [vmem:[%s770 + $0x78] sm:$0xff]
        %v1033 = vld [vmem:[%s770 + $0x80] sm:$0xff]
        %v1034 = vld [vmem:[%s770 + $0x88] sm:$0xff]
        %v1035 = vld [vmem:[%s770 + $0x90] sm:$0xff]
        %v1036 = vld [vmem:[%s770 + $0x98] sm:$0xff]
        %v1037 = vld [vmem:[%s770 + $0xa0] sm:$0xff]
        %v1038 = vld [vmem:[%s770 + $0xa8] sm:$0xff]
        %v1039 = vld [vmem:[%s770 + $0xb0] sm:$0xff]
        %v1040 = vld [vmem:[%s770 + $0xb8] sm:$0xff]
        %v1041 = vld [vmem:[%s770 + $0xc0] sm:$0xff]
        %v1042 = vld [vmem:[%s770 + $0xc8] sm:$0xff]
        %v1043 = vld [vmem:[%s770 + $0xd0] sm:$0xff]
        %v1044 = vld [vmem:[%s770 + $0xd8] sm:$0xff]
        %v1045 = vld [vmem:[%s770 + $0xe0] sm:$0xff]
        %v1046 = vld [vmem:[%s770 + $0xe8] sm:$0xff]
        %v1047 = vld [vmem:[%s770 + $0xf0] sm:$0xff]
        %v1048 = vld [vmem:[%s770 + $0xf8] sm:$0xff]
        %v1049 = vld [vmem:[%s770 + $0x100] sm:$0xff]
        %v1050 = vld [vmem:[%s770 + $0x108] sm:$0xff]
        %v1051 = vld [vmem:[%s770 + $0x110] sm:$0xff]
        %v1052 = vld [vmem:[%s770 + $0x118] sm:$0xff]
        %v1053 = vld [vmem:[%s770 + $0x120] sm:$0xff]
        %v1054 = vld [vmem:[%s770 + $0x128] sm:$0xff]
        %v1055 = vld [vmem:[%s770 + $0x130] sm:$0xff]
        %v1056 = vld [vmem:[%s770 + $0x138] sm:$0xff]
        %v1057 = vld [vmem:[%s770 + $0x140] sm:$0xff]
        %v1058 = vld [vmem:[%s770 + $0x148] sm:$0xff]
        %v1059 = vld [vmem:[%s770 + $0x150] sm:$0xff]
        %v1060 = vld [vmem:[%s770 + $0x158] sm:$0xff]
        %v1061 = vld [vmem:[%s770 + $0x160] sm:$0xff]
        %v1062 = vld [vmem:[%s770 + $0x168] sm:$0xff]
        %v1063 = vld [vmem:[%s770 + $0x170] sm:$0xff]
        %v1064 = vld [vmem:[%s770 + $0x178] sm:$0xff]
        %v1065 = vld [vmem:[%s779] sm:$0xff]
        %v1066 = vld [vmem:[%s779 + $0x8] sm:$0xff]
        %v1067 = vld [vmem:[%s779 + $0x10] sm:$0xff]
        %v1068 = vld [vmem:[%s779 + $0x18] sm:$0xff]
        %v1069 = vld [vmem:[%s779 + $0x20] sm:$0xff]
        %v1070 = vld [vmem:[%s779 + $0x28] sm:$0xff]
        %v1071 = vld [vmem:[%s779 + $0x30] sm:$0xff]
        %v1072 = vld [vmem:[%s779 + $0x38] sm:$0xff]
        %v1073 = vld [vmem:[%s779 + $0x40] sm:$0xff]
        %v1074 = vld [vmem:[%s779 + $0x48] sm:$0xff]
        %v1075 = vld [vmem:[%s779 + $0x50] sm:$0xff]
        %v1076 = vld [vmem:[%s779 + $0x58] sm:$0xff]
        %v1077 = vld [vmem:[%s779 + $0x60] sm:$0xff]
        %v1078 = vld [vmem:[%s779 + $0x68] sm:$0xff]
        %v1079 = vld [vmem:[%s779 + $0x70] sm:$0xff]
        %v1080 = vld [vmem:[%s779 + $0x78] sm:$0xff]
        %v1081 = vld [vmem:[%s898] sm:$0x1]
        %v1082 = vld [vmem:[%s901] sm:$0x1]
        %v1083 = vld [vmem:[%s904] sm:$0x1]
        %v1084 = vld [vmem:[%s788] sm:$0xff]
        %v1085 = vld [vmem:[%s788 + $0x8] sm:$0xff]
        %v1086 = vld [vmem:[%s788 + $0x10] sm:$0xff]
        %v1087 = vld [vmem:[%s788 + $0x18] sm:$0xff]
        %v1088 = vld [vmem:[%s788 + $0x20] sm:$0xff]
        %v1089 = vld [vmem:[%s788 + $0x28] sm:$0xff]
        %v1090 = vld [vmem:[%s788 + $0x30] sm:$0xff]
        %v1091 = vld [vmem:[%s788 + $0x38] sm:$0xff]
        %v1092 = vld [vmem:[%s788 + $0x40] sm:$0xff]
        %v1093 = vld [vmem:[%s788 + $0x48] sm:$0xff]
        %v1094 = vld [vmem:[%s788 + $0x50] sm:$0xff]
        %v1095 = vld [vmem:[%s788 + $0x58] sm:$0xff]
        %v1096 = vld [vmem:[%s788 + $0x60] sm:$0xff]
        %v1097 = vld [vmem:[%s788 + $0x68] sm:$0xff]
        %v1098 = vld [vmem:[%s788 + $0x70] sm:$0xff]
        %v1099 = vld [vmem:[%s788 + $0x78] sm:$0xff]
        %v1100 = vld [vmem:[%s788 + $0x80] sm:$0xff]
        %v1101 = vld [vmem:[%s788 + $0x88] sm:$0xff]
        %v1102 = vld [vmem:[%s788 + $0x90] sm:$0xff]
        %v1103 = vld [vmem:[%s788 + $0x98] sm:$0xff]
        %v1104 = vld [vmem:[%s788 + $0xa0] sm:$0xff]
        %v1105 = vld [vmem:[%s788 + $0xa8] sm:$0xff]
        %v1106 = vld [vmem:[%s788 + $0xb0] sm:$0xff]
        %v1107 = vld [vmem:[%s788 + $0xb8] sm:$0xff]
        %v1108 = vld [vmem:[%s788 + $0xc0] sm:$0xff]
        %v1109 = vld [vmem:[%s788 + $0xc8] sm:$0xff]
        %v1110 = vld [vmem:[%s788 + $0xd0] sm:$0xff]
        %v1111 = vld [vmem:[%s788 + $0xd8] sm:$0xff]
        %v1112 = vld [vmem:[%s788 + $0xe0] sm:$0xff]
        %v1113 = vld [vmem:[%s788 + $0xe8] sm:$0xff]
        %v1114 = vld [vmem:[%s788 + $0xf0] sm:$0xff]
        %v1115 = vld [vmem:[%s788 + $0xf8] sm:$0xff]
        %v1116 = vld [vmem:[%s788 + $0x100] sm:$0xff]
        %v1117 = vld [vmem:[%s788 + $0x108] sm:$0xff]
        %v1118 = vld [vmem:[%s788 + $0x110] sm:$0xff]
        %v1119 = vld [vmem:[%s788 + $0x118] sm:$0xff]
        %v1120 = vld [vmem:[%s788 + $0x120] sm:$0xff]
        %v1121 = vld [vmem:[%s788 + $0x128] sm:$0xff]
        %v1122 = vld [vmem:[%s788 + $0x130] sm:$0xff]
        %v1123 = vld [vmem:[%s788 + $0x138] sm:$0xff]
        %v1124 = vld [vmem:[%s788 + $0x140] sm:$0xff]
        %v1125 = vld [vmem:[%s788 + $0x148] sm:$0xff]
        %v1126 = vld [vmem:[%s788 + $0x150] sm:$0xff]
        %v1127 = vld [vmem:[%s788 + $0x158] sm:$0xff]
        %v1128 = vld [vmem:[%s788 + $0x160] sm:$0xff]
        %v1129 = vld [vmem:[%s788 + $0x168] sm:$0xff]
        %v1130 = vld [vmem:[%s788 + $0x170] sm:$0xff]
        %v1131 = vld [vmem:[%s788 + $0x178] sm:$0xff]
        %v1132 = vld [vmem:[%s788 + $0x180] sm:$0xff]
        %v1133 = vld [vmem:[%s788 + $0x188] sm:$0xff]
        %v1134 = vld [vmem:[%s788 + $0x190] sm:$0xff]
        %v1135 = vld [vmem:[%s788 + $0x198] sm:$0xff]
        %v1136 = vld [vmem:[%s788 + $0x1a0] sm:$0xff]
        %v1137 = vld [vmem:[%s788 + $0x1a8] sm:$0xff]
        %v1138 = vld [vmem:[%s788 + $0x1b0] sm:$0xff]
        %v1139 = vld [vmem:[%s788 + $0x1b8] sm:$0xff]
        %v1140 = vld [vmem:[%s788 + $0x1c0] sm:$0xff]
        %v1141 = vld [vmem:[%s788 + $0x1c8] sm:$0xff]
        %v1142 = vld [vmem:[%s788 + $0x1d0] sm:$0xff]
        %v1143 = vld [vmem:[%s788 + $0x1d8] sm:$0xff]
        %v1144 = vld [vmem:[%s788 + $0x1e0] sm:$0xff]
        %v1145 = vld [vmem:[%s788 + $0x1e8] sm:$0xff]
        %v1146 = vld [vmem:[%s788 + $0x1f0] sm:$0xff]
        %v1147 = vld [vmem:[%s788 + $0x1f8] sm:$0xff]
        %v1148 = vld [vmem:[%s908] sm:$0xf]
        %v1149 = vld [vmem:[%s797] sm:$0xff]
        %v1150 = vld [vmem:[%s797 + $0x8] sm:$0xff]
        %v1151 = vld [vmem:[%s797 + $0x10] sm:$0xff]
        %v1152 = vld [vmem:[%s797 + $0x18] sm:$0xff]
        %v1153 = vld [vmem:[%s797 + $0x20] sm:$0xff]
        %v1154 = vld [vmem:[%s797 + $0x28] sm:$0xff]
        %v1155 = vld [vmem:[%s797 + $0x30] sm:$0xff]
        %v1156 = vld [vmem:[%s797 + $0x38] sm:$0xff]
        %v1157 = vld [vmem:[%s797 + $0x40] sm:$0xff]
        %v1158 = vld [vmem:[%s797 + $0x48] sm:$0xff]
        %v1159 = vld [vmem:[%s797 + $0x50] sm:$0xff]
        %v1160 = vld [vmem:[%s797 + $0x58] sm:$0xff]
        %v1161 = vld [vmem:[%s797 + $0x60] sm:$0xff]
        %v1162 = vld [vmem:[%s797 + $0x68] sm:$0xff]
        %v1163 = vld [vmem:[%s797 + $0x70] sm:$0xff]
        %v1164 = vld [vmem:[%s797 + $0x78] sm:$0xff]
        %v1165 = vld [vmem:[%s797 + $0x80] sm:$0xff]
        %v1166 = vld [vmem:[%s797 + $0x88] sm:$0xff]
        %v1167 = vld [vmem:[%s797 + $0x90] sm:$0xff]
        %v1168 = vld [vmem:[%s797 + $0x98] sm:$0xff]
        %v1169 = vld [vmem:[%s797 + $0xa0] sm:$0xff]
        %v1170 = vld [vmem:[%s797 + $0xa8] sm:$0xff]
        %v1171 = vld [vmem:[%s797 + $0xb0] sm:$0xff]
        %v1172 = vld [vmem:[%s797 + $0xb8] sm:$0xff]
        %v1173 = vld [vmem:[%s797 + $0xc0] sm:$0xff]
        %v1174 = vld [vmem:[%s797 + $0xc8] sm:$0xff]
        %v1175 = vld [vmem:[%s797 + $0xd0] sm:$0xff]
        %v1176 = vld [vmem:[%s797 + $0xd8] sm:$0xff]
        %v1177 = vld [vmem:[%s797 + $0xe0] sm:$0xff]
        %v1178 = vld [vmem:[%s797 + $0xe8] sm:$0xff]
        %v1179 = vld [vmem:[%s797 + $0xf0] sm:$0xff]
        %v1180 = vld [vmem:[%s797 + $0xf8] sm:$0xff]
        %v1181 = vld [vmem:[%s797 + $0x100] sm:$0xff]
        %v1182 = vld [vmem:[%s797 + $0x108] sm:$0xff]
        %v1183 = vld [vmem:[%s797 + $0x110] sm:$0xff]
        %v1184 = vld [vmem:[%s797 + $0x118] sm:$0xff]
        %v1185 = vld [vmem:[%s797 + $0x120] sm:$0xff]
        %v1186 = vld [vmem:[%s797 + $0x128] sm:$0xff]
        %v1187 = vld [vmem:[%s797 + $0x130] sm:$0xff]
        %v1188 = vld [vmem:[%s797 + $0x138] sm:$0xff]
        %v1189 = vld [vmem:[%s797 + $0x140] sm:$0xff]
        %v1190 = vld [vmem:[%s797 + $0x148] sm:$0xff]
        %v1191 = vld [vmem:[%s797 + $0x150] sm:$0xff]
        %v1192 = vld [vmem:[%s797 + $0x158] sm:$0xff]
        %v1193 = vld [vmem:[%s797 + $0x160] sm:$0xff]
        %v1194 = vld [vmem:[%s797 + $0x168] sm:$0xff]
        %v1195 = vld [vmem:[%s797 + $0x170] sm:$0xff]
        %v1196 = vld [vmem:[%s797 + $0x178] sm:$0xff]
        %v1197 = vld [vmem:[%s797 + $0x180] sm:$0xff]
        %v1198 = vld [vmem:[%s797 + $0x188] sm:$0xff]
        %v1199 = vld [vmem:[%s797 + $0x190] sm:$0xff]
        %v1200 = vld [vmem:[%s797 + $0x198] sm:$0xff]
        %v1201 = vld [vmem:[%s797 + $0x1a0] sm:$0xff]
        %v1202 = vld [vmem:[%s797 + $0x1a8] sm:$0xff]
        %v1203 = vld [vmem:[%s797 + $0x1b0] sm:$0xff]
        %v1204 = vld [vmem:[%s797 + $0x1b8] sm:$0xff]
        %v1205 = vld [vmem:[%s797 + $0x1c0] sm:$0xff]
        %v1206 = vld [vmem:[%s797 + $0x1c8] sm:$0xff]
        %v1207 = vld [vmem:[%s797 + $0x1d0] sm:$0xff]
        %v1208 = vld [vmem:[%s797 + $0x1d8] sm:$0xff]
        %v1209 = vld [vmem:[%s797 + $0x1e0] sm:$0xff]
        %v1210 = vld [vmem:[%s797 + $0x1e8] sm:$0xff]
        %v1211 = vld [vmem:[%s797 + $0x1f0] sm:$0xff]
        %v1212 = vld [vmem:[%s797 + $0x1f8] sm:$0xff]
        %v1213 = vld [vmem:[%s911] sm:$0x1]
        %vm1214 = vcmask 1043456
        %v1215 = vsel %vm1214, %v1013, 0.0
        %1216 = vadd.xlane.f32.xlu0 %v1215
        %v1217 = vpop.xlane.xlu0 %1216
        %v1218 = vrcp.pop 128.0
        %v1219 = vmul.f32 %v1217, %v1218
        %v1220 = vsub.f32 %v1013, %v1219
        %v1221 = vmul.f32 %v1220, %v1220
        %v1222 = vsel %vm1214, %v1221, 0.0
        %1223 = vadd.xlane.f32.xlu0 %v1222
        %v1224 = vpop.xlane.xlu0 %1223
        %v1225 = vmul.f32 %v1224, %v1218
        %v1226 = vadd.f32 %v1225, 1e-05
        %v1227 = vrsqrt.pop %v1226
        %v1228 = vmul.f32 %v1220, %v1227
        %v1230 = vlaneseq
        %v1231 = vshrl.u32 %v1230, 7
        %v1232 = vsub.s32 0, %v1231
        %v1233 = vrot.slane %v1015, %v1232
        %v1235 = vmul.f32 %v1228, %v1233
        %v1237 = vlaneseq
        %v1238 = vshrl.u32 %v1237, 7
        %v1239 = vsub.s32 0, %v1238
        %v1240 = vrot.slane %v1016, %v1239
        %v1242 = vadd.f32 %v1235, %v1240
        %1243 = vmatprep.subr.mxu0 %v1018
        %1244 = vmatpush1.msra.mxu0 %v1017
        %1245 = vmatprep.subr.mxu0 %v1021
        %1246 = vmatpush1.msra.mxu0 %v1020
        %1247 = vmatprep.subr.mxu0 %v1024
        %1248 = vmatpush1.msra.mxu0 %v1023
        %1249 = vmatprep.subr.mxu0 %v1027
        %1250 = vmatpush1.msra.mxu0 %v1026
        %1251 = vmatprep.subr.mxu0 %v1030
        %1252 = vmatpush1.msra.mxu0 %v1029
        %1253 = vmatprep.subr.mxu0 %v1033
        %1254 = vmatpush1.msra.mxu0 %v1032
        %1255 = vmatprep.subr.mxu0 %v1036
        %1256 = vmatpush1.msra.mxu0 %v1035
        %1257 = vmatprep.subr.mxu0 %v1039
        %1258 = vmatpush1.msra.mxu0 %v1038
        %1259 = vmatprep.subr.mxu0 %v1042
        %1260 = vmatpush1.msra.mxu0 %v1041
        %1261 = vmatprep.subr.mxu0 %v1045
        %1262 = vmatpush1.msra.mxu0 %v1044
        %1263 = vmatprep.subr.mxu0 %v1048
        %1264 = vmatpush1.msra.mxu0 %v1047
        %1265 = vmatprep.subr.mxu0 %v1051
        %1266 = vmatpush1.msra.mxu0 %v1050
        %1267 = vmatprep.subr.mxu0 %v1054
        %1268 = vmatpush1.msra.mxu0 %v1053
        %1269 = vmatprep.subr.mxu0 %v1057
        %1270 = vmatpush1.msra.mxu0 %v1056
        %1271 = vmatprep.subr.mxu0 %v1060
        %1272 = vmatpush1.msra.mxu0 %v1059
        %1273 = vmatprep.subr.mxu0 %v1063
        %1274 = vmatpush1.msra.mxu0 %v1062
        %1275 = vmatprep.subr.mxu0 0.0
        %1276 = vmatpush1.msra.mxu0 0.0
        %1277 = vmatprep.subr.mxu0 0.0
        %1278 = vmatpush1.msra.mxu0 0.0
        %1279 = vmatprep.subr.mxu0 0.0
        %1280 = vmatpush1.msra.mxu0 0.0
        %1281 = vmatprep.subr.mxu0 0.0
        %1282 = vmatpush1.msra.mxu0 0.0
        %1283 = vmatprep.subr.mxu0 0.0
        %1284 = vmatpush1.msra.mxu0 0.0
        %1285 = vmatprep.subr.mxu0 0.0
        %1286 = vmatpush1.msra.mxu0 0.0
        %1287 = vmatprep.subr.mxu0 0.0
        %1288 = vmatpush1.msra.mxu0 0.0
        %1289 = vmatprep.subr.mxu0 0.0
        %1290 = vmatpush1.msra.mxu0 0.0
        %1291 = vmatprep.subr.mxu0 0.0
        %1292 = vmatpush1.msra.mxu0 0.0
        %1293 = vmatprep.subr.mxu0 0.0
        %1294 = vmatpush1.msra.mxu0 0.0
        %1295 = vmatprep.subr.mxu0 0.0
        %1296 = vmatpush1.msra.mxu0 0.0
        %1297 = vmatprep.subr.mxu0 0.0
        %1298 = vmatpush1.msra.mxu0 0.0
        %1299 = vmatprep.subr.mxu0 0.0
        %1300 = vmatpush1.msra.mxu0 0.0
        %1301 = vmatprep.subr.mxu0 0.0
        %1302 = vmatpush1.msra.mxu0 0.0
        %1303 = vmatprep.subr.mxu0 0.0
        %1304 = vmatpush1.msra.mxu0 0.0
        %1305 = vmatprep.subr.mxu0 0.0
        %1306 = vmatpush1.msra.mxu0 0.0
        %1307 = vmatprep.mubr.f32.mxu0 0.0
        %1308 = vmatmul.mubr.f32.gmra.mrb[0].mxu0 %v1242
        %v1309 = vpop.f32.mrb[0].mxu0
        %v1310 = vadd.f32 0.0, %v1309
        %v1311 = vpop.f32.mrb[0].mxu0
        %v1312 = vadd.f32 0.0, %v1311
        %1313 = vdwg.mxu0
        %1314 = vmatprep.subr.mxu0 0.0
        %1315 = vmatpush1.msra.mxu0 %v1019
        %1316 = vmatprep.subr.mxu0 0.0
        %1317 = vmatpush1.msra.mxu0 %v1022
        %1318 = vmatprep.subr.mxu0 0.0
        %1319 = vmatpush1.msra.mxu0 %v1025
        %1320 = vmatprep.subr.mxu0 0.0
        %1321 = vmatpush1.msra.mxu0 %v1028
        %1322 = vmatprep.subr.mxu0 0.0
        %1323 = vmatpush1.msra.mxu0 %v1031
        %1324 = vmatprep.subr.mxu0 0.0
        %1325 = vmatpush1.msra.mxu0 %v1034
        %1326 = vmatprep.subr.mxu0 0.0
        %1327 = vmatpush1.msra.mxu0 %v1037
        %1328 = vmatprep.subr.mxu0 0.0
        %1329 = vmatpush1.msra.mxu0 %v1040
        %1330 = vmatprep.subr.mxu0 0.0
        %1331 = vmatpush1.msra.mxu0 %v1043
        %1332 = vmatprep.subr.mxu0 0.0
        %1333 = vmatpush1.msra.mxu0 %v1046
        %1334 = vmatprep.subr.mxu0 0.0
        %1335 = vmatpush1.msra.mxu0 %v1049
        %1336 = vmatprep.subr.mxu0 0.0
        %1337 = vmatpush1.msra.mxu0 %v1052
        %1338 = vmatprep.subr.mxu0 0.0
        %1339 = vmatpush1.msra.mxu0 %v1055
        %1340 = vmatprep.subr.mxu0 0.0
        %1341 = vmatpush1.msra.mxu0 %v1058
        %1342 = vmatprep.subr.mxu0 0.0
        %1343 = vmatpush1.msra.mxu0 %v1061
        %1344 = vmatprep.subr.mxu0 0.0
        %1345 = vmatpush1.msra.mxu0 %v1064
        %1346 = vmatprep.subr.mxu0 0.0
        %1347 = vmatpush1.msra.mxu0 0.0
        %1348 = vmatprep.subr.mxu0 0.0
        %1349 = vmatpush1.msra.mxu0 0.0
        %1350 = vmatprep.subr.mxu0 0.0
        %1351 = vmatpush1.msra.mxu0 0.0
        %1352 = vmatprep.subr.mxu0 0.0
        %1353 = vmatpush1.msra.mxu0 0.0
        %1354 = vmatprep.subr.mxu0 0.0
        %1355 = vmatpush1.msra.mxu0 0.0
        %1356 = vmatprep.subr.mxu0 0.0
        %1357 = vmatpush1.msra.mxu0 0.0
        %1358 = vmatprep.subr.mxu0 0.0
        %1359 = vmatpush1.msra.mxu0 0.0
        %1360 = vmatprep.subr.mxu0 0.0
        %1361 = vmatpush1.msra.mxu0 0.0
        %1362 = vmatprep.subr.mxu0 0.0
        %1363 = vmatpush1.msra.mxu0 0.0
        %1364 = vmatprep.subr.mxu0 0.0
        %1365 = vmatpush1.msra.mxu0 0.0
        %1366 = vmatprep.subr.mxu0 0.0
        %1367 = vmatpush1.msra.mxu0 0.0
        %1368 = vmatprep.subr.mxu0 0.0
        %1369 = vmatpush1.msra.mxu0 0.0
        %1370 = vmatprep.subr.mxu0 0.0
        %1371 = vmatpush1.msra.mxu0 0.0
        %1372 = vmatprep.subr.mxu0 0.0
        %1373 = vmatpush1.msra.mxu0 0.0
        %1374 = vmatprep.subr.mxu0 0.0
        %1375 = vmatpush1.msra.mxu0 0.0
        %1376 = vmatprep.subr.mxu0 0.0
        %1377 = vmatpush1.msra.mxu0 0.0
        %1378 = vmatprep.mubr.f32.mxu0 0.0
        %1379 = vmatmul.mubr.f32.gmra.mrb[0].mxu0 %v1242
        %v1380 = vpop.f32.mrb[0].mxu0
        %v1381 = vadd.f32 0.0, %v1380
        %v1382 = vpop.f32.mrb[0].mxu0
        %1383 = vdwg.mxu0
        %v1384 = vmul.f32 %v1310, 0.17677669
        %vm1385 = vcmask 261120
        %v1387 = vsel %vm1385, %v1384, 0
        %v1390 = vsel %vm1385, %v1312, 0
        %1392 = vmatprep.subr.mxu0 0.0
        %1393 = vmatpush1.xpose.msra.mxu0 %v1390
        %1394 = vmatprep.subr.mxu0 0.0
        %1395 = vmatpush1.xpose.msra.mxu0 0.0
        %1396 = vmatprep.subr.mxu0 0.0
        %1397 = vmatpush1.xpose.msra.mxu0 0.0
        %1398 = vmatprep.subr.mxu0 0.0
        %1399 = vmatpush1.xpose.msra.mxu0 0.0
        %1400 = vmatprep.subr.mxu0 0.0
        %1401 = vmatpush1.xpose.msra.mxu0 0.0
        %1402 = vmatprep.subr.mxu0 0.0
        %1403 = vmatpush1.xpose.msra.mxu0 0.0
        %1404 = vmatprep.subr.mxu0 0.0
        %1405 = vmatpush1.xpose.msra.mxu0 0.0
        %1406 = vmatprep.subr.mxu0 0.0
        %1407 = vmatpush1.xpose.msra.mxu0 0.0
        %1408 = vmatprep.subr.mxu0 0.0
        %1409 = vmatpush1.xpose.msra.mxu0 0.0
        %1410 = vmatprep.subr.mxu0 0.0
        %1411 = vmatpush1.xpose.msra.mxu0 0.0
        %1412 = vmatprep.subr.mxu0 0.0
        %1413 = vmatpush1.xpose.msra.mxu0 0.0
        %1414 = vmatprep.subr.mxu0 0.0
        %1415 = vmatpush1.xpose.msra.mxu0 0.0
        %1416 = vmatprep.subr.mxu0 0.0
        %1417 = vmatpush1.xpose.msra.mxu0 0.0
        %1418 = vmatprep.subr.mxu0 0.0
        %1419 = vmatpush1.xpose.msra.mxu0 0.0
        %1420 = vmatprep.subr.mxu0 0.0
        %1421 = vmatpush1.xpose.msra.mxu0 0.0
        %1422 = vmatprep.subr.mxu0 0.0
        %1423 = vmatpush1.xpose.msra.mxu0 0.0
        %1424 = vmatprep.subr.mxu0 0.0
        %1425 = vmatpush1.xpose.msra.mxu0 0.0
        %1426 = vmatprep.subr.mxu0 0.0
        %1427 = vmatpush1.xpose.msra.mxu0 0.0
        %1428 = vmatprep.subr.mxu0 0.0
        %1429 = vmatpush1.xpose.msra.mxu0 0.0
        %1430 = vmatprep.subr.mxu0 0.0
        %1431 = vmatpush1.xpose.msra.mxu0 0.0
        %1432 = vmatprep.subr.mxu0 0.0
        %1433 = vmatpush1.xpose.msra.mxu0 0.0
        %1434 = vmatprep.subr.mxu0 0.0
        %1435 = vmatpush1.xpose.msra.mxu0 0.0
        %1436 = vmatprep.subr.mxu0 0.0
        %1437 = vmatpush1.xpose.msra.mxu0 0.0
        %1438 = vmatprep.subr.mxu0 0.0
        %1439 = vmatpush1.xpose.msra.mxu0 0.0
        %1440 = vmatprep.subr.mxu0 0.0
        %1441 = vmatpush1.xpose.msra.mxu0 0.0
        %1442 = vmatprep.subr.mxu0 0.0
        %1443 = vmatpush1.xpose.msra.mxu0 0.0
        %1444 = vmatprep.subr.mxu0 0.0
        %1445 = vmatpush1.xpose.msra.mxu0 0.0
        %1446 = vmatprep.subr.mxu0 0.0
        %1447 = vmatpush1.xpose.msra.mxu0 0.0
        %1448 = vmatprep.subr.mxu0 0.0
        %1449 = vmatpush1.xpose.msra.mxu0 0.0
        %1450 = vmatprep.subr.mxu0 0.0
        %1451 = vmatpush1.xpose.msra.mxu0 0.0
        %1452 = vmatprep.subr.mxu0 0.0
        %1453 = vmatpush1.xpose.msra.mxu0 0.0
        %1454 = vmatprep.subr.mxu0 0.0
        %1455 = vmatpush1.xpose.msra.mxu0 0.0
        %1456 = vmatprep.mubr.f32.mxu0 0.0
        %1457 = vmatmul.mubr.f32.gmra.mrb[0].mxu0 %v1387
        %v1458 = vpop.f32.mrb[0].mxu0
        %v1459 = vadd.f32 %v1014, %v1458
        %v1460 = vpop.f32.mrb[0].mxu0
        %1461 = vdwg.mxu0
        %vm1462 = vcmask 27648
        %v1463 = vsel %vm1462, %v1459, -inf
        %1464 = vmax.xlane.f32.xlu0 %v1463
        %v1465 = vpop.xlane.xlu0 %1464
        %v1466 = vsub.f32 %v1459, %v1465
        %v1467 = vmul.f32 %v1466, 1.442695
        %v1468 = vpow.pop %v1467
        %v1469 = vsel %vm1462, %v1468, 0.0
        %1470 = vadd.xlane.f32.xlu0 %v1469
        %v1471 = vpop.xlane.xlu0 %1470
        %v1472 = vrcp.pop %v1471
        %v1473 = vmul.f32 %v1468, %v1472
        %vm1474 = vcmask 31744
        %v1476 = vsel %vm1474, %v1473, 0
        %v1479 = vsel %vm1214, %v1381, 0
        %1481 = vmatprep.subr.mxu0 0.0
        %1482 = vmatpush1.msra.mxu0 %v1479
        %1483 = vmatprep.subr.mxu0 0.0
        %1484 = vmatpush1.msra.mxu0 0.0
        %1485 = vmatprep.subr.mxu0 0.0
        %1486 = vmatpush1.msra.mxu0 0.0
        %1487 = vmatprep.subr.mxu0 0.0
        %1488 = vmatpush1.msra.mxu0 0.0
        %1489 = vmatprep.subr.mxu0 0.0
        %1490 = vmatpush1.msra.mxu0 0.0
        %1491 = vmatprep.subr.mxu0 0.0
        %1492 = vmatpush1.msra.mxu0 0.0
        %1493 = vmatprep.subr.mxu0 0.0
        %1494 = vmatpush1.msra.mxu0 0.0
        %1495 = vmatprep.subr.mxu0 0.0
        %1496 = vmatpush1.msra.mxu0 0.0
        %1497 = vmatprep.subr.mxu0 0.0
        %1498 = vmatpush1.msra.mxu0 0.0
        %1499 = vmatprep.subr.mxu0 0.0
        %1500 = vmatpush1.msra.mxu0 0.0
        %1501 = vmatprep.subr.mxu0 0.0
        %1502 = vmatpush1.msra.mxu0 0.0
        %1503 = vmatprep.subr.mxu0 0.0
        %1504 = vmatpush1.msra.mxu0 0.0
        %1505 = vmatprep.subr.mxu0 0.0
        %1506 = vmatpush1.msra.mxu0 0.0
        %1507 = vmatprep.subr.mxu0 0.0
        %1508 = vmatpush1.msra.mxu0 0.0
        %1509 = vmatprep.subr.mxu0 0.0
        %1510 = vmatpush1.msra.mxu0 0.0
        %1511 = vmatprep.subr.mxu0 0.0
        %1512 = vmatpush1.msra.mxu0 0.0
        %1513 = vmatprep.subr.mxu0 0.0
        %1514 = vmatpush1.msra.mxu0 0.0
        %1515 = vmatprep.subr.mxu0 0.0
        %1516 = vmatpush1.msra.mxu0 0.0
        %1517 = vmatprep.subr.mxu0 0.0
        %1518 = vmatpush1.msra.mxu0 0.0
        %1519 = vmatprep.subr.mxu0 0.0
        %1520 = vmatpush1.msra.mxu0 0.0
        %1521 = vmatprep.subr.mxu0 0.0
        %1522 = vmatpush1.msra.mxu0 0.0
        %1523 = vmatprep.subr.mxu0 0.0
        %1524 = vmatpush1.msra.mxu0 0.0
        %1525 = vmatprep.subr.mxu0 0.0
        %1526 = vmatpush1.msra.mxu0 0.0
        %1527 = vmatprep.subr.mxu0 0.0
        %1528 = vmatpush1.msra.mxu0 0.0
        %1529 = vmatprep.subr.mxu0 0.0
        %1530 = vmatpush1.msra.mxu0 0.0
        %1531 = vmatprep.subr.mxu0 0.0
        %1532 = vmatpush1.msra.mxu0 0.0
        %1533 = vmatprep.subr.mxu0 0.0
        %1534 = vmatpush1.msra.mxu0 0.0
        %1535 = vmatprep.subr.mxu0 0.0
        %1536 = vmatpush1.msra.mxu0 0.0
        %1537 = vmatprep.subr.mxu0 0.0
        %1538 = vmatpush1.msra.mxu0 0.0
        %1539 = vmatprep.subr.mxu0 0.0
        %1540 = vmatpush1.msra.mxu0 0.0
        %1541 = vmatprep.subr.mxu0 0.0
        %1542 = vmatpush1.msra.mxu0 0.0
        %1543 = vmatprep.subr.mxu0 0.0
        %1544 = vmatpush1.msra.mxu0 0.0
        %1545 = vmatprep.mubr.f32.mxu0 0.0
        %1546 = vmatmul.mubr.f32.gmra.mrb[0].mxu0 %v1476
        %v1547 = vpop.f32.mrb[0].mxu0
        %v1548 = vadd.f32 0.0, %v1547
        %v1549 = vpop.f32.mrb[0].mxu0
        %1550 = vdwg.mxu0
        %1551 = vrot.lane.b32.xlu0 %v1384, 96
        %v1552 = vpop.permute.xlu0 %1551
        %1553 = vrot.lane.b32.xlu0 %v1312, 96
        %v1554 = vpop.permute.xlu0 %1553
        %v1555 = vsel %vm1385, %v1552, 0
        %v1557 = vsel %vm1385, %v1554, 0
        %1559 = vmatprep.subr.mxu0 0.0
        %1560 = vmatpush1.xpose.msra.mxu0 %v1557
        %1561 = vmatprep.subr.mxu0 0.0
        %1562 = vmatpush1.xpose.msra.mxu0 0.0
        %1563 = vmatprep.subr.mxu0 0.0
        %1564 = vmatpush1.xpose.msra.mxu0 0.0
        %1565 = vmatprep.subr.mxu0 0.0
        %1566 = vmatpush1.xpose.msra.mxu0 0.0
        %1567 = vmatprep.subr.mxu0 0.0
        %1568 = vmatpush1.xpose.msra.mxu0 0.0
        %1569 = vmatprep.subr.mxu0 0.0
        %1570 = vmatpush1.xpose.msra.mxu0 0.0
        %1571 = vmatprep.subr.mxu0 0.0
        %1572 = vmatpush1.xpose.msra.mxu0 0.0
        %1573 = vmatprep.subr.mxu0 0.0
        %1574 = vmatpush1.xpose.msra.mxu0 0.0
        %1575 = vmatprep.subr.mxu0 0.0
        %1576 = vmatpush1.xpose.msra.mxu0 0.0
        %1577 = vmatprep.subr.mxu0 0.0
        %1578 = vmatpush1.xpose.msra.mxu0 0.0
        %1579 = vmatprep.subr.mxu0 0.0
        %1580 = vmatpush1.xpose.msra.mxu0 0.0
        %1581 = vmatprep.subr.mxu0 0.0
        %1582 = vmatpush1.xpose.msra.mxu0 0.0
        %1583 = vmatprep.subr.mxu0 0.0
        %1584 = vmatpush1.xpose.msra.mxu0 0.0
        %1585 = vmatprep.subr.mxu0 0.0
        %1586 = vmatpush1.xpose.msra.mxu0 0.0
        %1587 = vmatprep.subr.mxu0 0.0
        %1588 = vmatpush1.xpose.msra.mxu0 0.0
        %1589 = vmatprep.subr.mxu0 0.0
        %1590 = vmatpush1.xpose.msra.mxu0 0.0
        %1591 = vmatprep.subr.mxu0 0.0
        %1592 = vmatpush1.xpose.msra.mxu0 0.0
        %1593 = vmatprep.subr.mxu0 0.0
        %1594 = vmatpush1.xpose.msra.mxu0 0.0
        %1595 = vmatprep.subr.mxu0 0.0
        %1596 = vmatpush1.xpose.msra.mxu0 0.0
        %1597 = vmatprep.subr.mxu0 0.0
        %1598 = vmatpush1.xpose.msra.mxu0 0.0
        %1599 = vmatprep.subr.mxu0 0.0
        %1600 = vmatpush1.xpose.msra.mxu0 0.0
        %1601 = vmatprep.subr.mxu0 0.0
        %1602 = vmatpush1.xpose.msra.mxu0 0.0
        %1603 = vmatprep.subr.mxu0 0.0
        %1604 = vmatpush1.xpose.msra.mxu0 0.0
        %1605 = vmatprep.subr.mxu0 0.0
        %1606 = vmatpush1.xpose.msra.mxu0 0.0
        %1607 = vmatprep.subr.mxu0 0.0
        %1608 = vmatpush1.xpose.msra.mxu0 0.0
        %1609 = vmatprep.subr.mxu0 0.0
        %1610 = vmatpush1.xpose.msra.mxu0 0.0
        %1611 = vmatprep.subr.mxu0 0.0
        %1612 = vmatpush1.xpose.msra.mxu0 0.0
        %1613 = vmatprep.subr.mxu0 0.0
        %1614 = vmatpush1.xpose.msra.mxu0 0.0
        %1615 = vmatprep.subr.mxu0 0.0
        %1616 = vmatpush1.xpose.msra.mxu0 0.0
        %1617 = vmatprep.subr.mxu0 0.0
        %1618 = vmatpush1.xpose.msra.mxu0 0.0
        %1619 = vmatprep.subr.mxu0 0.0
        %1620 = vmatpush1.xpose.msra.mxu0 0.0
        %1621 = vmatprep.subr.mxu0 0.0
        %1622 = vmatpush1.xpose.msra.mxu0 0.0
        %1623 = vmatprep.mubr.f32.mxu0 0.0
        %1624 = vmatmul.mubr.f32.gmra.mrb[0].mxu0 %v1555
        %v1625 = vpop.f32.mrb[0].mxu0
        %v1626 = vadd.f32 %v1014, %v1625
        %v1627 = vpop.f32.mrb[0].mxu0
        %1628 = vdwg.mxu0
        %v1629 = vsel %vm1462, %v1626, -inf
        %1630 = vmax.xlane.f32.xlu0 %v1629
        %v1631 = vpop.xlane.xlu0 %1630
        %v1632 = vsub.f32 %v1626, %v1631
        %v1633 = vmul.f32 %v1632, 1.442695
        %v1634 = vpow.pop %v1633
        %v1635 = vsel %vm1462, %v1634, 0.0
        %1636 = vadd.xlane.f32.xlu0 %v1635
        %v1637 = vpop.xlane.xlu0 %1636
        %v1638 = vrcp.pop %v1637
        %v1639 = vmul.f32 %v1634, %v1638
        %1640 = vrot.lane.b32.xlu0 %v1381, 96
        %v1641 = vpop.permute.xlu0 %1640
        %v1643 = vsel %vm1474, %v1639, 0
        %v1645 = vsel %vm1214, %v1641, 0
        %1647 = vmatprep.subr.mxu0 0.0
        %1648 = vmatpush1.msra.mxu0 %v1645
        %1649 = vmatprep.subr.mxu0 0.0
        %1650 = vmatpush1.msra.mxu0 0.0
        %1651 = vmatprep.subr.mxu0 0.0
        %1652 = vmatpush1.msra.mxu0 0.0
        %1653 = vmatprep.subr.mxu0 0.0
        %1654 = vmatpush1.msra.mxu0 0.0
        %1655 = vmatprep.subr.mxu0 0.0
        %1656 = vmatpush1.msra.mxu0 0.0
        %1657 = vmatprep.subr.mxu0 0.0
        %1658 = vmatpush1.msra.mxu0 0.0
        %1659 = vmatprep.subr.mxu0 0.0
        %1660 = vmatpush1.msra.mxu0 0.0
        %1661 = vmatprep.subr.mxu0 0.0
        %1662 = vmatpush1.msra.mxu0 0.0
        %1663 = vmatprep.subr.mxu0 0.0
        %1664 = vmatpush1.msra.mxu0 0.0
        %1665 = vmatprep.subr.mxu0 0.0
        %1666 = vmatpush1.msra.mxu0 0.0
        %1667 = vmatprep.subr.mxu0 0.0
        %1668 = vmatpush1.msra.mxu0 0.0
        %1669 = vmatprep.subr.mxu0 0.0
        %1670 = vmatpush1.msra.mxu0 0.0
        %1671 = vmatprep.subr.mxu0 0.0
        %1672 = vmatpush1.msra.mxu0 0.0
        %1673 = vmatprep.subr.mxu0 0.0
        %1674 = vmatpush1.msra.mxu0 0.0
        %1675 = vmatprep.subr.mxu0 0.0
        %1676 = vmatpush1.msra.mxu0 0.0
        %1677 = vmatprep.subr.mxu0 0.0
        %1678 = vmatpush1.msra.mxu0 0.0
        %1679 = vmatprep.subr.mxu0 0.0
        %1680 = vmatpush1.msra.mxu0 0.0
        %1681 = vmatprep.subr.mxu0 0.0
        %1682 = vmatpush1.msra.mxu0 0.0
        %1683 = vmatprep.subr.mxu0 0.0
        %1684 = vmatpush1.msra.mxu0 0.0
        %1685 = vmatprep.subr.mxu0 0.0
        %1686 = vmatpush1.msra.mxu0 0.0
        %1687 = vmatprep.subr.mxu0 0.0
        %1688 = vmatpush1.msra.mxu0 0.0
        %1689 = vmatprep.subr.mxu0 0.0
        %1690 = vmatpush1.msra.mxu0 0.0
        %1691 = vmatprep.subr.mxu0 0.0
        %1692 = vmatpush1.msra.mxu0 0.0
        %1693 = vmatprep.subr.mxu0 0.0
        %1694 = vmatpush1.msra.mxu0 0.0
        %1695 = vmatprep.subr.mxu0 0.0
        %1696 = vmatpush1.msra.mxu0 0.0
        %1697 = vmatprep.subr.mxu0 0.0
        %1698 = vmatpush1.msra.mxu0 0.0
        %1699 = vmatprep.subr.mxu0 0.0
        %1700 = vmatpush1.msra.mxu0 0.0
        %1701 = vmatprep.subr.mxu0 0.0
        %1702 = vmatpush1.msra.mxu0 0.0
        %1703 = vmatprep.subr.mxu0 0.0
        %1704 = vmatpush1.msra.mxu0 0.0
        %1705 = vmatprep.subr.mxu0 0.0
        %1706 = vmatpush1.msra.mxu0 0.0
        %1707 = vmatprep.subr.mxu0 0.0
        %1708 = vmatpush1.msra.mxu0 0.0
        %1709 = vmatprep.subr.mxu0 0.0
        %1710 = vmatpush1.msra.mxu0 0.0
        %1711 = vmatprep.mubr.f32.mxu0 0.0
        %1712 = vmatmul.mubr.f32.gmra.mrb[0].mxu0 %v1643
        %v1713 = vpop.f32.mrb[0].mxu0
        %v1714 = vadd.f32 0.0, %v1713
        %v1715 = vpop.f32.mrb[0].mxu0
        %1716 = vdwg.mxu0
        %1717 = vrot.lane.b32.xlu0 %v1384, 64
        %v1718 = vpop.permute.xlu0 %1717
        %1719 = vrot.lane.b32.xlu0 %v1312, 64
        %v1720 = vpop.permute.xlu0 %1719
        %v1721 = vsel %vm1385, %v1718, 0
        %v1723 = vsel %vm1385, %v1720, 0
        %1725 = vmatprep.subr.mxu0 0.0
        %1726 = vmatpush1.xpose.msra.mxu0 %v1723
        %1727 = vmatprep.subr.mxu0 0.0
        %1728 = vmatpush1.xpose.msra.mxu0 0.0
        %1729 = vmatprep.subr.mxu0 0.0
        %1730 = vmatpush1.xpose.msra.mxu0 0.0
        %1731 = vmatprep.subr.mxu0 0.0
        %1732 = vmatpush1.xpose.msra.mxu0 0.0
        %1733 = vmatprep.subr.mxu0 0.0
        %1734 = vmatpush1.xpose.msra.mxu0 0.0
        %1735 = vmatprep.subr.mxu0 0.0
        %1736 = vmatpush1.xpose.msra.mxu0 0.0
        %1737 = vmatprep.subr.mxu0 0.0
        %1738 = vmatpush1.xpose.msra.mxu0 0.0
        %1739 = vmatprep.subr.mxu0 0.0
        %1740 = vmatpush1.xpose.msra.mxu0 0.0
        %1741 = vmatprep.subr.mxu0 0.0
        %1742 = vmatpush1.xpose.msra.mxu0 0.0
        %1743 = vmatprep.subr.mxu0 0.0
        %1744 = vmatpush1.xpose.msra.mxu0 0.0
        %1745 = vmatprep.subr.mxu0 0.0
        %1746 = vmatpush1.xpose.msra.mxu0 0.0
        %1747 = vmatprep.subr.mxu0 0.0
        %1748 = vmatpush1.xpose.msra.mxu0 0.0
        %1749 = vmatprep.subr.mxu0 0.0
        %1750 = vmatpush1.xpose.msra.mxu0 0.0
        %1751 = vmatprep.subr.mxu0 0.0
        %1752 = vmatpush1.xpose.msra.mxu0 0.0
        %1753 = vmatprep.subr.mxu0 0.0
        %1754 = vmatpush1.xpose.msra.mxu0 0.0
        %1755 = vmatprep.subr.mxu0 0.0
        %1756 = vmatpush1.xpose.msra.mxu0 0.0
        %1757 = vmatprep.subr.mxu0 0.0
        %1758 = vmatpush1.xpose.msra.mxu0 0.0
        %1759 = vmatprep.subr.mxu0 0.0
        %1760 = vmatpush1.xpose.msra.mxu0 0.0
        %1761 = vmatprep.subr.mxu0 0.0
        %1762 = vmatpush1.xpose.msra.mxu0 0.0
        %1763 = vmatprep.subr.mxu0 0.0
        %1764 = vmatpush1.xpose.msra.mxu0 0.0
        %1765 = vmatprep.subr.mxu0 0.0
        %1766 = vmatpush1.xpose.msra.mxu0 0.0
        %1767 = vmatprep.subr.mxu0 0.0
        %1768 = vmatpush1.xpose.msra.mxu0 0.0
        %1769 = vmatprep.subr.mxu0 0.0
        %1770 = vmatpush1.xpose.msra.mxu0 0.0
        %1771 = vmatprep.subr.mxu0 0.0
        %1772 = vmatpush1.xpose.msra.mxu0 0.0
        %1773 = vmatprep.subr.mxu0 0.0
        %1774 = vmatpush1.xpose.msra.mxu0 0.0
        %1775 = vmatprep.subr.mxu0 0.0
        %1776 = vmatpush1.xpose.msra.mxu0 0.0
        %1777 = vmatprep.subr.mxu0 0.0
        %1778 = vmatpush1.xpose.msra.mxu0 0.0
        %1779 = vmatprep.subr.mxu0 0.0
        %1780 = vmatpush1.xpose.msra.mxu0 0.0
        %1781 = vmatprep.subr.mxu0 0.0
        %1782 = vmatpush1.xpose.msra.mxu0 0.0
        %1783 = vmatprep.subr.mxu0 0.0
        %1784 = vmatpush1.xpose.msra.mxu0 0.0
        %1785 = vmatprep.subr.mxu0 0.0
        %1786 = vmatpush1.xpose.msra.mxu0 0.0
        %1787 = vmatprep.subr.mxu0 0.0
        %1788 = vmatpush1.xpose.msra.mxu0 0.0
        %1789 = vmatprep.mubr.f32.mxu0 0.0
        %1790 = vmatmul.mubr.f32.gmra.mrb[0].mxu0 %v1721
        %v1791 = vpop.f32.mrb[0].mxu0
        %v1792 = vadd.f32 %v1014, %v1791
        %v1793 = vpop.f32.mrb[0].mxu0
        %1794 = vdwg.mxu0
        %v1795 = vsel %vm1462, %v1792, -inf
        %1796 = vmax.xlane.f32.xlu0 %v1795
        %v1797 = vpop.xlane.xlu0 %1796
        %v1798 = vsub.f32 %v1792, %v1797
        %v1799 = vmul.f32 %v1798, 1.442695
        %v1800 = vpow.pop %v1799
        %v1801 = vsel %vm1462, %v1800, 0.0
        %1802 = vadd.xlane.f32.xlu0 %v1801
        %v1803 = vpop.xlane.xlu0 %1802
        %v1804 = vrcp.pop %v1803
        %v1805 = vmul.f32 %v1800, %v1804
        %1806 = vrot.lane.b32.xlu0 %v1381, 64
        %v1807 = vpop.permute.xlu0 %1806
        %v1809 = vsel %vm1474, %v1805, 0
        %v1811 = vsel %vm1214, %v1807, 0
        %1813 = vmatprep.subr.mxu0 0.0
        %1814 = vmatpush1.msra.mxu0 %v1811
        %1815 = vmatprep.subr.mxu0 0.0
        %1816 = vmatpush1.msra.mxu0 0.0
        %1817 = vmatprep.subr.mxu0 0.0
        %1818 = vmatpush1.msra.mxu0 0.0
        %1819 = vmatprep.subr.mxu0 0.0
        %1820 = vmatpush1.msra.mxu0 0.0
        %1821 = vmatprep.subr.mxu0 0.0
        %1822 = vmatpush1.msra.mxu0 0.0
        %1823 = vmatprep.subr.mxu0 0.0
        %1824 = vmatpush1.msra.mxu0 0.0
        %1825 = vmatprep.subr.mxu0 0.0
        %1826 = vmatpush1.msra.mxu0 0.0
        %1827 = vmatprep.subr.mxu0 0.0
        %1828 = vmatpush1.msra.mxu0 0.0
        %1829 = vmatprep.subr.mxu0 0.0
        %1830 = vmatpush1.msra.mxu0 0.0
        %1831 = vmatprep.subr.mxu0 0.0
        %1832 = vmatpush1.msra.mxu0 0.0
        %1833 = vmatprep.subr.mxu0 0.0
        %1834 = vmatpush1.msra.mxu0 0.0
        %1835 = vmatprep.subr.mxu0 0.0
        %1836 = vmatpush1.msra.mxu0 0.0
        %1837 = vmatprep.subr.mxu0 0.0
        %1838 = vmatpush1.msra.mxu0 0.0
        %1839 = vmatprep.subr.mxu0 0.0
        %1840 = vmatpush1.msra.mxu0 0.0
        %1841 = vmatprep.subr.mxu0 0.0
        %1842 = vmatpush1.msra.mxu0 0.0
        %1843 = vmatprep.subr.mxu0 0.0
        %1844 = vmatpush1.msra.mxu0 0.0
        %1845 = vmatprep.subr.mxu0 0.0
        %1846 = vmatpush1.msra.mxu0 0.0
        %1847 = vmatprep.subr.mxu0 0.0
        %1848 = vmatpush1.msra.mxu0 0.0
        %1849 = vmatprep.subr.mxu0 0.0
        %1850 = vmatpush1.msra.mxu0 0.0
        %1851 = vmatprep.subr.mxu0 0.0
        %1852 = vmatpush1.msra.mxu0 0.0
        %1853 = vmatprep.subr.mxu0 0.0
        %1854 = vmatpush1.msra.mxu0 0.0
        %1855 = vmatprep.subr.mxu0 0.0
        %1856 = vmatpush1.msra.mxu0 0.0
        %1857 = vmatprep.subr.mxu0 0.0
        %1858 = vmatpush1.msra.mxu0 0.0
        %1859 = vmatprep.subr.mxu0 0.0
        %1860 = vmatpush1.msra.mxu0 0.0
        %1861 = vmatprep.subr.mxu0 0.0
        %1862 = vmatpush1.msra.mxu0 0.0
        %1863 = vmatprep.subr.mxu0 0.0
        %1864 = vmatpush1.msra.mxu0 0.0
        %1865 = vmatprep.subr.mxu0 0.0
        %1866 = vmatpush1.msra.mxu0 0.0
        %1867 = vmatprep.subr.mxu0 0.0
        %1868 = vmatpush1.msra.mxu0 0.0
        %1869 = vmatprep.subr.mxu0 0.0
        %1870 = vmatpush1.msra.mxu0 0.0
        %1871 = vmatprep.subr.mxu0 0.0
        %1872 = vmatpush1.msra.mxu0 0.0
        %1873 = vmatprep.subr.mxu0 0.0
        %1874 = vmatpush1.msra.mxu0 0.0
        %1875 = vmatprep.subr.mxu0 0.0
        %1876 = vmatpush1.msra.mxu0 0.0
        %1877 = vmatprep.mubr.f32.mxu0 0.0
        %1878 = vmatmul.mubr.f32.gmra.mrb[0].mxu0 %v1809
        %v1879 = vpop.f32.mrb[0].mxu0
        %v1880 = vadd.f32 0.0, %v1879
        %v1881 = vpop.f32.mrb[0].mxu0
        %1882 = vdwg.mxu0
        %1883 = vrot.lane.b32.xlu0 %v1384, 32
        %v1884 = vpop.permute.xlu0 %1883
        %1885 = vrot.lane.b32.xlu0 %v1312, 32
        %v1886 = vpop.permute.xlu0 %1885
        %v1887 = vsel %vm1385, %v1884, 0
        %v1889 = vsel %vm1385, %v1886, 0
        %1891 = vmatprep.subr.mxu0 0.0
        %1892 = vmatpush1.xpose.msra.mxu0 %v1889
        %1893 = vmatprep.subr.mxu0 0.0
        %1894 = vmatpush1.xpose.msra.mxu0 0.0
        %1895 = vmatprep.subr.mxu0 0.0
        %1896 = vmatpush1.xpose.msra.mxu0 0.0
        %1897 = vmatprep.subr.mxu0 0.0
        %1898 = vmatpush1.xpose.msra.mxu0 0.0
        %1899 = vmatprep.subr.mxu0 0.0
        %1900 = vmatpush1.xpose.msra.mxu0 0.0
        %1901 = vmatprep.subr.mxu0 0.0
        %1902 = vmatpush1.xpose.msra.mxu0 0.0
        %1903 = vmatprep.subr.mxu0 0.0
        %1904 = vmatpush1.xpose.msra.mxu0 0.0
        %1905 = vmatprep.subr.mxu0 0.0
        %1906 = vmatpush1.xpose.msra.mxu0 0.0
        %1907 = vmatprep.subr.mxu0 0.0
        %1908 = vmatpush1.xpose.msra.mxu0 0.0
        %1909 = vmatprep.subr.mxu0 0.0
        %1910 = vmatpush1.xpose.msra.mxu0 0.0
        %1911 = vmatprep.subr.mxu0 0.0
        %1912 = vmatpush1.xpose.msra.mxu0 0.0
        %1913 = vmatprep.subr.mxu0 0.0
        %1914 = vmatpush1.xpose.msra.mxu0 0.0
        %1915 = vmatprep.subr.mxu0 0.0
        %1916 = vmatpush1.xpose.msra.mxu0 0.0
        %1917 = vmatprep.subr.mxu0 0.0
        %1918 = vmatpush1.xpose.msra.mxu0 0.0
        %1919 = vmatprep.subr.mxu0 0.0
        %1920 = vmatpush1.xpose.msra.mxu0 0.0
        %1921 = vmatprep.subr.mxu0 0.0
        %1922 = vmatpush1.xpose.msra.mxu0 0.0
        %1923 = vmatprep.subr.mxu0 0.0
        %1924 = vmatpush1.xpose.msra.mxu0 0.0
        %1925 = vmatprep.subr.mxu0 0.0
        %1926 = vmatpush1.xpose.msra.mxu0 0.0
        %1927 = vmatprep.subr.mxu0 0.0
        %1928 = vmatpush1.xpose.msra.mxu0 0.0
        %1929 = vmatprep.subr.mxu0 0.0
        %1930 = vmatpush1.xpose.msra.mxu0 0.0
        %1931 = vmatprep.subr.mxu0 0.0
        %1932 = vmatpush1.xpose.msra.mxu0 0.0
        %1933 = vmatprep.subr.mxu0 0.0
        %1934 = vmatpush1.xpose.msra.mxu0 0.0
        %1935 = vmatprep.subr.mxu0 0.0
        %1936 = vmatpush1.xpose.msra.mxu0 0.0
        %1937 = vmatprep.subr.mxu0 0.0
        %1938 = vmatpush1.xpose.msra.mxu0 0.0
        %1939 = vmatprep.subr.mxu0 0.0
        %1940 = vmatpush1.xpose.msra.mxu0 0.0
        %1941 = vmatprep.subr.mxu0 0.0
        %1942 = vmatpush1.xpose.msra.mxu0 0.0
        %1943 = vmatprep.subr.mxu0 0.0
        %1944 = vmatpush1.xpose.msra.mxu0 0.0
        %1945 = vmatprep.subr.mxu0 0.0
        %1946 = vmatpush1.xpose.msra.mxu0 0.0
        %1947 = vmatprep.subr.mxu0 0.0
        %1948 = vmatpush1.xpose.msra.mxu0 0.0
        %1949 = vmatprep.subr.mxu0 0.0
        %1950 = vmatpush1.xpose.msra.mxu0 0.0
        %1951 = vmatprep.subr.mxu0 0.0
        %1952 = vmatpush1.xpose.msra.mxu0 0.0
        %1953 = vmatprep.subr.mxu0 0.0
        %1954 = vmatpush1.xpose.msra.mxu0 0.0
        %1955 = vmatprep.mubr.f32.mxu0 0.0
        %1956 = vmatmul.mubr.f32.gmra.mrb[0].mxu0 %v1887
        %v1957 = vpop.f32.mrb[0].mxu0
        %v1958 = vadd.f32 %v1014, %v1957
        %v1959 = vpop.f32.mrb[0].mxu0
        %1960 = vdwg.mxu0
        %v1961 = vsel %vm1462, %v1958, -inf
        %1962 = vmax.xlane.f32.xlu0 %v1961
        %v1963 = vpop.xlane.xlu0 %1962
        %v1964 = vsub.f32 %v1958, %v1963
        %v1965 = vmul.f32 %v1964, 1.442695
        %v1966 = vpow.pop %v1965
        %v1967 = vsel %vm1462, %v1966, 0.0
        %1968 = vadd.xlane.f32.xlu0 %v1967
        %v1969 = vpop.xlane.xlu0 %1968
        %v1970 = vrcp.pop %v1969
        %v1971 = vmul.f32 %v1966, %v1970
        %1972 = vrot.lane.b32.xlu0 %v1381, 32
        %v1973 = vpop.permute.xlu0 %1972
        %v1975 = vsel %vm1474, %v1971, 0
        %v1977 = vsel %vm1214, %v1973, 0
        %1979 = vmatprep.subr.mxu0 0.0
        %1980 = vmatpush1.msra.mxu0 %v1977
        %1981 = vmatprep.subr.mxu0 0.0
        %1982 = vmatpush1.msra.mxu0 0.0
        %1983 = vmatprep.subr.mxu0 0.0
        %1984 = vmatpush1.msra.mxu0 0.0
        %1985 = vmatprep.subr.mxu0 0.0
        %1986 = vmatpush1.msra.mxu0 0.0
        %1987 = vmatprep.subr.mxu0 0.0
        %1988 = vmatpush1.msra.mxu0 0.0
        %1989 = vmatprep.subr.mxu0 0.0
        %1990 = vmatpush1.msra.mxu0 0.0
        %1991 = vmatprep.subr.mxu0 0.0
        %1992 = vmatpush1.msra.mxu0 0.0
        %1993 = vmatprep.subr.mxu0 0.0
        %1994 = vmatpush1.msra.mxu0 0.0
        %1995 = vmatprep.subr.mxu0 0.0
        %1996 = vmatpush1.msra.mxu0 0.0
        %1997 = vmatprep.subr.mxu0 0.0
        %1998 = vmatpush1.msra.mxu0 0.0
        %1999 = vmatprep.subr.mxu0 0.0
        %2000 = vmatpush1.msra.mxu0 0.0
        %2001 = vmatprep.subr.mxu0 0.0
        %2002 = vmatpush1.msra.mxu0 0.0
        %2003 = vmatprep.subr.mxu0 0.0
        %2004 = vmatpush1.msra.mxu0 0.0
        %2005 = vmatprep.subr.mxu0 0.0
        %2006 = vmatpush1.msra.mxu0 0.0
        %2007 = vmatprep.subr.mxu0 0.0
        %2008 = vmatpush1.msra.mxu0 0.0
        %2009 = vmatprep.subr.mxu0 0.0
        %2010 = vmatpush1.msra.mxu0 0.0
        %2011 = vmatprep.subr.mxu0 0.0
        %2012 = vmatpush1.msra.mxu0 0.0
        %2013 = vmatprep.subr.mxu0 0.0
        %2014 = vmatpush1.msra.mxu0 0.0
        %2015 = vmatprep.subr.mxu0 0.0
        %2016 = vmatpush1.msra.mxu0 0.0
        %2017 = vmatprep.subr.mxu0 0.0
        %2018 = vmatpush1.msra.mxu0 0.0
        %2019 = vmatprep.subr.mxu0 0.0
        %2020 = vmatpush1.msra.mxu0 0.0
        %2021 = vmatprep.subr.mxu0 0.0
        %2022 = vmatpush1.msra.mxu0 0.0
        %2023 = vmatprep.subr.mxu0 0.0
        %2024 = vmatpush1.msra.mxu0 0.0
        %2025 = vmatprep.subr.mxu0 0.0
        %2026 = vmatpush1.msra.mxu0 0.0
        %2027 = vmatprep.subr.mxu0 0.0
        %2028 = vmatpush1.msra.mxu0 0.0
        %2029 = vmatprep.subr.mxu0 0.0
        %2030 = vmatpush1.msra.mxu0 0.0
        %2031 = vmatprep.subr.mxu0 0.0
        %2032 = vmatpush1.msra.mxu0 0.0
        %2033 = vmatprep.subr.mxu0 0.0
        %2034 = vmatpush1.msra.mxu0 0.0
        %2035 = vmatprep.subr.mxu0 0.0
        %2036 = vmatpush1.msra.mxu0 0.0
        %2037 = vmatprep.subr.mxu0 0.0
        %2038 = vmatpush1.msra.mxu0 0.0
        %2039 = vmatprep.subr.mxu0 0.0
        %2040 = vmatpush1.msra.mxu0 0.0
        %2041 = vmatprep.subr.mxu0 0.0
        %2042 = vmatpush1.msra.mxu0 0.0
        %2043 = vmatprep.mubr.f32.mxu0 0.0
        %2044 = vmatmul.mubr.f32.gmra.mrb[0].mxu0 %v1975
        %v2045 = vpop.f32.mrb[0].mxu0
        %v2046 = vadd.f32 0.0, %v2045
        %v2047 = vpop.f32.mrb[0].mxu0
        %2048 = vdwg.mxu0
        %2050 = vrot.lane.b32.xlu0 %v1714, 32
        %v2051 = vpop.permute.xlu0 %2050
        %2054 = vrot.lane.b32.xlu0 %v1880, 64
        %v2055 = vpop.permute.xlu0 %2054
        %2058 = vrot.lane.b32.xlu0 %v2046, 96
        %v2059 = vpop.permute.xlu0 %2058
        %v2061 = vsel %vm1385, %v1548, %v2051
        %vm2062 = vcmask 523264
        %v2063 = vsel %vm2062, %v2061, %v2055
        %vm2064 = vcmask 785408
        %v2065 = vsel %vm2064, %v2063, %v2059
        %2066 = vmatprep.subr.mxu0 0.0
        %2067 = vmatpush1.msra.mxu0 %v1065
        %2068 = vmatprep.subr.mxu0 0.0
        %2069 = vmatpush1.msra.mxu0 %v1066
        %2070 = vmatprep.subr.mxu0 0.0
        %2071 = vmatpush1.msra.mxu0 %v1067
        %2072 = vmatprep.subr.mxu0 0.0
        %2073 = vmatpush1.msra.mxu0 %v1068
        %2074 = vmatprep.subr.mxu0 0.0
        %2075 = vmatpush1.msra.mxu0 %v1069
        %2076 = vmatprep.subr.mxu0 0.0
        %2077 = vmatpush1.msra.mxu0 %v1070
        %2078 = vmatprep.subr.mxu0 0.0
        %2079 = vmatpush1.msra.mxu0 %v1071
        %2080 = vmatprep.subr.mxu0 0.0
        %2081 = vmatpush1.msra.mxu0 %v1072
        %2082 = vmatprep.subr.mxu0 0.0
        %2083 = vmatpush1.msra.mxu0 %v1073
        %2084 = vmatprep.subr.mxu0 0.0
        %2085 = vmatpush1.msra.mxu0 %v1074
        %2086 = vmatprep.subr.mxu0 0.0
        %2087 = vmatpush1.msra.mxu0 %v1075
        %2088 = vmatprep.subr.mxu0 0.0
        %2089 = vmatpush1.msra.mxu0 %v1076
        %2090 = vmatprep.subr.mxu0 0.0
        %2091 = vmatpush1.msra.mxu0 %v1077
        %2092 = vmatprep.subr.mxu0 0.0
        %2093 = vmatpush1.msra.mxu0 %v1078
        %2094 = vmatprep.subr.mxu0 0.0
        %2095 = vmatpush1.msra.mxu0 %v1079
        %2096 = vmatprep.subr.mxu0 0.0
        %2097 = vmatpush1.msra.mxu0 %v1080
        %2098 = vmatprep.subr.mxu0 0.0
        %2099 = vmatpush1.msra.mxu0 0.0
        %2100 = vmatprep.subr.mxu0 0.0
        %2101 = vmatpush1.msra.mxu0 0.0
        %2102 = vmatprep.subr.mxu0 0.0
        %2103 = vmatpush1.msra.mxu0 0.0
        %2104 = vmatprep.subr.mxu0 0.0
        %2105 = vmatpush1.msra.mxu0 0.0
        %2106 = vmatprep.subr.mxu0 0.0
        %2107 = vmatpush1.msra.mxu0 0.0
        %2108 = vmatprep.subr.mxu0 0.0
        %2109 = vmatpush1.msra.mxu0 0.0
        %2110 = vmatprep.subr.mxu0 0.0
        %2111 = vmatpush1.msra.mxu0 0.0
        %2112 = vmatprep.subr.mxu0 0.0
        %2113 = vmatpush1.msra.mxu0 0.0
        %2114 = vmatprep.subr.mxu0 0.0
        %2115 = vmatpush1.msra.mxu0 0.0
        %2116 = vmatprep.subr.mxu0 0.0
        %2117 = vmatpush1.msra.mxu0 0.0
        %2118 = vmatprep.subr.mxu0 0.0
        %2119 = vmatpush1.msra.mxu0 0.0
        %2120 = vmatprep.subr.mxu0 0.0
        %2121 = vmatpush1.msra.mxu0 0.0
        %2122 = vmatprep.subr.mxu0 0.0
        %2123 = vmatpush1.msra.mxu0 0.0
        %2124 = vmatprep.subr.mxu0 0.0
        %2125 = vmatpush1.msra.mxu0 0.0
        %2126 = vmatprep.subr.mxu0 0.0
        %2127 = vmatpush1.msra.mxu0 0.0
        %2128 = vmatprep.subr.mxu0 0.0
        %2129 = vmatpush1.msra.mxu0 0.0
        %2130 = vmatprep.mubr.f32.mxu0 0.0
        %2131 = vmatmul.mubr.f32.gmra.mrb[0].mxu0 %v2065
        %v2132 = vpop.f32.mrb[0].mxu0
        %v2133 = vadd.f32 0.0, %v2132
        %v2134 = vpop.f32.mrb[0].mxu0
        %2135 = vdwg.mxu0
        %v2136 = vadd.f32 %v1013, %v2133
        %v2138 = vlaneseq
        %v2139 = vshrl.u32 %v2138, 7
        %v2140 = vsub.s32 0, %v2139
        %v2141 = vrot.slane %v1081, %v2140
        %v2143 = vadd.f32 %v2136, %v2141
        %v2144 = vsel %vm1214, %v2143, 0.0
        %2145 = vadd.xlane.f32.xlu0 %v2144
        %v2146 = vpop.xlane.xlu0 %2145
        %v2147 = vmul.f32 %v2146, %v1218
        %v2148 = vsub.f32 %v2143, %v2147
        %v2149 = vmul.f32 %v2148, %v2148
        %v2150 = vsel %vm1214, %v2149, 0.0
        %2151 = vadd.xlane.f32.xlu0 %v2150
        %v2152 = vpop.xlane.xlu0 %2151
        %v2153 = vmul.f32 %v2152, %v1218
        %v2154 = vadd.f32 %v2153, 1e-05
        %v2155 = vrsqrt.pop %v2154
        %v2156 = vmul.f32 %v2148, %v2155
        %v2158 = vlaneseq
        %v2159 = vshrl.u32 %v2158, 7
        %v2160 = vsub.s32 0, %v2159
        %v2161 = vrot.slane %v1082, %v2160
        %v2163 = vmul.f32 %v2156, %v2161
        %v2165 = vlaneseq
        %v2166 = vshrl.u32 %v2165, 7
        %v2167 = vsub.s32 0, %v2166
        %v2168 = vrot.slane %v1083, %v2167
        %v2170 = vadd.f32 %v2163, %v2168
        %v2172 = vlaneseq
        %v2173 = vshrl.u32 %v2172, 7
        %v2174 = vsub.s32 0, %v2173
        %v2175 = vrot.slane %v1148, %v2174
        %v2176 = vlaneseq
        %v2177 = vshrl.u32 %v2176, 7
        %v2178 = vsub.s32 1, %v2177
        %v2179 = vrot.slane %v1148, %v2178
        %v2180 = vlaneseq
        %v2181 = vshrl.u32 %v2180, 7
        %v2182 = vsub.s32 2, %v2181
        %v2183 = vrot.slane %v1148, %v2182
        %v2184 = vlaneseq
        %v2185 = vshrl.u32 %v2184, 7
        %v2186 = vsub.s32 3, %v2185
        %v2187 = vrot.slane %v1148, %v2186
        %2192 = vmatprep.subr.mxu0 %v1085
        %2193 = vmatpush1.msra.mxu0 %v1084
        %2194 = vmatprep.subr.mxu0 %v1089
        %2195 = vmatpush1.msra.mxu0 %v1088
        %2196 = vmatprep.subr.mxu0 %v1093
        %2197 = vmatpush1.msra.mxu0 %v1092
        %2198 = vmatprep.subr.mxu0 %v1097
        %2199 = vmatpush1.msra.mxu0 %v1096
        %2200 = vmatprep.subr.mxu0 %v1101
        %2201 = vmatpush1.msra.mxu0 %v1100
        %2202 = vmatprep.subr.mxu0 %v1105
        %2203 = vmatpush1.msra.mxu0 %v1104
        %2204 = vmatprep.subr.mxu0 %v1109
        %2205 = vmatpush1.msra.mxu0 %v1108
        %2206 = vmatprep.subr.mxu0 %v1113
        %2207 = vmatpush1.msra.mxu0 %v1112
        %2208 = vmatprep.subr.mxu0 %v1117
        %2209 = vmatpush1.msra.mxu0 %v1116
        %2210 = vmatprep.subr.mxu0 %v1121
        %2211 = vmatpush1.msra.mxu0 %v1120
        %2212 = vmatprep.subr.mxu0 %v1125
        %2213 = vmatpush1.msra.mxu0 %v1124
        %2214 = vmatprep.subr.mxu0 %v1129
        %2215 = vmatpush1.msra.mxu0 %v1128
        %2216 = vmatprep.subr.mxu0 %v1133
        %2217 = vmatpush1.msra.mxu0 %v1132
        %2218 = vmatprep.subr.mxu0 %v1137
        %2219 = vmatpush1.msra.mxu0 %v1136
        %2220 = vmatprep.subr.mxu0 %v1141
        %2221 = vmatpush1.msra.mxu0 %v1140
        %2222 = vmatprep.subr.mxu0 %v1145
        %2223 = vmatpush1.msra.mxu0 %v1144
        %2224 = vmatprep.subr.mxu0 0.0
        %2225 = vmatpush1.msra.mxu0 0.0
        %2226 = vmatprep.subr.mxu0 0.0
        %2227 = vmatpush1.msra.mxu0 0.0
        %2228 = vmatprep.subr.mxu0 0.0
        %2229 = vmatpush1.msra.mxu0 0.0
        %2230 = vmatprep.subr.mxu0 0.0
        %2231 = vmatpush1.msra.mxu0 0.0
        %2232 = vmatprep.subr.mxu0 0.0
        %2233 = vmatpush1.msra.mxu0 0.0
        %2234 = vmatprep.subr.mxu0 0.0
        %2235 = vmatpush1.msra.mxu0 0.0
        %2236 = vmatprep.subr.mxu0 0.0
        %2237 = vmatpush1.msra.mxu0 0.0
        %2238 = vmatprep.subr.mxu0 0.0
        %2239 = vmatpush1.msra.mxu0 0.0
        %2240 = vmatprep.subr.mxu0 0.0
        %2241 = vmatpush1.msra.mxu0 0.0
        %2242 = vmatprep.subr.mxu0 0.0
        %2243 = vmatpush1.msra.mxu0 0.0
        %2244 = vmatprep.subr.mxu0 0.0
        %2245 = vmatpush1.msra.mxu0 0.0
        %2246 = vmatprep.subr.mxu0 0.0
        %2247 = vmatpush1.msra.mxu0 0.0
        %2248 = vmatprep.subr.mxu0 0.0
        %2249 = vmatpush1.msra.mxu0 0.0
        %2250 = vmatprep.subr.mxu0 0.0
        %2251 = vmatpush1.msra.mxu0 0.0
        %2252 = vmatprep.subr.mxu0 0.0
        %2253 = vmatpush1.msra.mxu0 0.0
        %2254 = vmatprep.subr.mxu0 0.0
        %2255 = vmatpush1.msra.mxu0 0.0
        %2256 = vmatprep.mubr.f32.mxu0 0.0
        %2257 = vmatmul.mubr.f32.gmra.mrb[0].mxu0 %v2170
        %v2258 = vpop.f32.mrb[0].mxu0
        %v2259 = vadd.f32 %v2175, %v2258
        %v2260 = vpop.f32.mrb[0].mxu0
        %v2261 = vadd.f32 %v2179, %v2260
        %2262 = vdwg.mxu0
        %2263 = vmatprep.subr.mxu0 %v1087
        %2264 = vmatpush1.msra.mxu0 %v1086
        %2265 = vmatprep.subr.mxu0 %v1091
        %2266 = vmatpush1.msra.mxu0 %v1090
        %2267 = vmatprep.subr.mxu0 %v1095
        %2268 = vmatpush1.msra.mxu0 %v1094
        %2269 = vmatprep.subr.mxu0 %v1099
        %2270 = vmatpush1.msra.mxu0 %v1098
        %2271 = vmatprep.subr.mxu0 %v1103
        %2272 = vmatpush1.msra.mxu0 %v1102
        %2273 = vmatprep.subr.mxu0 %v1107
        %2274 = vmatpush1.msra.mxu0 %v1106
        %2275 = vmatprep.subr.mxu0 %v1111
        %2276 = vmatpush1.msra.mxu0 %v1110
        %2277 = vmatprep.subr.mxu0 %v1115
        %2278 = vmatpush1.msra.mxu0 %v1114
        %2279 = vmatprep.subr.mxu0 %v1119
        %2280 = vmatpush1.msra.mxu0 %v1118
        %2281 = vmatprep.subr.mxu0 %v1123
        %2282 = vmatpush1.msra.mxu0 %v1122
        %2283 = vmatprep.subr.mxu0 %v1127
        %2284 = vmatpush1.msra.mxu0 %v1126
        %2285 = vmatprep.subr.mxu0 %v1131
        %2286 = vmatpush1.msra.mxu0 %v1130
        %2287 = vmatprep.subr.mxu0 %v1135
        %2288 = vmatpush1.msra.mxu0 %v1134
        %2289 = vmatprep.subr.mxu0 %v1139
        %2290 = vmatpush1.msra.mxu0 %v1138
        %2291 = vmatprep.subr.mxu0 %v1143
        %2292 = vmatpush1.msra.mxu0 %v1142
        %2293 = vmatprep.subr.mxu0 %v1147
        %2294 = vmatpush1.msra.mxu0 %v1146
        %2295 = vmatprep.subr.mxu0 0.0
        %2296 = vmatpush1.msra.mxu0 0.0
        %2297 = vmatprep.subr.mxu0 0.0
        %2298 = vmatpush1.msra.mxu0 0.0
        %2299 = vmatprep.subr.mxu0 0.0
        %2300 = vmatpush1.msra.mxu0 0.0
        %2301 = vmatprep.subr.mxu0 0.0
        %2302 = vmatpush1.msra.mxu0 0.0
        %2303 = vmatprep.subr.mxu0 0.0
        %2304 = vmatpush1.msra.mxu0 0.0
        %2305 = vmatprep.subr.mxu0 0.0
        %2306 = vmatpush1.msra.mxu0 0.0
        %2307 = vmatprep.subr.mxu0 0.0
        %2308 = vmatpush1.msra.mxu0 0.0
        %2309 = vmatprep.subr.mxu0 0.0
        %2310 = vmatpush1.msra.mxu0 0.0
        %2311 = vmatprep.subr.mxu0 0.0
        %2312 = vmatpush1.msra.mxu0 0.0
        %2313 = vmatprep.subr.mxu0 0.0
        %2314 = vmatpush1.msra.mxu0 0.0
        %2315 = vmatprep.subr.mxu0 0.0
        %2316 = vmatpush1.msra.mxu0 0.0
        %2317 = vmatprep.subr.mxu0 0.0
        %2318 = vmatpush1.msra.mxu0 0.0
        %2319 = vmatprep.subr.mxu0 0.0
        %2320 = vmatpush1.msra.mxu0 0.0
        %2321 = vmatprep.subr.mxu0 0.0
        %2322 = vmatpush1.msra.mxu0 0.0
        %2323 = vmatprep.subr.mxu0 0.0
        %2324 = vmatpush1.msra.mxu0 0.0
        %2325 = vmatprep.subr.mxu0 0.0
        %2326 = vmatpush1.msra.mxu0 0.0
        %2327 = vmatprep.mubr.f32.mxu0 0.0
        %2328 = vmatmul.mubr.f32.gmra.mrb[0].mxu0 %v2170
        %v2329 = vpop.f32.mrb[0].mxu0
        %v2330 = vadd.f32 %v2183, %v2329
        %v2331 = vpop.f32.mrb[0].mxu0
        %v2332 = vadd.f32 %v2187, %v2331
        %2333 = vdwg.mxu0
        %v2334 = vmul.f32 %v2259, 0.5
        %v2335 = vmul.f32 %v2261, 0.5
        %v2336 = vmul.f32 %v2330, 0.5
        %v2337 = vmul.f32 %v2332, 0.5
        %v2338 = vmul.f32 %v2259, 0.044715
        %v2339 = vmul.f32 %v2261, 0.044715
        %v2340 = vmul.f32 %v2330, 0.044715
        %v2341 = vmul.f32 %v2332, 0.044715
        %v2342 = vmul.f32 %v2338, %v2259
        %v2343 = vmul.f32 %v2339, %v2261
        %v2344 = vmul.f32 %v2340, %v2330
        %v2345 = vmul.f32 %v2341, %v2332
        %v2346 = vmul.f32 %v2342, %v2259
        %v2347 = vmul.f32 %v2343, %v2261
        %v2348 = vmul.f32 %v2344, %v2330
        %v2349 = vmul.f32 %v2345, %v2332
        %v2350 = vadd.f32 %v2259, %v2346
        %v2351 = vadd.f32 %v2261, %v2347
        %v2352 = vadd.f32 %v2330, %v2348
        %v2353 = vadd.f32 %v2332, %v2349
        %v2354 = vmul.f32 %v2350, 0.7978846
        %v2355 = vmul.f32 %v2351, 0.7978846
        %v2356 = vmul.f32 %v2352, 0.7978846
        %v2357 = vmul.f32 %v2353, 0.7978846
        %v2358 = vtanh.pop %v2354
        %v2359 = vtanh.pop %v2355
        %v2360 = vtanh.pop %v2356
        %v2361 = vtanh.pop %v2357
        %v2362 = vadd.f32 %v2358, 1.0
        %v2363 = vadd.f32 %v2359, 1.0
        %v2364 = vadd.f32 %v2360, 1.0
        %v2365 = vadd.f32 %v2361, 1.0
        %v2366 = vmul.f32 %v2334, %v2362
        %v2367 = vmul.f32 %v2335, %v2363
        %v2368 = vmul.f32 %v2336, %v2364
        %v2369 = vmul.f32 %v2337, %v2365
        %2370 = vmatprep.subr.mxu0 0.0
        %2371 = vmatpush1.msra.mxu0 %v1149
        %2372 = vmatprep.subr.mxu0 0.0
        %2373 = vmatpush1.msra.mxu0 %v1150
        %2374 = vmatprep.subr.mxu0 0.0
        %2375 = vmatpush1.msra.mxu0 %v1151
        %2376 = vmatprep.subr.mxu0 0.0
        %2377 = vmatpush1.msra.mxu0 %v1152
        %2378 = vmatprep.subr.mxu0 0.0
        %2379 = vmatpush1.msra.mxu0 %v1153
        %2380 = vmatprep.subr.mxu0 0.0
        %2381 = vmatpush1.msra.mxu0 %v1154
        %2382 = vmatprep.subr.mxu0 0.0
        %2383 = vmatpush1.msra.mxu0 %v1155
        %2384 = vmatprep.subr.mxu0 0.0
        %2385 = vmatpush1.msra.mxu0 %v1156
        %2386 = vmatprep.subr.mxu0 0.0
        %2387 = vmatpush1.msra.mxu0 %v1157
        %2388 = vmatprep.subr.mxu0 0.0
        %2389 = vmatpush1.msra.mxu0 %v1158
        %2390 = vmatprep.subr.mxu0 0.0
        %2391 = vmatpush1.msra.mxu0 %v1159
        %2392 = vmatprep.subr.mxu0 0.0
        %2393 = vmatpush1.msra.mxu0 %v1160
        %2394 = vmatprep.subr.mxu0 0.0
        %2395 = vmatpush1.msra.mxu0 %v1161
        %2396 = vmatprep.subr.mxu0 0.0
        %2397 = vmatpush1.msra.mxu0 %v1162
        %2398 = vmatprep.subr.mxu0 0.0
        %2399 = vmatpush1.msra.mxu0 %v1163
        %2400 = vmatprep.subr.mxu0 0.0
        %2401 = vmatpush1.msra.mxu0 %v1164
        %2402 = vmatprep.subr.mxu0 0.0
        %2403 = vmatpush1.msra.mxu0 %v1165
        %2404 = vmatprep.subr.mxu0 0.0
        %2405 = vmatpush1.msra.mxu0 %v1166
        %2406 = vmatprep.subr.mxu0 0.0
        %2407 = vmatpush1.msra.mxu0 %v1167
        %2408 = vmatprep.subr.mxu0 0.0
        %2409 = vmatpush1.msra.mxu0 %v1168
        %2410 = vmatprep.subr.mxu0 0.0
        %2411 = vmatpush1.msra.mxu0 %v1169
        %2412 = vmatprep.subr.mxu0 0.0
        %2413 = vmatpush1.msra.mxu0 %v1170
        %2414 = vmatprep.subr.mxu0 0.0
        %2415 = vmatpush1.msra.mxu0 %v1171
        %2416 = vmatprep.subr.mxu0 0.0
        %2417 = vmatpush1.msra.mxu0 %v1172
        %2418 = vmatprep.subr.mxu0 0.0
        %2419 = vmatpush1.msra.mxu0 %v1173
        %2420 = vmatprep.subr.mxu0 0.0
        %2421 = vmatpush1.msra.mxu0 %v1174
        %2422 = vmatprep.subr.mxu0 0.0
        %2423 = vmatpush1.msra.mxu0 %v1175
        %2424 = vmatprep.subr.mxu0 0.0
        %2425 = vmatpush1.msra.mxu0 %v1176
        %2426 = vmatprep.subr.mxu0 0.0
        %2427 = vmatpush1.msra.mxu0 %v1177
        %2428 = vmatprep.subr.mxu0 0.0
        %2429 = vmatpush1.msra.mxu0 %v1178
        %2430 = vmatprep.subr.mxu0 0.0
        %2431 = vmatpush1.msra.mxu0 %v1179
        %2432 = vmatprep.subr.mxu0 0.0
        %2433 = vmatpush1.msra.mxu0 %v1180
        %2434 = vmatprep.mubr.f32.mxu0 %v2367
        %2435 = vmatmul.mubr.f32.gmra.mrb[0].mxu0 %v2366
        %v2436 = vpop.f32.mrb[0].mxu0
        %v2437 = vadd.f32 0.0, %v2436
        %v2438 = vpop.f32.mrb[0].mxu0
        %2439 = vdwg.mxu0
        %2440 = vmatprep.subr.mxu0 0.0
        %2441 = vmatpush1.msra.mxu0 %v1181
        %2442 = vmatprep.subr.mxu0 0.0
        %2443 = vmatpush1.msra.mxu0 %v1182
        %2444 = vmatprep.subr.mxu0 0.0
        %2445 = vmatpush1.msra.mxu0 %v1183
        %2446 = vmatprep.subr.mxu0 0.0
        %2447 = vmatpush1.msra.mxu0 %v1184
        %2448 = vmatprep.subr.mxu0 0.0
        %2449 = vmatpush1.msra.mxu0 %v1185
        %2450 = vmatprep.subr.mxu0 0.0
        %2451 = vmatpush1.msra.mxu0 %v1186
        %2452 = vmatprep.subr.mxu0 0.0
        %2453 = vmatpush1.msra.mxu0 %v1187
        %2454 = vmatprep.subr.mxu0 0.0
        %2455 = vmatpush1.msra.mxu0 %v1188
        %2456 = vmatprep.subr.mxu0 0.0
        %2457 = vmatpush1.msra.mxu0 %v1189
        %2458 = vmatprep.subr.mxu0 0.0
        %2459 = vmatpush1.msra.mxu0 %v1190
        %2460 = vmatprep.subr.mxu0 0.0
        %2461 = vmatpush1.msra.mxu0 %v1191
        %2462 = vmatprep.subr.mxu0 0.0
        %2463 = vmatpush1.msra.mxu0 %v1192
        %2464 = vmatprep.subr.mxu0 0.0
        %2465 = vmatpush1.msra.mxu0 %v1193
        %2466 = vmatprep.subr.mxu0 0.0
        %2467 = vmatpush1.msra.mxu0 %v1194
        %2468 = vmatprep.subr.mxu0 0.0
        %2469 = vmatpush1.msra.mxu0 %v1195
        %2470 = vmatprep.subr.mxu0 0.0
        %2471 = vmatpush1.msra.mxu0 %v1196
        %2472 = vmatprep.subr.mxu0 0.0
        %2473 = vmatpush1.msra.mxu0 %v1197
        %2474 = vmatprep.subr.mxu0 0.0
        %2475 = vmatpush1.msra.mxu0 %v1198
        %2476 = vmatprep.subr.mxu0 0.0
        %2477 = vmatpush1.msra.mxu0 %v1199
        %2478 = vmatprep.subr.mxu0 0.0
        %2479 = vmatpush1.msra.mxu0 %v1200
        %2480 = vmatprep.subr.mxu0 0.0
        %2481 = vmatpush1.msra.mxu0 %v1201
        %2482 = vmatprep.subr.mxu0 0.0
        %2483 = vmatpush1.msra.mxu0 %v1202
        %2484 = vmatprep.subr.mxu0 0.0
        %2485 = vmatpush1.msra.mxu0 %v1203
        %2486 = vmatprep.subr.mxu0 0.0
        %2487 = vmatpush1.msra.mxu0 %v1204
        %2488 = vmatprep.subr.mxu0 0.0
        %2489 = vmatpush1.msra.mxu0 %v1205
        %2490 = vmatprep.subr.mxu0 0.0
        %2491 = vmatpush1.msra.mxu0 %v1206
        %2492 = vmatprep.subr.mxu0 0.0
        %2493 = vmatpush1.msra.mxu0 %v1207
        %2494 = vmatprep.subr.mxu0 0.0
        %2495 = vmatpush1.msra.mxu0 %v1208
        %2496 = vmatprep.subr.mxu0 0.0
        %2497 = vmatpush1.msra.mxu0 %v1209
        %2498 = vmatprep.subr.mxu0 0.0
        %2499 = vmatpush1.msra.mxu0 %v1210
        %2500 = vmatprep.subr.mxu0 0.0
        %2501 = vmatpush1.msra.mxu0 %v1211
        %2502 = vmatprep.subr.mxu0 0.0
        %2503 = vmatpush1.msra.mxu0 %v1212
        %2504 = vmatprep.mubr.f32.mxu0 %v2369
        %2505 = vmatmul.mubr.f32.gmra.mrb[0].mxu0 %v2368
        %v2506 = vpop.f32.mrb[0].mxu0
        %v2507 = vadd.f32 %v2437, %v2506
        %v2508 = vpop.f32.mrb[0].mxu0
        %2509 = vdwg.mxu0
        %v2510 = vadd.f32 %v2143, %v2507
        %v2512 = vlaneseq
        %v2513 = vshrl.u32 %v2512, 7
        %v2514 = vsub.s32 0, %v2513
        %v2515 = vrot.slane %v1213, %v2514
        %v2517 = vadd.f32 %v2510, %v2515
        %2518 = vst [vmem:[#allocation2] sm:$0xf] %v2517
        %p2519 = scmp.eq.s32.totalorder %s35, 1
        // Predicated region
        $region141: #{tpu_custom_call.1} parent=99 // pred_check
          %p2520 = pneg %p2519
        $region142: #{tpu_custom_call.1} parent=99 // pred_check_branch
          %2522 = sbr.rel (%p2520) target = $region144
        $region143: #{tpu_custom_call.1} parent=99 // pred_region
          %v2523 = vld [vmem:[#allocation2] sm:$0xf]
          %v2524 = vld [vmem:[%s16] sm:$0x1]
          %v2525 = vld [vmem:[%s17] sm:$0x1]
          %v2526 = vsel %vm1214, %v2523, 0.0
          %2527 = vadd.xlane.f32.xlu0 %v2526
          %v2528 = vpop.xlane.xlu0 %2527
          %v2529 = vmul.f32 %v2528, %v1218
          %v2530 = vsub.f32 %v2523, %v2529
          %v2531 = vmul.f32 %v2530, %v2530
          %v2532 = vsel %vm1214, %v2531, 0.0
          %2533 = vadd.xlane.f32.xlu0 %v2532
          %v2534 = vpop.xlane.xlu0 %2533
          %v2535 = vmul.f32 %v2534, %v1218
          %v2536 = vadd.f32 %v2535, 1e-05
          %v2537 = vrsqrt.pop %v2536
          %v2538 = vmul.f32 %v2530, %v2537
          %v2540 = vlaneseq
          %v2541 = vshrl.u32 %v2540, 7
          %v2542 = vsub.s32 0, %v2541
          %v2543 = vrot.slane %v2524, %v2542
          %v2545 = vmul.f32 %v2538, %v2543
          %v2547 = vlaneseq
          %v2548 = vshrl.u32 %v2547, 7
          %v2549 = vsub.s32 0, %v2548
          %v2550 = vrot.slane %v2525, %v2549
          %v2552 = vadd.f32 %v2545, %v2550
          %v2553 = vld [vmem:[#allocation15] sm:$0xff]
          %v2554 = vld [vmem:[#allocation15 + $0x8] sm:$0xff]
          %v2555 = vld [vmem:[#allocation15 + $0x10] sm:$0xff]
          %v2556 = vld [vmem:[#allocation15 + $0x18] sm:$0xff]
          %v2557 = vld [vmem:[#allocation15 + $0x20] sm:$0xff]
          %v2558 = vld [vmem:[#allocation15 + $0x28] sm:$0xff]
          %v2559 = vld [vmem:[#allocation15 + $0x30] sm:$0xff]
          %v2560 = vld [vmem:[#allocation15 + $0x38] sm:$0xff]
          %v2561 = vld [vmem:[#allocation15 + $0x40] sm:$0xff]
          %v2562 = vld [vmem:[#allocation15 + $0x48] sm:$0xff]
          %v2563 = vld [vmem:[#allocation15 + $0x50] sm:$0xff]
          %v2564 = vld [vmem:[#allocation15 + $0x58] sm:$0xff]
          %v2565 = vld [vmem:[#allocation15 + $0x60] sm:$0xff]
          %v2566 = vld [vmem:[#allocation15 + $0x68] sm:$0xff]
          %v2567 = vld [vmem:[#allocation15 + $0x70] sm:$0xff]
          %v2568 = vld [vmem:[#allocation15 + $0x78] sm:$0xff]
          %v2569 = vld [vmem:[%s19] sm:$0xf]
          %2570 = vmatprep.subr.mxu0 0.0
          %2571 = vmatpush1.msra.mxu0 %v2553
          %2572 = vmatprep.subr.mxu0 0.0
          %2573 = vmatpush1.msra.mxu0 %v2554
          %2574 = vmatprep.subr.mxu0 0.0
          %2575 = vmatpush1.msra.mxu0 %v2555
          %2576 = vmatprep.subr.mxu0 0.0
          %2577 = vmatpush1.msra.mxu0 %v2556
          %2578 = vmatprep.subr.mxu0 0.0
          %2579 = vmatpush1.msra.mxu0 %v2557
          %2580 = vmatprep.subr.mxu0 0.0
          %2581 = vmatpush1.msra.mxu0 %v2558
          %2582 = vmatprep.subr.mxu0 0.0
          %2583 = vmatpush1.msra.mxu0 %v2559
          %2584 = vmatprep.subr.mxu0 0.0
          %2585 = vmatpush1.msra.mxu0 %v2560
          %2586 = vmatprep.subr.mxu0 0.0
          %2587 = vmatpush1.msra.mxu0 %v2561
          %2588 = vmatprep.subr.mxu0 0.0
          %2589 = vmatpush1.msra.mxu0 %v2562
          %2590 = vmatprep.subr.mxu0 0.0
          %2591 = vmatpush1.msra.mxu0 %v2563
          %2592 = vmatprep.subr.mxu0 0.0
          %2593 = vmatpush1.msra.mxu0 %v2564
          %2594 = vmatprep.subr.mxu0 0.0
          %2595 = vmatpush1.msra.mxu0 %v2565
          %2596 = vmatprep.subr.mxu0 0.0
          %2597 = vmatpush1.msra.mxu0 %v2566
          %2598 = vmatprep.subr.mxu0 0.0
          %2599 = vmatpush1.msra.mxu0 %v2567
          %2600 = vmatprep.subr.mxu0 0.0
          %2601 = vmatpush1.msra.mxu0 %v2568
          %2602 = vmatprep.subr.mxu0 0.0
          %2603 = vmatpush1.msra.mxu0 0.0
          %2604 = vmatprep.subr.mxu0 0.0
          %2605 = vmatpush1.msra.mxu0 0.0
          %2606 = vmatprep.subr.mxu0 0.0
          %2607 = vmatpush1.msra.mxu0 0.0
          %2608 = vmatprep.subr.mxu0 0.0
          %2609 = vmatpush1.msra.mxu0 0.0
          %2610 = vmatprep.subr.mxu0 0.0
          %2611 = vmatpush1.msra.mxu0 0.0
          %2612 = vmatprep.subr.mxu0 0.0
          %2613 = vmatpush1.msra.mxu0 0.0
          %2614 = vmatprep.subr.mxu0 0.0
          %2615 = vmatpush1.msra.mxu0 0.0
          %2616 = vmatprep.subr.mxu0 0.0
          %2617 = vmatpush1.msra.mxu0 0.0
          %2618 = vmatprep.subr.mxu0 0.0
          %2619 = vmatpush1.msra.mxu0 0.0
          %2620 = vmatprep.subr.mxu0 0.0
          %2621 = vmatpush1.msra.mxu0 0.0
          %2622 = vmatprep.subr.mxu0 0.0
          %2623 = vmatpush1.msra.mxu0 0.0
          %2624 = vmatprep.subr.mxu0 0.0
          %2625 = vmatpush1.msra.mxu0 0.0
          %2626 = vmatprep.subr.mxu0 0.0
          %2627 = vmatpush1.msra.mxu0 0.0
          %2628 = vmatprep.subr.mxu0 0.0
          %2629 = vmatpush1.msra.mxu0 0.0
          %2630 = vmatprep.subr.mxu0 0.0
          %2631 = vmatpush1.msra.mxu0 0.0
          %2632 = vmatprep.subr.mxu0 0.0
          %2633 = vmatpush1.msra.mxu0 0.0
          %2634 = vmatprep.mubr.f32.mxu0 0.0
          %2635 = vmatmul.mubr.f32.gmra.mrb[0].mxu0 %v2552
          %v2636 = vpop.f32.mrb[0].mxu0
          %v2637 = vadd.f32 %v2569, %v2636
          %v2638 = vpop.f32.mrb[0].mxu0
          %2639 = vdwg.mxu0
          %2640 = vst [vmem:[#allocation16] sm:$0xf] %v2637
        $region144: #{tpu_custom_call.1} parent=99 // pred_fallthru
          _
        // Predicated region
        $region145: #{tpu_custom_call.1} parent=99 // pred_check
          %p2641 = pneg %p523
        $region146: #{tpu_custom_call.1} parent=99 // pred_check_branch
          %2643 = sbr.rel (%p2641) target = $region148
        $region147: #{tpu_custom_call.1} parent=99 // pred_region
          %s2645 = ssub.s32 64, 64
          %2646 = vsyncadd [#allocation5], %s2645
          %s2648 = sshll.u32 [#allocation16], 4
          %s2649 = int_to_ptr.vmem [resolvable:$true] %s2648
          %2651 = dma.vmem_to_hbm [thread:$0]  %s2649, 64, %s20, [#allocation5]
        $region148: #{tpu_custom_call.1} parent=99 // pred_fallthru
          _
        // Predicated region
        $region149: #{tpu_custom_call.1} parent=99 // pred_check
          %p2652 = pneg %p523
        $region150: #{tpu_custom_call.1} parent=99 // pred_check_branch
          %2654 = sbr.rel (%p2652) target = $region152
        $region151: #{tpu_custom_call.1} parent=99 // pred_region
          %2655 = dma.done [#allocation5], 64
        $region152: #{tpu_custom_call.1} parent=99 // pred_fallthru
          _
      $region100: #{tpu_custom_call.1} parent=5 // pred_fallthru
        _
      %p2656 = scmp.le.s32.totalorder 2, %s30
      // Predicated region
      $region153: #{tpu_custom_call.1} parent=5 // pred_check
        %p2657 = pneg %p2656
      $region154: #{tpu_custom_call.1} parent=5 // pred_check_branch
        %2659 = sbr.rel (%p2657) target = $region156
      $region155: #{tpu_custom_call.1} parent=5 // pred_region
        %s2660 = ssub.s32 %s30, 2
      $region156: #{tpu_custom_call.1} parent=5 // pred_fallthru
        _
    $region6: #{tpu_custom_call.1} parent=1 // loop_footer
      %s34 = sadd.s32 1, %s30
    $region7: #{tpu_custom_call.1} parent=1 // loop_footer_branch
      %29 = sbr.rel target = $region3
    $region8: #{tpu_custom_call.1} parent=1 // loop_exit
      _
    %2661 = vsyncpa [#allocation4], 1
    %s2662 = scalar_lea.sflag [#allocation4], 1
    %2663 = vsyncpa %s2662, 1
    %2664 = vsyncpa [#allocation7], 1
    %2665 = vsyncpa [#allocation10], 1
    %2666 = vsyncpa [#allocation5], 1
    %s2667 = scalar_lea.sflag [#allocation5], 1
    %2668 = vsyncpa %s2667, 1

</llo_original>
